<compile_context>
chip_gen: v5e
topology: v5e:2x2
jax: 0.10.0
libtpu: 0.0.40
codegen_flags: <defaults>
</compile_context>

<pallas_src>
import functools
import math

import jax
import jax.numpy as jnp
from jax import lax
from jax.experimental import pallas as pl
from jax.experimental.pallas import tpu as pltpu


def _pure_surface_kernel(apply_non_lin, n_sub, tpc,
                         q_ref, x_ref, qn_ref, c_ref, out_ref, m_ref):
    """Grid step (q, c): query tile q against candidate block c.

    q_ref  : (K, TQ)        f32  query coords (rows 0..ndim-1) + ones row
    x_ref  : (1, TQ)        f32  raw x values of the query pixels (lane-dense)
    qn_ref : (1, TQ)        f32  ||q||^2 per query pixel (lane-dense)
    c_ref  : (TP_BLOCK, K)  f32  candidate rows: [-2*c_0..-2*c_{ndim-1},
                                 ||c||^2 where y!=0 else 1e30]
    out_ref: (1, TQ)        f32  sigmoid(x) * EDT(x)  (written at last c step)
    m_ref  : (1, TQ)        f32  running min of (||c||^2 - 2 q.c)  [VMEM scratch]
    """
    c_step = pl.program_id(1)

    @pl.when(c_step == 0)
    def _():
        m_ref[...] = jnp.full_like(m_ref, jnp.float32(3.0e38))

    q_aug = q_ref[...]                                   # (K, TQ), MXU RHS

    def body(i, running_min):
        start = pl.multiple_of(i * tpc, tpc)
        c_sub = c_ref[pl.ds(start, tpc), :]              # (tpc, K)
        # MXU: (tpc, K) x (K, TQ) -> (tpc, TQ) giving  ||c||^2 - 2 <q, c>
        # (the norm/sentinel row is folded into the contraction).
        s = jnp.dot(c_sub, q_aug, preferred_element_type=jnp.float32)
        chunk_min = jnp.min(s, axis=0, keepdims=True)    # (1, TQ), lane-dense
        return jnp.minimum(running_min, chunk_min)

    m_ref[...] = lax.fori_loop(0, n_sub, body, m_ref[...], unroll=True)

    @pl.when(c_step == pl.num_programs(1) - 1)
    def _():
        d2 = jnp.maximum(m_ref[...] + qn_ref[...], 0.0)  # exact EDT^2
        dist = jnp.sqrt(d2)
        xs = x_ref[...]
        if apply_non_lin:
            xs = jax.nn.sigmoid(xs)
        out_ref[...] = xs * dist


def pure_surface(x, y, apply_non_lin=True, tq=512, tp_block=8192, tp_chunk=1024):
    """Pallas implementation of PureSurface.forward(x, y) -> scalar."""
    assert x.shape == y.shape
    shape = x.shape
    ndim = len(shape)
    P = math.prod(shape)
    K = ndim + 1

    tq = min(tq, P)
    tp_block = min(tp_block, P)
    tp_chunk = min(tp_chunk, tp_block)
    assert P % tq == 0, "element count must be divisible by the query tile"
    assert P % tp_block == 0, "element count must be divisible by the candidate block"
    assert tp_block % tp_chunk == 0
    assert tq % 128 == 0, "query tile must be lane-dense (multiple of 128)"

    # ---- wrapper glue (tiny O(P) work, done once in plain XLA) --------------
    axes = [jnp.arange(s, dtype=jnp.float32) for s in shape]
    grids = jnp.meshgrid(*axes, indexing="ij")
    coords = jnp.stack([g.reshape(-1) for g in grids], axis=0)        # (ndim, P)
    norms = jnp.sum(coords * coords, axis=0)                          # (P,)
    cn = jnp.where(y.reshape(-1) != 0, norms, jnp.float32(1e30))      # sentinel

    # Candidate matrix (MXU LHS, streamed): [-2*coords | ||c||^2-or-1e30].
    c_aug = jnp.concatenate(
        [jnp.transpose(coords) * jnp.float32(-2.0), cn[:, None]], axis=1)  # (P, K)
    # Query matrix (MXU RHS, resident per query tile): [coords ; ones].
    q_aug = jnp.concatenate(
        [coords, jnp.ones((1, P), jnp.float32)], axis=0)                   # (K, P)

    qn = norms.reshape(1, P)                                          # (1, P)
    xq = x.reshape(1, P).astype(jnp.float32)                          # (1, P)

    n_sub = tp_block // tp_chunk
    kernel = functools.partial(_pure_surface_kernel, apply_non_lin, n_sub, tp_chunk)

    out = pl.pallas_call(
        kernel,
        out_shape=jax.ShapeDtypeStruct((1, P), jnp.float32),
        grid_spec=pltpu.PrefetchScalarGridSpec(
            num_scalar_prefetch=0,
            grid=(P // tq, P // tp_block),                 # (query, candidate)
            in_specs=[
                pl.BlockSpec((K, tq), lambda q, c: (0, q)),        # query coords+ones
                pl.BlockSpec((1, tq), lambda q, c: (0, q)),        # query x (lane-dense)
                pl.BlockSpec((1, tq), lambda q, c: (0, q)),        # ||q||^2 (lane-dense)
                pl.BlockSpec((tp_block, K), lambda q, c: (c, 0)),  # candidates
            ],
            out_specs=pl.BlockSpec((1, tq), lambda q, c: (0, q)),
            scratch_shapes=[pltpu.VMEM((1, tq), jnp.float32)],     # running min
        ),
        compiler_params=pltpu.CompilerParams(
            dimension_semantics=("parallel", "arbitrary"),
            vmem_limit_bytes=48 * 1024 * 1024),
    )(q_aug, xq, qn, c_aug)

    return jnp.mean(out)


def _reference(x, y, apply_non_lin=True):
    """Pure-JAX brute-force reference (same math, no Pallas)."""
    xs = jax.nn.sigmoid(x.astype(jnp.float32)) if apply_non_lin else x.astype(jnp.float32)
    shape = y.shape
    axes = [jnp.arange(s, dtype=jnp.float32) for s in shape]
    coords = jnp.stack(jnp.meshgrid(*axes, indexing="ij"), axis=-1).reshape(-1, len(shape))
    mask = (y.reshape(-1) != 0)
    d2 = jnp.sum((coords[:, None, :] - coords[None, :, :]) ** 2, axis=-1)
    d2 = jnp.where(mask[None, :], d2, 1e30)
    dist = jnp.sqrt(jnp.min(d2, axis=1)).reshape(shape)
    return jnp.mean(xs * dist)


if __name__ == "__main__":
    key = jax.random.PRNGKey(0)
    kx, ky = jax.random.split(key)

    # Small NCHW shapes: batch=2, channels=4, spatial=16x16  ->  P = 2048.
    x = jax.random.normal(kx, (2, 4, 16, 16), dtype=jnp.float32)
    y = (jax.random.uniform(ky, (2, 4, 16, 16)) > 0.9).astype(jnp.float32)
    # Guarantee at least one foreground pixel (scipy's all-background edge case
    # is degenerate and not exercised here).
    y = y.at[0, 0, 0, 0].set(1.0)

    got = jax.block_until_ready(pure_surface(x, y))
    want = jax.block_until_ready(_reference(x, y))

    assert jnp.allclose(got, want, rtol=1e-4, atol=1e-4), (got, want)
    print("KERNEL_OK")
</pallas_src>

<mosaic_0001>
module attributes {stable_mosaic.version = 11 : i64} {
  func.func @_pure_surface_kernel(%arg0: i32, %arg1: i32, %arg2: memref<5x512xf32, #tpu.memory_space<vmem>>, %arg3: memref<1x512xf32, #tpu.memory_space<vmem>>, %arg4: memref<1x512xf32, #tpu.memory_space<vmem>>, %arg5: memref<2048x5xf32, #tpu.memory_space<vmem>>, %arg6: memref<1x512xf32, #tpu.memory_space<vmem>>, %arg7: memref<1x512xf32, #tpu.memory_space<vmem>>) attributes {dimension_semantics = [#tpu.dimension_semantics<parallel>, #tpu.dimension_semantics<arbitrary>], iteration_bounds = array<i64: 4, 1>, scalar_prefetch = 0 : i64, scratch_operands = 1 : i64, tpu.core_type = #tpu.core_type<tc>, window_params = [{transform_indices = @transform_0, window_bounds = array<i64: 5, 512>}, {transform_indices = @transform_1, window_bounds = array<i64: 1, 512>}, {transform_indices = @transform_2, window_bounds = array<i64: 1, 512>}, {transform_indices = @transform_3, window_bounds = array<i64: 2048, 5>}, {transform_indices = @transform_4, window_bounds = array<i64: 1, 512>}]} {
    %c0_i32 = arith.constant 0 : i32
    %0 = arith.cmpi eq, %arg1, %c0_i32 : i32
    %1 = arith.extui %0 : i1 to i32
    %c0_i32_0 = arith.constant 0 : i32
    %2 = arith.cmpi ne, %1, %c0_i32_0 : i32
    scf.if %2 {
      %cst_15 = arith.constant 3.000000e+38 : f32
      %25 = vector.broadcast %cst_15 : f32 to vector<1x512xf32>
      %c0_16 = arith.constant 0 : index
      %c0_17 = arith.constant 0 : index
      %26 = vector.load %arg7[%c0_16, %c0_17] : memref<1x512xf32, #tpu.memory_space<vmem>>, vector<1x512xf32>
      tpu.vector_store %arg7[%c0_16, %c0_17], %25 {strides = array<i32>} : memref<1x512xf32, #tpu.memory_space<vmem>>, vector<1x512xf32>,
    } else {
    }
    %c0 = arith.constant 0 : index
    %c0_1 = arith.constant 0 : index
    %3 = vector.load %arg2[%c0, %c0_1] : memref<5x512xf32, #tpu.memory_space<vmem>>, vector<5x512xf32>
    %c0_2 = arith.constant 0 : index
    %c0_3 = arith.constant 0 : index
    %4 = vector.load %arg7[%c0_2, %c0_3] : memref<1x512xf32, #tpu.memory_space<vmem>>, vector<1x512xf32>
    %c0_i32_4 = arith.constant 0 : i32
    %c1024_i32 = arith.constant 1024 : i32
    %5 = arith.muli %c0_i32_4, %c1024_i32 : i32
    %6 = tpu.assume_multiple %5, 1024 : i32
    %7 = arith.index_cast %6 : i32 to index
    %c0_5 = arith.constant 0 : index
    %8 = vector.load %arg5[%7, %c0_5] : memref<2048x5xf32, #tpu.memory_space<vmem>>, vector<1024x5xf32>
    %cst = arith.constant dense<0.000000e+00> : vector<1024x512xf32>
    %9 = tpu.matmul %8, %3, %cst {dimension_numbers = #tpu.dot_dimension_numbers<[1], [0], [0], [1], [0, 0, 1, 1], [], []>} : vector<1024x5xf32>, vector<5x512xf32>, vector<1024x512xf32> -> vector<1024x512xf32>
    %cst_6 = arith.constant dense<0x7F800000> : vector<512xf32>
    %10 = vector.multi_reduction <minimumf>, %9, %cst_6 [0] : vector<1024x512xf32> to vector<512xf32>
    %11 = vector.shape_cast %10 : vector<512xf32> to vector<1x512xf32>
    %12 = arith.minimumf %4, %11 : vector<1x512xf32>
    %c1_i32 = arith.constant 1 : i32
    %c1024_i32_7 = arith.constant 1024 : i32
    %13 = arith.muli %c1_i32, %c1024_i32_7 : i32
    %14 = tpu.assume_multiple %13, 1024 : i32
    %15 = arith.index_cast %14 : i32 to index
    %c0_8 = arith.constant 0 : index
    %16 = vector.load %arg5[%15, %c0_8] : memref<2048x5xf32, #tpu.memory_space<vmem>>, vector<1024x5xf32>
    %cst_9 = arith.constant dense<0.000000e+00> : vector<1024x512xf32>
    %17 = tpu.matmul %16, %3, %cst_9 {dimension_numbers = #tpu.dot_dimension_numbers<[1], [0], [0], [1], [0, 0, 1, 1], [], []>} : vector<1024x5xf32>, vector<5x512xf32>, vector<1024x512xf32> -> vector<1024x512xf32>
    %cst_10 = arith.constant dense<0x7F800000> : vector<512xf32>
    %18 = vector.multi_reduction <minimumf>, %17, %cst_10 [0] : vector<1024x512xf32> to vector<512xf32>
    %19 = vector.shape_cast %18 : vector<512xf32> to vector<1x512xf32>
    %20 = arith.minimumf %12, %19 : vector<1x512xf32>
    %c2_i32 = arith.constant 2 : i32
    %c0_11 = arith.constant 0 : index
    %c0_12 = arith.constant 0 : index
    %21 = vector.load %arg7[%c0_11, %c0_12] : memref<1x512xf32, #tpu.memory_space<vmem>>, vector<1x512xf32>
    tpu.vector_store %arg7[%c0_11, %c0_12], %20 {strides = array<i32>} : memref<1x512xf32, #tpu.memory_space<vmem>>, vector<1x512xf32>,
    %c0_i32_13 = arith.constant 0 : i32
    %22 = arith.cmpi eq, %arg1, %c0_i32_13 : i32
    %23 = arith.extui %22 : i1 to i32
    %c0_i32_14 = arith.constant 0 : i32
    %24 = arith.cmpi ne, %23, %c0_i32_14 : i32
    scf.if %24 {
      %c0_15 = arith.constant 0 : index
      %c0_16 = arith.constant 0 : index
      %25 = vector.load %arg7[%c0_15, %c0_16] : memref<1x512xf32, #tpu.memory_space<vmem>>, vector<1x512xf32>
      %c0_17 = arith.constant 0 : index
      %c0_18 = arith.constant 0 : index
      %26 = vector.load %arg4[%c0_17, %c0_18] : memref<1x512xf32, #tpu.memory_space<vmem>>, vector<1x512xf32>
      %27 = arith.addf %25, %26 : vector<1x512xf32>
      %cst_19 = arith.constant 0.000000e+00 : f32
      %28 = vector.broadcast %cst_19 : f32 to vector<1x512xf32>
      %29 = arith.maximumf %27, %28 : vector<1x512xf32>
      %30 = math.sqrt %29 : vector<1x512xf32>
      %c0_20 = arith.constant 0 : index
      %c0_21 = arith.constant 0 : index
      %31 = vector.load %arg3[%c0_20, %c0_21] : memref<1x512xf32, #tpu.memory_space<vmem>>, vector<1x512xf32>
      %32 = arith.negf %31 : vector<1x512xf32>
      %33 = math.exp %32 : vector<1x512xf32>
      %cst_22 = arith.constant 1.000000e+00 : f32
      %34 = vector.broadcast %cst_22 : f32 to vector<1x512xf32>
      %35 = arith.addf %34, %33 : vector<1x512xf32>
      %36 = arith.divf %34, %35 : vector<1x512xf32>
      %37 = arith.mulf %36, %30 : vector<1x512xf32>
      %c0_23 = arith.constant 0 : index
      %c0_24 = arith.constant 0 : index
      %38 = vector.load %arg6[%c0_23, %c0_24] : memref<1x512xf32, #tpu.memory_space<vmem>>, vector<1x512xf32>
      tpu.vector_store %arg6[%c0_23, %c0_24], %37 {strides = array<i32>} : memref<1x512xf32, #tpu.memory_space<vmem>>, vector<1x512xf32>,
    } else {
    }
    return
  }
  func.func @transform_0(%arg0: i32, %arg1: i32) -> (i32, i32) {
    %c0_i32 = arith.constant 0 : i32
    %c0_i32_0 = arith.constant 0 : i32
    return %c0_i32, %arg0 : i32, i32
  }
  func.func @transform_1(%arg0: i32, %arg1: i32) -> (i32, i32) {
    %c0_i32 = arith.constant 0 : i32
    %c0_i32_0 = arith.constant 0 : i32
    return %c0_i32, %arg0 : i32, i32
  }
  func.func @transform_2(%arg0: i32, %arg1: i32) -> (i32, i32) {
    %c0_i32 = arith.constant 0 : i32
    %c0_i32_0 = arith.constant 0 : i32
    return %c0_i32, %arg0 : i32, i32
  }
  func.func @transform_3(%arg0: i32, %arg1: i32) -> (i32, i32) {
    %c0_i32 = arith.constant 0 : i32
    %c0_i32_0 = arith.constant 0 : i32
    return %arg1, %c0_i32 : i32, i32
  }
  func.func @transform_4(%arg0: i32, %arg1: i32) -> (i32, i32) {
    %c0_i32 = arith.constant 0 : i32
    %c0_i32_0 = arith.constant 0 : i32
    return %c0_i32, %arg0 : i32, i32
  }
}

</mosaic_0001>

<llo_original>
// kernel: tpu_custom_call.1
$region0: #{tpu_custom_call.1}
  #allocation0 [shape = 'u32[]', space=smem, size = 0x4, offset = 0x4, fixed_abs, tag = 'smem constant byte address 0x4 - core index']
  #allocation1 [shape = 'u32[72,128]{1,0:T(1,128)}', space=vmem, size = 0x9000, scoped, tag = 'internal scratch']
  #allocation2 [shape = 'f32[1,512]{1,0:T(1,128)}', space=vmem, size = 0x800, scoped, tag = 'scratch operand']
  %s0 = inlined_call_operand.vmem [shape: f32[5,2048], index: 0, kind: input, shape index: {}]
  %s1 = inlined_call_operand.vmem [shape: f32[1,2048], index: 1, kind: input, shape index: {}]
  %s2 = inlined_call_operand.vmem [shape: f32[1,2048], index: 2, kind: input, shape index: {}]
  %s3 = inlined_call_operand.vmem [shape: f32[2048,5], index: 3, kind: input, shape index: {}]
  %s4 = inlined_call_operand.hbm [shape: f32[1,2048], index: 4, kind: output, shape index: {}]
  %s5 = sld [smem:[#allocation0]]
  $region57: #{tpu_custom_call.1} parent=0
    _
  %s7 = ssub.s32 1, %s5
  %s8 = scalar_select 0, %s7, %s5
  $region1: #{tpu_custom_call.1} parent=0
    #allocation3 [shape = 'u8[4096]{0}', space=vmem, size = 0x1000, scoped, tag = 'output window, operand 0']
    #allocation4 [shape = 's32[2]{0}', space=sflag, size = 0x8, scoped, tag = 'scoped memory for tpu_custom_call.1']
    %9 = vsyncpa [#allocation4], 0
    %s10 = scalar_lea.sflag [#allocation4], 1
    %11 = vsyncpa %s10, 0
    loop: start=0, step=1, limit=6
    $region2: #{tpu_custom_call.1} parent=1 // loop_pre_header
      _
    $region3: #{tpu_custom_call.1} parent=1 // loop_header
      %s13 = sphi 0, %s17
      %p14 = scmp.ge.s32.totalorder %s13, 6
      %s20 = sphi 0, %s32
      %s21 = sphi 0, %s28
      %s22 = sphi 0, %s20
      %s23 = sphi 0, %s21
      %s24 = sphi 0, %s22
      %s25 = sphi 0, %s23
      %s35 = sphi 0, %s37
      %s38 = sphi 0, %s35
      %s39 = sphi 0, %s38
      %s55 = sphi 0, %s39
      %s61 = sphi 0, %s63
      %s64 = sphi 0, %s61
      %s65 = sphi 0, %s64
      %s81 = sphi 0, %s65
      %s87 = sphi 0, %s89
      %s90 = sphi 0, %s87
      %s91 = sphi 0, %s90
      %s107 = sphi 0, %s91
      %s113 = sphi 0, %s115
      %s116 = sphi 0, %s113
      %s117 = sphi 0, %s116
      %s133 = sphi 0, %s117
      %s139 = sphi 0, %s141
      %s142 = sphi 0, %s139
      %s143 = sphi 0, %s142
      %s159 = sphi 0, %s143
    $region4: #{tpu_custom_call.1} parent=1 // loop_header_branch
      %16 = sbr.rel (%p14) target = $region8
    $region5: #{tpu_custom_call.1} parent=1 // loop_body
      %s18 = ssub.s32 %s13, 1
      %s19 = ssub.s32 %s13, 2
      %s26 = sadd.s32 1, %s21
      %p27 = scmp.ge.s32.totalorder %s26, 1
      %s28 = scalar_select %p27, 0, %s26
      %s29 = sadd.s32 1, %s20
      %s30 = scalar_select %p27, %s29, %s20
      %p31 = scmp.ge.s32.totalorder %s30, 4
      %s32 = scalar_select %p31, 0, %s30
      %s33 = ssub.s32 %s20, %s32
      %p34 = scmp.eq.s32.totalorder %s33, 0
      %s36 = sadd.s32 %s35, 1
      %s37 = scalar_select %p34, %s35, %s36
      %p40 = pneg %p34
      %p41 = scmp.eq.s32.totalorder %s13, 3
      %p42 = por %p40, %p41
      %p43 = scmp.ne.s32.totalorder %s35, %s38
      %p44 = scmp.eq.s32.totalorder %s13, 0
      %p45 = por %p43, %p44
      %p46 = scmp.ne.s32.totalorder %s35, %s38
      %p47 = scmp.eq.s32.totalorder %s18, 3
      %p48 = por %p46, %p47
      %p49 = scmp.ne.s32.totalorder %s38, %s39
      %p50 = scmp.eq.s32.totalorder %s18, 0
      %p51 = por %p49, %p50
      %p52 = scmp.ne.s32.totalorder %s38, %s39
      %p53 = scmp.eq.s32.totalorder %s19, 3
      %p54 = por %p52, %p53
      %p56 = scmp.ne.s32.totalorder %s39, %s55
      %p57 = scmp.eq.s32.totalorder %s19, 0
      %p58 = por %p56, %p57
      %s59 = ssub.s32 %s20, %s32
      %p60 = scmp.eq.s32.totalorder %s59, 0
      %s62 = sadd.s32 %s61, 1
      %s63 = scalar_select %p60, %s61, %s62
      %p66 = pneg %p60
      %p67 = scmp.eq.s32.totalorder %s13, 3
      %p68 = por %p66, %p67
      %p69 = scmp.ne.s32.totalorder %s61, %s64
      %p70 = scmp.eq.s32.totalorder %s13, 0
      %p71 = por %p69, %p70
      %p72 = scmp.ne.s32.totalorder %s61, %s64
      %p73 = scmp.eq.s32.totalorder %s18, 3
      %p74 = por %p72, %p73
      %p75 = scmp.ne.s32.totalorder %s64, %s65
      %p76 = scmp.eq.s32.totalorder %s18, 0
      %p77 = por %p75, %p76
      %p78 = scmp.ne.s32.totalorder %s64, %s65
      %p79 = scmp.eq.s32.totalorder %s19, 3
      %p80 = por %p78, %p79
      %p82 = scmp.ne.s32.totalorder %s65, %s81
      %p83 = scmp.eq.s32.totalorder %s19, 0
      %p84 = por %p82, %p83
      %s85 = ssub.s32 %s20, %s32
      %p86 = scmp.eq.s32.totalorder %s85, 0
      %s88 = sadd.s32 %s87, 1
      %s89 = scalar_select %p86, %s87, %s88
      %p92 = pneg %p86
      %p93 = scmp.eq.s32.totalorder %s13, 3
      %p94 = por %p92, %p93
      %p95 = scmp.ne.s32.totalorder %s87, %s90
      %p96 = scmp.eq.s32.totalorder %s13, 0
      %p97 = por %p95, %p96
      %p98 = scmp.ne.s32.totalorder %s87, %s90
      %p99 = scmp.eq.s32.totalorder %s18, 3
      %p100 = por %p98, %p99
      %p101 = scmp.ne.s32.totalorder %s90, %s91
      %p102 = scmp.eq.s32.totalorder %s18, 0
      %p103 = por %p101, %p102
      %p104 = scmp.ne.s32.totalorder %s90, %s91
      %p105 = scmp.eq.s32.totalorder %s19, 3
      %p106 = por %p104, %p105
      %p108 = scmp.ne.s32.totalorder %s91, %s107
      %p109 = scmp.eq.s32.totalorder %s19, 0
      %p110 = por %p108, %p109
      %s111 = ssub.s32 %s21, %s28
      %p112 = scmp.eq.s32.totalorder %s111, 0
      %s114 = sadd.s32 %s113, 1
      %s115 = scalar_select %p112, %s113, %s114
      %p118 = pneg %p112
      %p119 = scmp.eq.s32.totalorder %s13, 3
      %p120 = por %p118, %p119
      %p121 = scmp.ne.s32.totalorder %s113, %s116
      %p122 = scmp.eq.s32.totalorder %s13, 0
      %p123 = por %p121, %p122
      %p124 = scmp.ne.s32.totalorder %s113, %s116
      %p125 = scmp.eq.s32.totalorder %s18, 3
      %p126 = por %p124, %p125
      %p127 = scmp.ne.s32.totalorder %s116, %s117
      %p128 = scmp.eq.s32.totalorder %s18, 0
      %p129 = por %p127, %p128
      %p130 = scmp.ne.s32.totalorder %s116, %s117
      %p131 = scmp.eq.s32.totalorder %s19, 3
      %p132 = por %p130, %p131
      %p134 = scmp.ne.s32.totalorder %s117, %s133
      %p135 = scmp.eq.s32.totalorder %s19, 0
      %p136 = por %p134, %p135
      %s137 = ssub.s32 %s20, %s32
      %p138 = scmp.eq.s32.totalorder %s137, 0
      %s140 = sadd.s32 %s139, 1
      %s141 = scalar_select %p138, %s139, %s140
      %p144 = pneg %p138
      %p145 = scmp.eq.s32.totalorder %s13, 3
      %p146 = por %p144, %p145
      %p147 = scmp.ne.s32.totalorder %s139, %s142
      %p148 = scmp.eq.s32.totalorder %s13, 0
      %p149 = por %p147, %p148
      %p150 = scmp.ne.s32.totalorder %s139, %s142
      %p151 = scmp.eq.s32.totalorder %s18, 3
      %p152 = por %p150, %p151
      %p153 = scmp.ne.s32.totalorder %s142, %s143
      %p154 = scmp.eq.s32.totalorder %s18, 0
      %p155 = por %p153, %p154
      %p156 = scmp.ne.s32.totalorder %s142, %s143
      %p157 = scmp.eq.s32.totalorder %s19, 3
      %p158 = por %p156, %p157
      %p160 = scmp.ne.s32.totalorder %s143, %s159
      %p161 = scmp.eq.s32.totalorder %s19, 0
      %p162 = por %p160, %p161
      %p163 = scmp.le.s32.totalorder 1, %s13
      %p164 = scmp.lt.s32.totalorder %s13, 5
      %p165 = pnand %p163, %p164
      %p166 = pneg %p165
      // Predicated region
      $region9: #{tpu_custom_call.1} parent=5 // pred_check
        _
      $region10: #{tpu_custom_call.1} parent=5 // pred_check_branch
        %168 = sbr.rel (%p165) target = $region12
      $region11: #{tpu_custom_call.1} parent=5 // pred_region
        %s169 = ssub.s32 %s13, 1
        // Predicated region
        $region13: #{tpu_custom_call.1} parent=11 // pred_check
          %p170 = pneg %p129
        $region14: #{tpu_custom_call.1} parent=11 // pred_check_branch
          %172 = sbr.rel (%p170) target = $region16
        $region15: #{tpu_custom_call.1} parent=11 // pred_region
          %s173 = smul.u32 256, %s23
          %p174 = scmp.lt.s32.totalorder %s173, 255
          %s175 = scalar_select %p174, %s173, 255
          %s176 = smul.addr %s175, 8
          %s177 = scalar_lea.vmem %s3, %s176
          %s178 = smul.u32 256, %s23
        $region16: #{tpu_custom_call.1} parent=11 // pred_fallthru
          _
      $region12: #{tpu_custom_call.1} parent=5 // pred_fallthru
        _
      %p179 = scmp.lt.s32.totalorder %s13, 4
      // Predicated region
      $region17: #{tpu_custom_call.1} parent=5 // pred_check
        %p180 = pneg %p179
      $region18: #{tpu_custom_call.1} parent=5 // pred_check_branch
        %182 = sbr.rel (%p180) target = $region20
      $region19: #{tpu_custom_call.1} parent=5 // pred_region
        // Predicated region
        $region21: #{tpu_custom_call.1} parent=19 // pred_check
          %p183 = pneg %p45
        $region22: #{tpu_custom_call.1} parent=19 // pred_check_branch
          %185 = sbr.rel (%p183) target = $region24
        $region23: #{tpu_custom_call.1} parent=19 // pred_region
          %s186 = smul.u32 4, %s20
          %p187 = scmp.lt.s32.totalorder %s186, 15
          %s188 = scalar_select %p187, %s186, 15
          %s189 = smul.addr %s188, 8
          %s190 = scalar_lea.vmem %s0, %s189
          %s191 = smul.u32 4, %s20
        $region24: #{tpu_custom_call.1} parent=19 // pred_fallthru
          _
        // Predicated region
        $region25: #{tpu_custom_call.1} parent=19 // pred_check
          %p192 = pneg %p71
        $region26: #{tpu_custom_call.1} parent=19 // pred_check_branch
          %194 = sbr.rel (%p192) target = $region28
        $region27: #{tpu_custom_call.1} parent=19 // pred_region
          %s195 = smul.u32 4, %s20
          %p196 = scmp.lt.s32.totalorder %s195, 15
          %s197 = scalar_select %p196, %s195, 15
          %s198 = scalar_lea.vmem %s1, %s197
          %s199 = smul.u32 4, %s20
        $region28: #{tpu_custom_call.1} parent=19 // pred_fallthru
          _
        // Predicated region
        $region29: #{tpu_custom_call.1} parent=19 // pred_check
          %p200 = pneg %p97
        $region30: #{tpu_custom_call.1} parent=19 // pred_check_branch
          %202 = sbr.rel (%p200) target = $region32
        $region31: #{tpu_custom_call.1} parent=19 // pred_region
          %s203 = smul.u32 4, %s20
          %p204 = scmp.lt.s32.totalorder %s203, 15
          %s205 = scalar_select %p204, %s203, 15
          %s206 = scalar_lea.vmem %s2, %s205
          %s207 = smul.u32 4, %s20
        $region32: #{tpu_custom_call.1} parent=19 // pred_fallthru
          _
      $region20: #{tpu_custom_call.1} parent=5 // pred_fallthru
        _
      %p208 = scmp.le.s32.totalorder 1, %s13
      %p209 = scmp.lt.s32.totalorder %s13, 5
      %p210 = pnand %p208, %p209
      %p211 = pneg %p210
      // Predicated region
      $region33: #{tpu_custom_call.1} parent=5 // pred_check
        _
      $region34: #{tpu_custom_call.1} parent=5 // pred_check_branch
        %213 = sbr.rel (%p210) target = $region36
      $region35: #{tpu_custom_call.1} parent=5 // pred_region
        %s214 = ssub.s32 %s13, 1
        %s215 = smul.u32 4, %s22
        %p216 = scmp.lt.s32.totalorder %s215, 15
        %s217 = scalar_select %p216, %s215, 15
        %s218 = smul.addr %s217, 8
        %s219 = scalar_lea.vmem %s0, %s218
        %p220 = pneg %p51
        %p221 = pneg %p48
        %s222 = smul.u32 4, %s22
        %p223 = scmp.lt.s32.totalorder %s222, 15
        %s224 = scalar_select %p223, %s222, 15
        %s225 = scalar_lea.vmem %s1, %s224
        %p226 = pneg %p77
        %p227 = pneg %p74
        %s228 = smul.u32 4, %s22
        %p229 = scmp.lt.s32.totalorder %s228, 15
        %s230 = scalar_select %p229, %s228, 15
        %s231 = scalar_lea.vmem %s2, %s230
        %p232 = pneg %p103
        %p233 = pneg %p100
        %s234 = smul.u32 256, %s23
        %p235 = scmp.lt.s32.totalorder %s234, 255
        %s236 = scalar_select %p235, %s234, 255
        %s237 = smul.addr %s236, 8
        %s238 = scalar_lea.vmem %s3, %s237
        %p239 = pneg %p129
        %p240 = pneg %p126
        %p241 = pneg %p155
        %p242 = pneg %p152
        %s243 = sand.u32 %s142, 1
        %s244 = scalar_lea.sflag [#allocation4], %s243
        %s245 = sand.u32 %s142, 1
        %s246 = smul.addr %s245, 4
        %s247 = scalar_lea.vmem [#allocation3], %s246
        %s248 = smul.u32 4, %s22
        %p249 = scmp.lt.s32.totalorder %s248, 15
        %s250 = scalar_select %p249, %s248, 15
        %s251 = smul.addr %s250, 8
        %s252 = scalar_lea.vmem %s0, %s251
        %s253 = smul.u32 4, %s22
        %s254 = smul.u32 4, %s22
        %p255 = scmp.lt.s32.totalorder %s254, 15
        %s256 = scalar_select %p255, %s254, 15
        %s257 = scalar_lea.vmem %s1, %s256
        %s258 = smul.u32 4, %s22
        %s259 = smul.u32 4, %s22
        %p260 = scmp.lt.s32.totalorder %s259, 15
        %s261 = scalar_select %p260, %s259, 15
        %s262 = scalar_lea.vmem %s2, %s261
        %s263 = smul.u32 4, %s22
        %s264 = smul.u32 256, %s23
        %p265 = scmp.lt.s32.totalorder %s264, 255
        %s266 = scalar_select %p265, %s264, 255
        %s267 = smul.addr %s266, 8
        %s268 = scalar_lea.vmem %s3, %s267
        %s269 = smul.u32 256, %s23
        %s270 = smul.u32 4, %s22
        %p271 = scmp.eq.s32.totalorder %s23, 0
        // Predicated region
        $region37: #{tpu_custom_call.1} parent=35 // pred_check
          %p272 = pneg %p271
        $region38: #{tpu_custom_call.1} parent=35 // pred_check_branch
          %274 = sbr.rel (%p272) target = $region40
        $region39: #{tpu_custom_call.1} parent=35 // pred_region
          %v275 = vlaneseq
          %vm276 = vcmp.ge.s32.totalorder %v275, 0
          %vm277 = vcmp.lt.s32.totalorder %v275, 512
          %vm278 = vmand %vm276, %vm277
          %279 = vst.msk [vmem:[#allocation2] sm:$0xf] %vm278, 3e+38
        $region40: #{tpu_custom_call.1} parent=35 // pred_fallthru
          _
        %v280 = vld [vmem:[%s252] sm:$0x1f]
        %v281 = vld [vmem:[%s252 + $0x8] sm:$0x1f]
        %v282 = vld [vmem:[%s252 + $0x10] sm:$0x1f]
        %v283 = vld [vmem:[%s252 + $0x18] sm:$0x1f]
        %v284 = vld [vmem:[#allocation2] sm:$0xf]
        %v285 = vld [vmem:[%s268] sm:$0xff]
        %v286 = vld [vmem:[%s268 + $0x8] sm:$0xff]
        %v287 = vld [vmem:[%s268 + $0x10] sm:$0xff]
        %v288 = vld [vmem:[%s268 + $0x18] sm:$0xff]
        %v289 = vld [vmem:[%s268 + $0x20] sm:$0xff]
        %v290 = vld [vmem:[%s268 + $0x28] sm:$0xff]
        %v291 = vld [vmem:[%s268 + $0x30] sm:$0xff]
        %v292 = vld [vmem:[%s268 + $0x38] sm:$0xff]
        %v293 = vld [vmem:[%s268 + $0x40] sm:$0xff]
        %v294 = vld [vmem:[%s268 + $0x48] sm:$0xff]
        %v295 = vld [vmem:[%s268 + $0x50] sm:$0xff]
        %v296 = vld [vmem:[%s268 + $0x58] sm:$0xff]
        %v297 = vld [vmem:[%s268 + $0x60] sm:$0xff]
        %v298 = vld [vmem:[%s268 + $0x68] sm:$0xff]
        %v299 = vld [vmem:[%s268 + $0x70] sm:$0xff]
        %v300 = vld [vmem:[%s268 + $0x78] sm:$0xff]
        %v301 = vld [vmem:[%s268 + $0x80] sm:$0xff]
        %v302 = vld [vmem:[%s268 + $0x88] sm:$0xff]
        %v303 = vld [vmem:[%s268 + $0x90] sm:$0xff]
        %v304 = vld [vmem:[%s268 + $0x98] sm:$0xff]
        %v305 = vld [vmem:[%s268 + $0xa0] sm:$0xff]
        %v306 = vld [vmem:[%s268 + $0xa8] sm:$0xff]
        %v307 = vld [vmem:[%s268 + $0xb0] sm:$0xff]
        %v308 = vld [vmem:[%s268 + $0xb8] sm:$0xff]
        %v309 = vld [vmem:[%s268 + $0xc0] sm:$0xff]
        %v310 = vld [vmem:[%s268 + $0xc8] sm:$0xff]
        %v311 = vld [vmem:[%s268 + $0xd0] sm:$0xff]
        %v312 = vld [vmem:[%s268 + $0xd8] sm:$0xff]
        %v313 = vld [vmem:[%s268 + $0xe0] sm:$0xff]
        %v314 = vld [vmem:[%s268 + $0xe8] sm:$0xff]
        %v315 = vld [vmem:[%s268 + $0xf0] sm:$0xff]
        %v316 = vld [vmem:[%s268 + $0xf8] sm:$0xff]
        %v317 = vld [vmem:[%s268 + $0x100] sm:$0xff]
        %v318 = vld [vmem:[%s268 + $0x108] sm:$0xff]
        %v319 = vld [vmem:[%s268 + $0x110] sm:$0xff]
        %v320 = vld [vmem:[%s268 + $0x118] sm:$0xff]
        %v321 = vld [vmem:[%s268 + $0x120] sm:$0xff]
        %v322 = vld [vmem:[%s268 + $0x128] sm:$0xff]
        %v323 = vld [vmem:[%s268 + $0x130] sm:$0xff]
        %v324 = vld [vmem:[%s268 + $0x138] sm:$0xff]
        %v325 = vld [vmem:[%s268 + $0x140] sm:$0xff]
        %v326 = vld [vmem:[%s268 + $0x148] sm:$0xff]
        %v327 = vld [vmem:[%s268 + $0x150] sm:$0xff]
        %v328 = vld [vmem:[%s268 + $0x158] sm:$0xff]
        %v329 = vld [vmem:[%s268 + $0x160] sm:$0xff]
        %v330 = vld [vmem:[%s268 + $0x168] sm:$0xff]
        %v331 = vld [vmem:[%s268 + $0x170] sm:$0xff]
        %v332 = vld [vmem:[%s268 + $0x178] sm:$0xff]
        %v333 = vld [vmem:[%s268 + $0x180] sm:$0xff]
        %v334 = vld [vmem:[%s268 + $0x188] sm:$0xff]
        %v335 = vld [vmem:[%s268 + $0x190] sm:$0xff]
        %v336 = vld [vmem:[%s268 + $0x198] sm:$0xff]
        %v337 = vld [vmem:[%s268 + $0x1a0] sm:$0xff]
        %v338 = vld [vmem:[%s268 + $0x1a8] sm:$0xff]
        %v339 = vld [vmem:[%s268 + $0x1b0] sm:$0xff]
        %v340 = vld [vmem:[%s268 + $0x1b8] sm:$0xff]
        %v341 = vld [vmem:[%s268 + $0x1c0] sm:$0xff]
        %v342 = vld [vmem:[%s268 + $0x1c8] sm:$0xff]
        %v343 = vld [vmem:[%s268 + $0x1d0] sm:$0xff]
        %v344 = vld [vmem:[%s268 + $0x1d8] sm:$0xff]
        %v345 = vld [vmem:[%s268 + $0x1e0] sm:$0xff]
        %v346 = vld [vmem:[%s268 + $0x1e8] sm:$0xff]
        %v347 = vld [vmem:[%s268 + $0x1f0] sm:$0xff]
        %v348 = vld [vmem:[%s268 + $0x1f8] sm:$0xff]
        %v349 = vld [vmem:[%s268 + $0x200] sm:$0xff]
        %v350 = vld [vmem:[%s268 + $0x208] sm:$0xff]
        %v351 = vld [vmem:[%s268 + $0x210] sm:$0xff]
        %v352 = vld [vmem:[%s268 + $0x218] sm:$0xff]
        %v353 = vld [vmem:[%s268 + $0x220] sm:$0xff]
        %v354 = vld [vmem:[%s268 + $0x228] sm:$0xff]
        %v355 = vld [vmem:[%s268 + $0x230] sm:$0xff]
        %v356 = vld [vmem:[%s268 + $0x238] sm:$0xff]
        %v357 = vld [vmem:[%s268 + $0x240] sm:$0xff]
        %v358 = vld [vmem:[%s268 + $0x248] sm:$0xff]
        %v359 = vld [vmem:[%s268 + $0x250] sm:$0xff]
        %v360 = vld [vmem:[%s268 + $0x258] sm:$0xff]
        %v361 = vld [vmem:[%s268 + $0x260] sm:$0xff]
        %v362 = vld [vmem:[%s268 + $0x268] sm:$0xff]
        %v363 = vld [vmem:[%s268 + $0x270] sm:$0xff]
        %v364 = vld [vmem:[%s268 + $0x278] sm:$0xff]
        %v365 = vld [vmem:[%s268 + $0x280] sm:$0xff]
        %v366 = vld [vmem:[%s268 + $0x288] sm:$0xff]
        %v367 = vld [vmem:[%s268 + $0x290] sm:$0xff]
        %v368 = vld [vmem:[%s268 + $0x298] sm:$0xff]
        %v369 = vld [vmem:[%s268 + $0x2a0] sm:$0xff]
        %v370 = vld [vmem:[%s268 + $0x2a8] sm:$0xff]
        %v371 = vld [vmem:[%s268 + $0x2b0] sm:$0xff]
        %v372 = vld [vmem:[%s268 + $0x2b8] sm:$0xff]
        %v373 = vld [vmem:[%s268 + $0x2c0] sm:$0xff]
        %v374 = vld [vmem:[%s268 + $0x2c8] sm:$0xff]
        %v375 = vld [vmem:[%s268 + $0x2d0] sm:$0xff]
        %v376 = vld [vmem:[%s268 + $0x2d8] sm:$0xff]
        %v377 = vld [vmem:[%s268 + $0x2e0] sm:$0xff]
        %v378 = vld [vmem:[%s268 + $0x2e8] sm:$0xff]
        %v379 = vld [vmem:[%s268 + $0x2f0] sm:$0xff]
        %v380 = vld [vmem:[%s268 + $0x2f8] sm:$0xff]
        %v381 = vld [vmem:[%s268 + $0x300] sm:$0xff]
        %v382 = vld [vmem:[%s268 + $0x308] sm:$0xff]
        %v383 = vld [vmem:[%s268 + $0x310] sm:$0xff]
        %v384 = vld [vmem:[%s268 + $0x318] sm:$0xff]
        %v385 = vld [vmem:[%s268 + $0x320] sm:$0xff]
        %v386 = vld [vmem:[%s268 + $0x328] sm:$0xff]
        %v387 = vld [vmem:[%s268 + $0x330] sm:$0xff]
        %v388 = vld [vmem:[%s268 + $0x338] sm:$0xff]
        %v389 = vld [vmem:[%s268 + $0x340] sm:$0xff]
        %v390 = vld [vmem:[%s268 + $0x348] sm:$0xff]
        %v391 = vld [vmem:[%s268 + $0x350] sm:$0xff]
        %v392 = vld [vmem:[%s268 + $0x358] sm:$0xff]
        %v393 = vld [vmem:[%s268 + $0x360] sm:$0xff]
        %v394 = vld [vmem:[%s268 + $0x368] sm:$0xff]
        %v395 = vld [vmem:[%s268 + $0x370] sm:$0xff]
        %v396 = vld [vmem:[%s268 + $0x378] sm:$0xff]
        %v397 = vld [vmem:[%s268 + $0x380] sm:$0xff]
        %v398 = vld [vmem:[%s268 + $0x388] sm:$0xff]
        %v399 = vld [vmem:[%s268 + $0x390] sm:$0xff]
        %v400 = vld [vmem:[%s268 + $0x398] sm:$0xff]
        %v401 = vld [vmem:[%s268 + $0x3a0] sm:$0xff]
        %v402 = vld [vmem:[%s268 + $0x3a8] sm:$0xff]
        %v403 = vld [vmem:[%s268 + $0x3b0] sm:$0xff]
        %v404 = vld [vmem:[%s268 + $0x3b8] sm:$0xff]
        %v405 = vld [vmem:[%s268 + $0x3c0] sm:$0xff]
        %v406 = vld [vmem:[%s268 + $0x3c8] sm:$0xff]
        %v407 = vld [vmem:[%s268 + $0x3d0] sm:$0xff]
        %v408 = vld [vmem:[%s268 + $0x3d8] sm:$0xff]
        %v409 = vld [vmem:[%s268 + $0x3e0] sm:$0xff]
        %v410 = vld [vmem:[%s268 + $0x3e8] sm:$0xff]
        %v411 = vld [vmem:[%s268 + $0x3f0] sm:$0xff]
        %v412 = vld [vmem:[%s268 + $0x3f8] sm:$0xff]
        %vm413 = vcmask 39936
        %v415 = vsel %vm413, %v285, 0
        %v418 = vsel %vm413, %v286, 0
        %v421 = vsel %vm413, %v287, 0
        %v424 = vsel %vm413, %v288, 0
        %v427 = vsel %vm413, %v289, 0
        %v430 = vsel %vm413, %v290, 0
        %v433 = vsel %vm413, %v291, 0
        %v436 = vsel %vm413, %v292, 0
        %v439 = vsel %vm413, %v293, 0
        %v442 = vsel %vm413, %v294, 0
        %v445 = vsel %vm413, %v295, 0
        %v448 = vsel %vm413, %v296, 0
        %v451 = vsel %vm413, %v297, 0
        %v454 = vsel %vm413, %v298, 0
        %v457 = vsel %vm413, %v299, 0
        %v460 = vsel %vm413, %v300, 0
        %v463 = vsel %vm413, %v301, 0
        %v466 = vsel %vm413, %v302, 0
        %v469 = vsel %vm413, %v303, 0
        %v472 = vsel %vm413, %v304, 0
        %v475 = vsel %vm413, %v305, 0
        %v478 = vsel %vm413, %v306, 0
        %v481 = vsel %vm413, %v307, 0
        %v484 = vsel %vm413, %v308, 0
        %v487 = vsel %vm413, %v309, 0
        %v490 = vsel %vm413, %v310, 0
        %v493 = vsel %vm413, %v311, 0
        %v496 = vsel %vm413, %v312, 0
        %v499 = vsel %vm413, %v313, 0
        %v502 = vsel %vm413, %v314, 0
        %v505 = vsel %vm413, %v315, 0
        %v508 = vsel %vm413, %v316, 0
        %v511 = vsel %vm413, %v317, 0
        %v514 = vsel %vm413, %v318, 0
        %v517 = vsel %vm413, %v319, 0
        %v520 = vsel %vm413, %v320, 0
        %v523 = vsel %vm413, %v321, 0
        %v526 = vsel %vm413, %v322, 0
        %v529 = vsel %vm413, %v323, 0
        %v532 = vsel %vm413, %v324, 0
        %v535 = vsel %vm413, %v325, 0
        %v538 = vsel %vm413, %v326, 0
        %v541 = vsel %vm413, %v327, 0
        %v544 = vsel %vm413, %v328, 0
        %v547 = vsel %vm413, %v329, 0
        %v550 = vsel %vm413, %v330, 0
        %v553 = vsel %vm413, %v331, 0
        %v556 = vsel %vm413, %v332, 0
        %v559 = vsel %vm413, %v333, 0
        %v562 = vsel %vm413, %v334, 0
        %v565 = vsel %vm413, %v335, 0
        %v568 = vsel %vm413, %v336, 0
        %v571 = vsel %vm413, %v337, 0
        %v574 = vsel %vm413, %v338, 0
        %v577 = vsel %vm413, %v339, 0
        %v580 = vsel %vm413, %v340, 0
        %v583 = vsel %vm413, %v341, 0
        %v586 = vsel %vm413, %v342, 0
        %v589 = vsel %vm413, %v343, 0
        %v592 = vsel %vm413, %v344, 0
        %v595 = vsel %vm413, %v345, 0
        %v598 = vsel %vm413, %v346, 0
        %v601 = vsel %vm413, %v347, 0
        %v604 = vsel %vm413, %v348, 0
        %v607 = vsel %vm413, %v349, 0
        %v610 = vsel %vm413, %v350, 0
        %v613 = vsel %vm413, %v351, 0
        %v616 = vsel %vm413, %v352, 0
        %v619 = vsel %vm413, %v353, 0
        %v622 = vsel %vm413, %v354, 0
        %v625 = vsel %vm413, %v355, 0
        %v628 = vsel %vm413, %v356, 0
        %v631 = vsel %vm413, %v357, 0
        %v634 = vsel %vm413, %v358, 0
        %v637 = vsel %vm413, %v359, 0
        %v640 = vsel %vm413, %v360, 0
        %v643 = vsel %vm413, %v361, 0
        %v646 = vsel %vm413, %v362, 0
        %v649 = vsel %vm413, %v363, 0
        %v652 = vsel %vm413, %v364, 0
        %v655 = vsel %vm413, %v365, 0
        %v658 = vsel %vm413, %v366, 0
        %v661 = vsel %vm413, %v367, 0
        %v664 = vsel %vm413, %v368, 0
        %v667 = vsel %vm413, %v369, 0
        %v670 = vsel %vm413, %v370, 0
        %v673 = vsel %vm413, %v371, 0
        %v676 = vsel %vm413, %v372, 0
        %v679 = vsel %vm413, %v373, 0
        %v682 = vsel %vm413, %v374, 0
        %v685 = vsel %vm413, %v375, 0
        %v688 = vsel %vm413, %v376, 0
        %v691 = vsel %vm413, %v377, 0
        %v694 = vsel %vm413, %v378, 0
        %v697 = vsel %vm413, %v379, 0
        %v700 = vsel %vm413, %v380, 0
        %v703 = vsel %vm413, %v381, 0
        %v706 = vsel %vm413, %v382, 0
        %v709 = vsel %vm413, %v383, 0
        %v712 = vsel %vm413, %v384, 0
        %v715 = vsel %vm413, %v385, 0
        %v718 = vsel %vm413, %v386, 0
        %v721 = vsel %vm413, %v387, 0
        %v724 = vsel %vm413, %v388, 0
        %v727 = vsel %vm413, %v389, 0
        %v730 = vsel %vm413, %v390, 0
        %v733 = vsel %vm413, %v391, 0
        %v736 = vsel %vm413, %v392, 0
        %v739 = vsel %vm413, %v393, 0
        %v742 = vsel %vm413, %v394, 0
        %v745 = vsel %vm413, %v395, 0
        %v748 = vsel %vm413, %v396, 0
        %v751 = vsel %vm413, %v397, 0
        %v754 = vsel %vm413, %v398, 0
        %v757 = vsel %vm413, %v399, 0
        %v760 = vsel %vm413, %v400, 0
        %v763 = vsel %vm413, %v401, 0
        %v766 = vsel %vm413, %v402, 0
        %v769 = vsel %vm413, %v403, 0
        %v772 = vsel %vm413, %v404, 0
        %v775 = vsel %vm413, %v405, 0
        %v778 = vsel %vm413, %v406, 0
        %v781 = vsel %vm413, %v407, 0
        %v784 = vsel %vm413, %v408, 0
        %v787 = vsel %vm413, %v409, 0
        %v790 = vsel %vm413, %v410, 0
        %v793 = vsel %vm413, %v411, 0
        %v796 = vsel %vm413, %v412, 0
        %vm798 = vcmask 1044480
        %v800 = vsel %vm798, %v280, 0
        %v803 = vsel %vm798, %v281, 0
        %v806 = vsel %vm798, %v282, 0
        %v809 = vsel %vm798, %v283, 0
        %811 = vmatpush.msra.mxu0 0.0
        %812 = vmatpush.msra.mxu0 0.0
        %813 = vmatpush.msra.mxu0 0.0
        %814 = vmatpush.msra.mxu0 0.0
        %815 = vmatpush.msra.mxu0 0.0
        %816 = vmatpush.msra.mxu0 0.0
        %817 = vmatpush.msra.mxu0 0.0
        %818 = vmatpush.msra.mxu0 0.0
        %819 = vmatpush.msra.mxu0 0.0
        %820 = vmatpush.msra.mxu0 0.0
        %821 = vmatpush.msra.mxu0 0.0
        %822 = vmatpush.msra.mxu0 0.0
        %823 = vmatpush.msra.mxu0 0.0
        %824 = vmatpush.msra.mxu0 0.0
        %825 = vmatpush.msra.mxu0 0.0
        %826 = vmatpush.msra.mxu0 %v800
        %827 = vmatmul.f32.gmra.mxu0 %v415
        %v828 = vpop.f32.mrf.mxu0
        %v829 = vadd.f32 0.0, %v828
        %830 = vmatmul.f32.gmra.mxu0 %v418
        %v831 = vpop.f32.mrf.mxu0
        %v832 = vadd.f32 0.0, %v831
        %833 = vmatmul.f32.gmra.mxu0 %v421
        %v834 = vpop.f32.mrf.mxu0
        %v835 = vadd.f32 0.0, %v834
        %836 = vmatmul.f32.gmra.mxu0 %v424
        %v837 = vpop.f32.mrf.mxu0
        %v838 = vadd.f32 0.0, %v837
        %839 = vmatmul.f32.gmra.mxu0 %v427
        %v840 = vpop.f32.mrf.mxu0
        %v841 = vadd.f32 0.0, %v840
        %842 = vmatmul.f32.gmra.mxu0 %v430
        %v843 = vpop.f32.mrf.mxu0
        %v844 = vadd.f32 0.0, %v843
        %845 = vmatmul.f32.gmra.mxu0 %v433
        %v846 = vpop.f32.mrf.mxu0
        %v847 = vadd.f32 0.0, %v846
        %848 = vmatmul.f32.gmra.mxu0 %v436
        %v849 = vpop.f32.mrf.mxu0
        %v850 = vadd.f32 0.0, %v849
        %851 = vmatmul.f32.gmra.mxu0 %v439
        %v852 = vpop.f32.mrf.mxu0
        %v853 = vadd.f32 0.0, %v852
        %854 = vmatmul.f32.gmra.mxu0 %v442
        %v855 = vpop.f32.mrf.mxu0
        %v856 = vadd.f32 0.0, %v855
        %857 = vmatmul.f32.gmra.mxu0 %v445
        %v858 = vpop.f32.mrf.mxu0
        %v859 = vadd.f32 0.0, %v858
        %860 = vmatmul.f32.gmra.mxu0 %v448
        %v861 = vpop.f32.mrf.mxu0
        %v862 = vadd.f32 0.0, %v861
        %863 = vmatmul.f32.gmra.mxu0 %v451
        %v864 = vpop.f32.mrf.mxu0
        %v865 = vadd.f32 0.0, %v864
        %866 = vmatmul.f32.gmra.mxu0 %v454
        %v867 = vpop.f32.mrf.mxu0
        %v868 = vadd.f32 0.0, %v867
        %869 = vmatmul.f32.gmra.mxu0 %v457
        %v870 = vpop.f32.mrf.mxu0
        %v871 = vadd.f32 0.0, %v870
        %872 = vmatmul.f32.gmra.mxu0 %v460
        %v873 = vpop.f32.mrf.mxu0
        %v874 = vadd.f32 0.0, %v873
        %875 = vmatmul.f32.gmra.mxu0 %v463
        %v876 = vpop.f32.mrf.mxu0
        %v877 = vadd.f32 0.0, %v876
        %878 = vmatmul.f32.gmra.mxu0 %v466
        %v879 = vpop.f32.mrf.mxu0
        %v880 = vadd.f32 0.0, %v879
        %881 = vmatmul.f32.gmra.mxu0 %v469
        %v882 = vpop.f32.mrf.mxu0
        %v883 = vadd.f32 0.0, %v882
        %884 = vmatmul.f32.gmra.mxu0 %v472
        %v885 = vpop.f32.mrf.mxu0
        %v886 = vadd.f32 0.0, %v885
        %887 = vmatmul.f32.gmra.mxu0 %v475
        %v888 = vpop.f32.mrf.mxu0
        %v889 = vadd.f32 0.0, %v888
        %890 = vmatmul.f32.gmra.mxu0 %v478
        %v891 = vpop.f32.mrf.mxu0
        %v892 = vadd.f32 0.0, %v891
        %893 = vmatmul.f32.gmra.mxu0 %v481
        %v894 = vpop.f32.mrf.mxu0
        %v895 = vadd.f32 0.0, %v894
        %896 = vmatmul.f32.gmra.mxu0 %v484
        %v897 = vpop.f32.mrf.mxu0
        %v898 = vadd.f32 0.0, %v897
        %899 = vmatmul.f32.gmra.mxu0 %v487
        %v900 = vpop.f32.mrf.mxu0
        %v901 = vadd.f32 0.0, %v900
        %902 = vmatmul.f32.gmra.mxu0 %v490
        %v903 = vpop.f32.mrf.mxu0
        %v904 = vadd.f32 0.0, %v903
        %905 = vmatmul.f32.gmra.mxu0 %v493
        %v906 = vpop.f32.mrf.mxu0
        %v907 = vadd.f32 0.0, %v906
        %908 = vmatmul.f32.gmra.mxu0 %v496
        %v909 = vpop.f32.mrf.mxu0
        %v910 = vadd.f32 0.0, %v909
        %911 = vmatmul.f32.gmra.mxu0 %v499
        %v912 = vpop.f32.mrf.mxu0
        %v913 = vadd.f32 0.0, %v912
        %914 = vmatmul.f32.gmra.mxu0 %v502
        %v915 = vpop.f32.mrf.mxu0
        %v916 = vadd.f32 0.0, %v915
        %917 = vmatmul.f32.gmra.mxu0 %v505
        %v918 = vpop.f32.mrf.mxu0
        %v919 = vadd.f32 0.0, %v918
        %920 = vmatmul.f32.gmra.mxu0 %v508
        %v921 = vpop.f32.mrf.mxu0
        %v922 = vadd.f32 0.0, %v921
        %923 = vmatmul.f32.gmra.mxu0 %v511
        %v924 = vpop.f32.mrf.mxu0
        %v925 = vadd.f32 0.0, %v924
        %926 = vmatmul.f32.gmra.mxu0 %v514
        %v927 = vpop.f32.mrf.mxu0
        %v928 = vadd.f32 0.0, %v927
        %929 = vmatmul.f32.gmra.mxu0 %v517
        %v930 = vpop.f32.mrf.mxu0
        %v931 = vadd.f32 0.0, %v930
        %932 = vmatmul.f32.gmra.mxu0 %v520
        %v933 = vpop.f32.mrf.mxu0
        %v934 = vadd.f32 0.0, %v933
        %935 = vmatmul.f32.gmra.mxu0 %v523
        %v936 = vpop.f32.mrf.mxu0
        %v937 = vadd.f32 0.0, %v936
        %938 = vmatmul.f32.gmra.mxu0 %v526
        %v939 = vpop.f32.mrf.mxu0
        %v940 = vadd.f32 0.0, %v939
        %941 = vmatmul.f32.gmra.mxu0 %v529
        %v942 = vpop.f32.mrf.mxu0
        %v943 = vadd.f32 0.0, %v942
        %944 = vmatmul.f32.gmra.mxu0 %v532
        %v945 = vpop.f32.mrf.mxu0
        %v946 = vadd.f32 0.0, %v945
        %947 = vmatmul.f32.gmra.mxu0 %v535
        %v948 = vpop.f32.mrf.mxu0
        %v949 = vadd.f32 0.0, %v948
        %950 = vmatmul.f32.gmra.mxu0 %v538
        %v951 = vpop.f32.mrf.mxu0
        %v952 = vadd.f32 0.0, %v951
        %953 = vmatmul.f32.gmra.mxu0 %v541
        %v954 = vpop.f32.mrf.mxu0
        %v955 = vadd.f32 0.0, %v954
        %956 = vmatmul.f32.gmra.mxu0 %v544
        %v957 = vpop.f32.mrf.mxu0
        %v958 = vadd.f32 0.0, %v957
        %959 = vmatmul.f32.gmra.mxu0 %v547
        %v960 = vpop.f32.mrf.mxu0
        %v961 = vadd.f32 0.0, %v960
        %962 = vmatmul.f32.gmra.mxu0 %v550
        %v963 = vpop.f32.mrf.mxu0
        %v964 = vadd.f32 0.0, %v963
        %965 = vmatmul.f32.gmra.mxu0 %v553
        %v966 = vpop.f32.mrf.mxu0
        %v967 = vadd.f32 0.0, %v966
        %968 = vmatmul.f32.gmra.mxu0 %v556
        %v969 = vpop.f32.mrf.mxu0
        %v970 = vadd.f32 0.0, %v969
        %971 = vmatmul.f32.gmra.mxu0 %v559
        %v972 = vpop.f32.mrf.mxu0
        %v973 = vadd.f32 0.0, %v972
        %974 = vmatmul.f32.gmra.mxu0 %v562
        %v975 = vpop.f32.mrf.mxu0
        %v976 = vadd.f32 0.0, %v975
        %977 = vmatmul.f32.gmra.mxu0 %v565
        %v978 = vpop.f32.mrf.mxu0
        %v979 = vadd.f32 0.0, %v978
        %980 = vmatmul.f32.gmra.mxu0 %v568
        %v981 = vpop.f32.mrf.mxu0
        %v982 = vadd.f32 0.0, %v981
        %983 = vmatmul.f32.gmra.mxu0 %v571
        %v984 = vpop.f32.mrf.mxu0
        %v985 = vadd.f32 0.0, %v984
        %986 = vmatmul.f32.gmra.mxu0 %v574
        %v987 = vpop.f32.mrf.mxu0
        %v988 = vadd.f32 0.0, %v987
        %989 = vmatmul.f32.gmra.mxu0 %v577
        %v990 = vpop.f32.mrf.mxu0
        %v991 = vadd.f32 0.0, %v990
        %992 = vmatmul.f32.gmra.mxu0 %v580
        %v993 = vpop.f32.mrf.mxu0
        %v994 = vadd.f32 0.0, %v993
        %995 = vmatmul.f32.gmra.mxu0 %v583
        %v996 = vpop.f32.mrf.mxu0
        %v997 = vadd.f32 0.0, %v996
        %998 = vmatmul.f32.gmra.mxu0 %v586
        %v999 = vpop.f32.mrf.mxu0
        %v1000 = vadd.f32 0.0, %v999
        %1001 = vmatmul.f32.gmra.mxu0 %v589
        %v1002 = vpop.f32.mrf.mxu0
        %v1003 = vadd.f32 0.0, %v1002
        %1004 = vmatmul.f32.gmra.mxu0 %v592
        %v1005 = vpop.f32.mrf.mxu0
        %v1006 = vadd.f32 0.0, %v1005
        %1007 = vmatmul.f32.gmra.mxu0 %v595
        %v1008 = vpop.f32.mrf.mxu0
        %v1009 = vadd.f32 0.0, %v1008
        %1010 = vmatmul.f32.gmra.mxu0 %v598
        %v1011 = vpop.f32.mrf.mxu0
        %v1012 = vadd.f32 0.0, %v1011
        %1013 = vmatmul.f32.gmra.mxu0 %v601
        %v1014 = vpop.f32.mrf.mxu0
        %v1015 = vadd.f32 0.0, %v1014
        %1016 = vmatmul.f32.gmra.mxu0 %v604
        %v1017 = vpop.f32.mrf.mxu0
        %v1018 = vadd.f32 0.0, %v1017
        %1019 = vmatmul.f32.gmra.mxu0 %v607
        %v1020 = vpop.f32.mrf.mxu0
        %v1021 = vadd.f32 0.0, %v1020
        %1022 = vmatmul.f32.gmra.mxu0 %v610
        %v1023 = vpop.f32.mrf.mxu0
        %v1024 = vadd.f32 0.0, %v1023
        %1025 = vmatmul.f32.gmra.mxu0 %v613
        %v1026 = vpop.f32.mrf.mxu0
        %v1027 = vadd.f32 0.0, %v1026
        %1028 = vmatmul.f32.gmra.mxu0 %v616
        %v1029 = vpop.f32.mrf.mxu0
        %v1030 = vadd.f32 0.0, %v1029
        %1031 = vmatmul.f32.gmra.mxu0 %v619
        %v1032 = vpop.f32.mrf.mxu0
        %v1033 = vadd.f32 0.0, %v1032
        %1034 = vmatmul.f32.gmra.mxu0 %v622
        %v1035 = vpop.f32.mrf.mxu0
        %v1036 = vadd.f32 0.0, %v1035
        %1037 = vmatmul.f32.gmra.mxu0 %v625
        %v1038 = vpop.f32.mrf.mxu0
        %v1039 = vadd.f32 0.0, %v1038
        %1040 = vmatmul.f32.gmra.mxu0 %v628
        %v1041 = vpop.f32.mrf.mxu0
        %v1042 = vadd.f32 0.0, %v1041
        %1043 = vmatmul.f32.gmra.mxu0 %v631
        %v1044 = vpop.f32.mrf.mxu0
        %v1045 = vadd.f32 0.0, %v1044
        %1046 = vmatmul.f32.gmra.mxu0 %v634
        %v1047 = vpop.f32.mrf.mxu0
        %v1048 = vadd.f32 0.0, %v1047
        %1049 = vmatmul.f32.gmra.mxu0 %v637
        %v1050 = vpop.f32.mrf.mxu0
        %v1051 = vadd.f32 0.0, %v1050
        %1052 = vmatmul.f32.gmra.mxu0 %v640
        %v1053 = vpop.f32.mrf.mxu0
        %v1054 = vadd.f32 0.0, %v1053
        %1055 = vmatmul.f32.gmra.mxu0 %v643
        %v1056 = vpop.f32.mrf.mxu0
        %v1057 = vadd.f32 0.0, %v1056
        %1058 = vmatmul.f32.gmra.mxu0 %v646
        %v1059 = vpop.f32.mrf.mxu0
        %v1060 = vadd.f32 0.0, %v1059
        %1061 = vmatmul.f32.gmra.mxu0 %v649
        %v1062 = vpop.f32.mrf.mxu0
        %v1063 = vadd.f32 0.0, %v1062
        %1064 = vmatmul.f32.gmra.mxu0 %v652
        %v1065 = vpop.f32.mrf.mxu0
        %v1066 = vadd.f32 0.0, %v1065
        %1067 = vmatmul.f32.gmra.mxu0 %v655
        %v1068 = vpop.f32.mrf.mxu0
        %v1069 = vadd.f32 0.0, %v1068
        %1070 = vmatmul.f32.gmra.mxu0 %v658
        %v1071 = vpop.f32.mrf.mxu0
        %v1072 = vadd.f32 0.0, %v1071
        %1073 = vmatmul.f32.gmra.mxu0 %v661
        %v1074 = vpop.f32.mrf.mxu0
        %v1075 = vadd.f32 0.0, %v1074
        %1076 = vmatmul.f32.gmra.mxu0 %v664
        %v1077 = vpop.f32.mrf.mxu0
        %v1078 = vadd.f32 0.0, %v1077
        %1079 = vmatmul.f32.gmra.mxu0 %v667
        %v1080 = vpop.f32.mrf.mxu0
        %v1081 = vadd.f32 0.0, %v1080
        %1082 = vmatmul.f32.gmra.mxu0 %v670
        %v1083 = vpop.f32.mrf.mxu0
        %v1084 = vadd.f32 0.0, %v1083
        %1085 = vmatmul.f32.gmra.mxu0 %v673
        %v1086 = vpop.f32.mrf.mxu0
        %v1087 = vadd.f32 0.0, %v1086
        %1088 = vmatmul.f32.gmra.mxu0 %v676
        %v1089 = vpop.f32.mrf.mxu0
        %v1090 = vadd.f32 0.0, %v1089
        %1091 = vmatmul.f32.gmra.mxu0 %v679
        %v1092 = vpop.f32.mrf.mxu0
        %v1093 = vadd.f32 0.0, %v1092
        %1094 = vmatmul.f32.gmra.mxu0 %v682
        %v1095 = vpop.f32.mrf.mxu0
        %v1096 = vadd.f32 0.0, %v1095
        %1097 = vmatmul.f32.gmra.mxu0 %v685
        %v1098 = vpop.f32.mrf.mxu0
        %v1099 = vadd.f32 0.0, %v1098
        %1100 = vmatmul.f32.gmra.mxu0 %v688
        %v1101 = vpop.f32.mrf.mxu0
        %v1102 = vadd.f32 0.0, %v1101
        %1103 = vmatmul.f32.gmra.mxu0 %v691
        %v1104 = vpop.f32.mrf.mxu0
        %v1105 = vadd.f32 0.0, %v1104
        %1106 = vmatmul.f32.gmra.mxu0 %v694
        %v1107 = vpop.f32.mrf.mxu0
        %v1108 = vadd.f32 0.0, %v1107
        %1109 = vmatmul.f32.gmra.mxu0 %v697
        %v1110 = vpop.f32.mrf.mxu0
        %v1111 = vadd.f32 0.0, %v1110
        %1112 = vmatmul.f32.gmra.mxu0 %v700
        %v1113 = vpop.f32.mrf.mxu0
        %v1114 = vadd.f32 0.0, %v1113
        %1115 = vmatmul.f32.gmra.mxu0 %v703
        %v1116 = vpop.f32.mrf.mxu0
        %v1117 = vadd.f32 0.0, %v1116
        %1118 = vmatmul.f32.gmra.mxu0 %v706
        %v1119 = vpop.f32.mrf.mxu0
        %v1120 = vadd.f32 0.0, %v1119
        %1121 = vmatmul.f32.gmra.mxu0 %v709
        %v1122 = vpop.f32.mrf.mxu0
        %v1123 = vadd.f32 0.0, %v1122
        %1124 = vmatmul.f32.gmra.mxu0 %v712
        %v1125 = vpop.f32.mrf.mxu0
        %v1126 = vadd.f32 0.0, %v1125
        %1127 = vmatmul.f32.gmra.mxu0 %v715
        %v1128 = vpop.f32.mrf.mxu0
        %v1129 = vadd.f32 0.0, %v1128
        %1130 = vmatmul.f32.gmra.mxu0 %v718
        %v1131 = vpop.f32.mrf.mxu0
        %v1132 = vadd.f32 0.0, %v1131
        %1133 = vmatmul.f32.gmra.mxu0 %v721
        %v1134 = vpop.f32.mrf.mxu0
        %v1135 = vadd.f32 0.0, %v1134
        %1136 = vmatmul.f32.gmra.mxu0 %v724
        %v1137 = vpop.f32.mrf.mxu0
        %v1138 = vadd.f32 0.0, %v1137
        %1139 = vmatmul.f32.gmra.mxu0 %v727
        %v1140 = vpop.f32.mrf.mxu0
        %v1141 = vadd.f32 0.0, %v1140
        %1142 = vmatmul.f32.gmra.mxu0 %v730
        %v1143 = vpop.f32.mrf.mxu0
        %v1144 = vadd.f32 0.0, %v1143
        %1145 = vmatmul.f32.gmra.mxu0 %v733
        %v1146 = vpop.f32.mrf.mxu0
        %v1147 = vadd.f32 0.0, %v1146
        %1148 = vmatmul.f32.gmra.mxu0 %v736
        %v1149 = vpop.f32.mrf.mxu0
        %v1150 = vadd.f32 0.0, %v1149
        %1151 = vmatmul.f32.gmra.mxu0 %v739
        %v1152 = vpop.f32.mrf.mxu0
        %v1153 = vadd.f32 0.0, %v1152
        %1154 = vmatmul.f32.gmra.mxu0 %v742
        %v1155 = vpop.f32.mrf.mxu0
        %v1156 = vadd.f32 0.0, %v1155
        %1157 = vmatmul.f32.gmra.mxu0 %v745
        %v1158 = vpop.f32.mrf.mxu0
        %v1159 = vadd.f32 0.0, %v1158
        %1160 = vmatmul.f32.gmra.mxu0 %v748
        %v1161 = vpop.f32.mrf.mxu0
        %v1162 = vadd.f32 0.0, %v1161
        %1163 = vmatmul.f32.gmra.mxu0 %v751
        %v1164 = vpop.f32.mrf.mxu0
        %v1165 = vadd.f32 0.0, %v1164
        %1166 = vmatmul.f32.gmra.mxu0 %v754
        %v1167 = vpop.f32.mrf.mxu0
        %v1168 = vadd.f32 0.0, %v1167
        %1169 = vmatmul.f32.gmra.mxu0 %v757
        %v1170 = vpop.f32.mrf.mxu0
        %v1171 = vadd.f32 0.0, %v1170
        %1172 = vmatmul.f32.gmra.mxu0 %v760
        %v1173 = vpop.f32.mrf.mxu0
        %v1174 = vadd.f32 0.0, %v1173
        %1175 = vmatmul.f32.gmra.mxu0 %v763
        %v1176 = vpop.f32.mrf.mxu0
        %v1177 = vadd.f32 0.0, %v1176
        %1178 = vmatmul.f32.gmra.mxu0 %v766
        %v1179 = vpop.f32.mrf.mxu0
        %v1180 = vadd.f32 0.0, %v1179
        %1181 = vmatmul.f32.gmra.mxu0 %v769
        %v1182 = vpop.f32.mrf.mxu0
        %v1183 = vadd.f32 0.0, %v1182
        %1184 = vmatmul.f32.gmra.mxu0 %v772
        %v1185 = vpop.f32.mrf.mxu0
        %v1186 = vadd.f32 0.0, %v1185
        %1187 = vmatmul.f32.gmra.mxu0 %v775
        %v1188 = vpop.f32.mrf.mxu0
        %v1189 = vadd.f32 0.0, %v1188
        %1190 = vmatmul.f32.gmra.mxu0 %v778
        %v1191 = vpop.f32.mrf.mxu0
        %v1192 = vadd.f32 0.0, %v1191
        %1193 = vmatmul.f32.gmra.mxu0 %v781
        %v1194 = vpop.f32.mrf.mxu0
        %v1195 = vadd.f32 0.0, %v1194
        %1196 = vmatmul.f32.gmra.mxu0 %v784
        %v1197 = vpop.f32.mrf.mxu0
        %v1198 = vadd.f32 0.0, %v1197
        %1199 = vmatmul.f32.gmra.mxu0 %v787
        %v1200 = vpop.f32.mrf.mxu0
        %v1201 = vadd.f32 0.0, %v1200
        %1202 = vmatmul.f32.gmra.mxu0 %v790
        %v1203 = vpop.f32.mrf.mxu0
        %v1204 = vadd.f32 0.0, %v1203
        %1205 = vmatmul.f32.gmra.mxu0 %v793
        %v1206 = vpop.f32.mrf.mxu0
        %v1207 = vadd.f32 0.0, %v1206
        %1208 = vmatmul.f32.gmra.mxu0 %v796
        %v1209 = vpop.f32.mrf.mxu0
        %v1210 = vadd.f32 0.0, %v1209
        %1211 = vdwg.mxu0
        %1212 = vmatpush.msra.mxu0 0.0
        %1213 = vmatpush.msra.mxu0 0.0
        %1214 = vmatpush.msra.mxu0 0.0
        %1215 = vmatpush.msra.mxu0 0.0
        %1216 = vmatpush.msra.mxu0 0.0
        %1217 = vmatpush.msra.mxu0 0.0
        %1218 = vmatpush.msra.mxu0 0.0
        %1219 = vmatpush.msra.mxu0 0.0
        %1220 = vmatpush.msra.mxu0 0.0
        %1221 = vmatpush.msra.mxu0 0.0
        %1222 = vmatpush.msra.mxu0 0.0
        %1223 = vmatpush.msra.mxu0 0.0
        %1224 = vmatpush.msra.mxu0 0.0
        %1225 = vmatpush.msra.mxu0 0.0
        %1226 = vmatpush.msra.mxu0 0.0
        %1227 = vmatpush.msra.mxu0 %v803
        %1228 = vmatmul.f32.gmra.mxu0 %v415
        %v1229 = vpop.f32.mrf.mxu0
        %v1230 = vadd.f32 0.0, %v1229
        %1231 = vmatmul.f32.gmra.mxu0 %v418
        %v1232 = vpop.f32.mrf.mxu0
        %v1233 = vadd.f32 0.0, %v1232
        %1234 = vmatmul.f32.gmra.mxu0 %v421
        %v1235 = vpop.f32.mrf.mxu0
        %v1236 = vadd.f32 0.0, %v1235
        %1237 = vmatmul.f32.gmra.mxu0 %v424
        %v1238 = vpop.f32.mrf.mxu0
        %v1239 = vadd.f32 0.0, %v1238
        %1240 = vmatmul.f32.gmra.mxu0 %v427
        %v1241 = vpop.f32.mrf.mxu0
        %v1242 = vadd.f32 0.0, %v1241
        %1243 = vmatmul.f32.gmra.mxu0 %v430
        %v1244 = vpop.f32.mrf.mxu0
        %v1245 = vadd.f32 0.0, %v1244
        %1246 = vmatmul.f32.gmra.mxu0 %v433
        %v1247 = vpop.f32.mrf.mxu0
        %v1248 = vadd.f32 0.0, %v1247
        %1249 = vmatmul.f32.gmra.mxu0 %v436
        %v1250 = vpop.f32.mrf.mxu0
        %v1251 = vadd.f32 0.0, %v1250
        %1252 = vmatmul.f32.gmra.mxu0 %v439
        %v1253 = vpop.f32.mrf.mxu0
        %v1254 = vadd.f32 0.0, %v1253
        %1255 = vmatmul.f32.gmra.mxu0 %v442
        %v1256 = vpop.f32.mrf.mxu0
        %v1257 = vadd.f32 0.0, %v1256
        %1258 = vmatmul.f32.gmra.mxu0 %v445
        %v1259 = vpop.f32.mrf.mxu0
        %v1260 = vadd.f32 0.0, %v1259
        %1261 = vmatmul.f32.gmra.mxu0 %v448
        %v1262 = vpop.f32.mrf.mxu0
        %v1263 = vadd.f32 0.0, %v1262
        %1264 = vmatmul.f32.gmra.mxu0 %v451
        %v1265 = vpop.f32.mrf.mxu0
        %v1266 = vadd.f32 0.0, %v1265
        %1267 = vmatmul.f32.gmra.mxu0 %v454
        %v1268 = vpop.f32.mrf.mxu0
        %v1269 = vadd.f32 0.0, %v1268
        %1270 = vmatmul.f32.gmra.mxu0 %v457
        %v1271 = vpop.f32.mrf.mxu0
        %v1272 = vadd.f32 0.0, %v1271
        %1273 = vmatmul.f32.gmra.mxu0 %v460
        %v1274 = vpop.f32.mrf.mxu0
        %v1275 = vadd.f32 0.0, %v1274
        %1276 = vmatmul.f32.gmra.mxu0 %v463
        %v1277 = vpop.f32.mrf.mxu0
        %v1278 = vadd.f32 0.0, %v1277
        %1279 = vmatmul.f32.gmra.mxu0 %v466
        %v1280 = vpop.f32.mrf.mxu0
        %v1281 = vadd.f32 0.0, %v1280
        %1282 = vmatmul.f32.gmra.mxu0 %v469
        %v1283 = vpop.f32.mrf.mxu0
        %v1284 = vadd.f32 0.0, %v1283
        %1285 = vmatmul.f32.gmra.mxu0 %v472
        %v1286 = vpop.f32.mrf.mxu0
        %v1287 = vadd.f32 0.0, %v1286
        %1288 = vmatmul.f32.gmra.mxu0 %v475
        %v1289 = vpop.f32.mrf.mxu0
        %v1290 = vadd.f32 0.0, %v1289
        %1291 = vmatmul.f32.gmra.mxu0 %v478
        %v1292 = vpop.f32.mrf.mxu0
        %v1293 = vadd.f32 0.0, %v1292
        %1294 = vmatmul.f32.gmra.mxu0 %v481
        %v1295 = vpop.f32.mrf.mxu0
        %v1296 = vadd.f32 0.0, %v1295
        %1297 = vmatmul.f32.gmra.mxu0 %v484
        %v1298 = vpop.f32.mrf.mxu0
        %v1299 = vadd.f32 0.0, %v1298
        %1300 = vmatmul.f32.gmra.mxu0 %v487
        %v1301 = vpop.f32.mrf.mxu0
        %v1302 = vadd.f32 0.0, %v1301
        %1303 = vmatmul.f32.gmra.mxu0 %v490
        %v1304 = vpop.f32.mrf.mxu0
        %v1305 = vadd.f32 0.0, %v1304
        %1306 = vmatmul.f32.gmra.mxu0 %v493
        %v1307 = vpop.f32.mrf.mxu0
        %v1308 = vadd.f32 0.0, %v1307
        %1309 = vmatmul.f32.gmra.mxu0 %v496
        %v1310 = vpop.f32.mrf.mxu0
        %v1311 = vadd.f32 0.0, %v1310
        %1312 = vmatmul.f32.gmra.mxu0 %v499
        %v1313 = vpop.f32.mrf.mxu0
        %v1314 = vadd.f32 0.0, %v1313
        %1315 = vmatmul.f32.gmra.mxu0 %v502
        %v1316 = vpop.f32.mrf.mxu0
        %v1317 = vadd.f32 0.0, %v1316
        %1318 = vmatmul.f32.gmra.mxu0 %v505
        %v1319 = vpop.f32.mrf.mxu0
        %v1320 = vadd.f32 0.0, %v1319
        %1321 = vmatmul.f32.gmra.mxu0 %v508
        %v1322 = vpop.f32.mrf.mxu0
        %v1323 = vadd.f32 0.0, %v1322
        %1324 = vmatmul.f32.gmra.mxu0 %v511
        %v1325 = vpop.f32.mrf.mxu0
        %v1326 = vadd.f32 0.0, %v1325
        %1327 = vmatmul.f32.gmra.mxu0 %v514
        %v1328 = vpop.f32.mrf.mxu0
        %v1329 = vadd.f32 0.0, %v1328
        %1330 = vmatmul.f32.gmra.mxu0 %v517
        %v1331 = vpop.f32.mrf.mxu0
        %v1332 = vadd.f32 0.0, %v1331
        %1333 = vmatmul.f32.gmra.mxu0 %v520
        %v1334 = vpop.f32.mrf.mxu0
        %v1335 = vadd.f32 0.0, %v1334
        %1336 = vmatmul.f32.gmra.mxu0 %v523
        %v1337 = vpop.f32.mrf.mxu0
        %v1338 = vadd.f32 0.0, %v1337
        %1339 = vmatmul.f32.gmra.mxu0 %v526
        %v1340 = vpop.f32.mrf.mxu0
        %v1341 = vadd.f32 0.0, %v1340
        %1342 = vmatmul.f32.gmra.mxu0 %v529
        %v1343 = vpop.f32.mrf.mxu0
        %v1344 = vadd.f32 0.0, %v1343
        %1345 = vmatmul.f32.gmra.mxu0 %v532
        %v1346 = vpop.f32.mrf.mxu0
        %v1347 = vadd.f32 0.0, %v1346
        %1348 = vmatmul.f32.gmra.mxu0 %v535
        %v1349 = vpop.f32.mrf.mxu0
        %v1350 = vadd.f32 0.0, %v1349
        %1351 = vmatmul.f32.gmra.mxu0 %v538
        %v1352 = vpop.f32.mrf.mxu0
        %v1353 = vadd.f32 0.0, %v1352
        %1354 = vmatmul.f32.gmra.mxu0 %v541
        %v1355 = vpop.f32.mrf.mxu0
        %v1356 = vadd.f32 0.0, %v1355
        %1357 = vmatmul.f32.gmra.mxu0 %v544
        %v1358 = vpop.f32.mrf.mxu0
        %v1359 = vadd.f32 0.0, %v1358
        %1360 = vmatmul.f32.gmra.mxu0 %v547
        %v1361 = vpop.f32.mrf.mxu0
        %v1362 = vadd.f32 0.0, %v1361
        %1363 = vmatmul.f32.gmra.mxu0 %v550
        %v1364 = vpop.f32.mrf.mxu0
        %v1365 = vadd.f32 0.0, %v1364
        %1366 = vmatmul.f32.gmra.mxu0 %v553
        %v1367 = vpop.f32.mrf.mxu0
        %v1368 = vadd.f32 0.0, %v1367
        %1369 = vmatmul.f32.gmra.mxu0 %v556
        %v1370 = vpop.f32.mrf.mxu0
        %v1371 = vadd.f32 0.0, %v1370
        %1372 = vmatmul.f32.gmra.mxu0 %v559
        %v1373 = vpop.f32.mrf.mxu0
        %v1374 = vadd.f32 0.0, %v1373
        %1375 = vmatmul.f32.gmra.mxu0 %v562
        %v1376 = vpop.f32.mrf.mxu0
        %v1377 = vadd.f32 0.0, %v1376
        %1378 = vmatmul.f32.gmra.mxu0 %v565
        %v1379 = vpop.f32.mrf.mxu0
        %v1380 = vadd.f32 0.0, %v1379
        %1381 = vmatmul.f32.gmra.mxu0 %v568
        %v1382 = vpop.f32.mrf.mxu0
        %v1383 = vadd.f32 0.0, %v1382
        %1384 = vmatmul.f32.gmra.mxu0 %v571
        %v1385 = vpop.f32.mrf.mxu0
        %v1386 = vadd.f32 0.0, %v1385
        %1387 = vmatmul.f32.gmra.mxu0 %v574
        %v1388 = vpop.f32.mrf.mxu0
        %v1389 = vadd.f32 0.0, %v1388
        %1390 = vmatmul.f32.gmra.mxu0 %v577
        %v1391 = vpop.f32.mrf.mxu0
        %v1392 = vadd.f32 0.0, %v1391
        %1393 = vmatmul.f32.gmra.mxu0 %v580
        %v1394 = vpop.f32.mrf.mxu0
        %v1395 = vadd.f32 0.0, %v1394
        %1396 = vmatmul.f32.gmra.mxu0 %v583
        %v1397 = vpop.f32.mrf.mxu0
        %v1398 = vadd.f32 0.0, %v1397
        %1399 = vmatmul.f32.gmra.mxu0 %v586
        %v1400 = vpop.f32.mrf.mxu0
        %v1401 = vadd.f32 0.0, %v1400
        %1402 = vmatmul.f32.gmra.mxu0 %v589
        %v1403 = vpop.f32.mrf.mxu0
        %v1404 = vadd.f32 0.0, %v1403
        %1405 = vmatmul.f32.gmra.mxu0 %v592
        %v1406 = vpop.f32.mrf.mxu0
        %v1407 = vadd.f32 0.0, %v1406
        %1408 = vmatmul.f32.gmra.mxu0 %v595
        %v1409 = vpop.f32.mrf.mxu0
        %v1410 = vadd.f32 0.0, %v1409
        %1411 = vmatmul.f32.gmra.mxu0 %v598
        %v1412 = vpop.f32.mrf.mxu0
        %v1413 = vadd.f32 0.0, %v1412
        %1414 = vmatmul.f32.gmra.mxu0 %v601
        %v1415 = vpop.f32.mrf.mxu0
        %v1416 = vadd.f32 0.0, %v1415
        %1417 = vmatmul.f32.gmra.mxu0 %v604
        %v1418 = vpop.f32.mrf.mxu0
        %v1419 = vadd.f32 0.0, %v1418
        %1420 = vmatmul.f32.gmra.mxu0 %v607
        %v1421 = vpop.f32.mrf.mxu0
        %v1422 = vadd.f32 0.0, %v1421
        %1423 = vmatmul.f32.gmra.mxu0 %v610
        %v1424 = vpop.f32.mrf.mxu0
        %v1425 = vadd.f32 0.0, %v1424
        %1426 = vmatmul.f32.gmra.mxu0 %v613
        %v1427 = vpop.f32.mrf.mxu0
        %v1428 = vadd.f32 0.0, %v1427
        %1429 = vmatmul.f32.gmra.mxu0 %v616
        %v1430 = vpop.f32.mrf.mxu0
        %v1431 = vadd.f32 0.0, %v1430
        %1432 = vmatmul.f32.gmra.mxu0 %v619
        %v1433 = vpop.f32.mrf.mxu0
        %v1434 = vadd.f32 0.0, %v1433
        %1435 = vmatmul.f32.gmra.mxu0 %v622
        %v1436 = vpop.f32.mrf.mxu0
        %v1437 = vadd.f32 0.0, %v1436
        %1438 = vmatmul.f32.gmra.mxu0 %v625
        %v1439 = vpop.f32.mrf.mxu0
        %v1440 = vadd.f32 0.0, %v1439
        %1441 = vmatmul.f32.gmra.mxu0 %v628
        %v1442 = vpop.f32.mrf.mxu0
        %v1443 = vadd.f32 0.0, %v1442
        %1444 = vmatmul.f32.gmra.mxu0 %v631
        %v1445 = vpop.f32.mrf.mxu0
        %v1446 = vadd.f32 0.0, %v1445
        %1447 = vmatmul.f32.gmra.mxu0 %v634
        %v1448 = vpop.f32.mrf.mxu0
        %v1449 = vadd.f32 0.0, %v1448
        %1450 = vmatmul.f32.gmra.mxu0 %v637
        %v1451 = vpop.f32.mrf.mxu0
        %v1452 = vadd.f32 0.0, %v1451
        %1453 = vmatmul.f32.gmra.mxu0 %v640
        %v1454 = vpop.f32.mrf.mxu0
        %v1455 = vadd.f32 0.0, %v1454
        %1456 = vmatmul.f32.gmra.mxu0 %v643
        %v1457 = vpop.f32.mrf.mxu0
        %v1458 = vadd.f32 0.0, %v1457
        %1459 = vmatmul.f32.gmra.mxu0 %v646
        %v1460 = vpop.f32.mrf.mxu0
        %v1461 = vadd.f32 0.0, %v1460
        %1462 = vmatmul.f32.gmra.mxu0 %v649
        %v1463 = vpop.f32.mrf.mxu0
        %v1464 = vadd.f32 0.0, %v1463
        %1465 = vmatmul.f32.gmra.mxu0 %v652
        %v1466 = vpop.f32.mrf.mxu0
        %v1467 = vadd.f32 0.0, %v1466
        %1468 = vmatmul.f32.gmra.mxu0 %v655
        %v1469 = vpop.f32.mrf.mxu0
        %v1470 = vadd.f32 0.0, %v1469
        %1471 = vmatmul.f32.gmra.mxu0 %v658
        %v1472 = vpop.f32.mrf.mxu0
        %v1473 = vadd.f32 0.0, %v1472
        %1474 = vmatmul.f32.gmra.mxu0 %v661
        %v1475 = vpop.f32.mrf.mxu0
        %v1476 = vadd.f32 0.0, %v1475
        %1477 = vmatmul.f32.gmra.mxu0 %v664
        %v1478 = vpop.f32.mrf.mxu0
        %v1479 = vadd.f32 0.0, %v1478
        %1480 = vmatmul.f32.gmra.mxu0 %v667
        %v1481 = vpop.f32.mrf.mxu0
        %v1482 = vadd.f32 0.0, %v1481
        %1483 = vmatmul.f32.gmra.mxu0 %v670
        %v1484 = vpop.f32.mrf.mxu0
        %v1485 = vadd.f32 0.0, %v1484
        %1486 = vmatmul.f32.gmra.mxu0 %v673
        %v1487 = vpop.f32.mrf.mxu0
        %v1488 = vadd.f32 0.0, %v1487
        %1489 = vmatmul.f32.gmra.mxu0 %v676
        %v1490 = vpop.f32.mrf.mxu0
        %v1491 = vadd.f32 0.0, %v1490
        %1492 = vmatmul.f32.gmra.mxu0 %v679
        %v1493 = vpop.f32.mrf.mxu0
        %v1494 = vadd.f32 0.0, %v1493
        %1495 = vmatmul.f32.gmra.mxu0 %v682
        %v1496 = vpop.f32.mrf.mxu0
        %v1497 = vadd.f32 0.0, %v1496
        %1498 = vmatmul.f32.gmra.mxu0 %v685
        %v1499 = vpop.f32.mrf.mxu0
        %v1500 = vadd.f32 0.0, %v1499
        %1501 = vmatmul.f32.gmra.mxu0 %v688
        %v1502 = vpop.f32.mrf.mxu0
        %v1503 = vadd.f32 0.0, %v1502
        %1504 = vmatmul.f32.gmra.mxu0 %v691
        %v1505 = vpop.f32.mrf.mxu0
        %v1506 = vadd.f32 0.0, %v1505
        %1507 = vmatmul.f32.gmra.mxu0 %v694
        %v1508 = vpop.f32.mrf.mxu0
        %v1509 = vadd.f32 0.0, %v1508
        %1510 = vmatmul.f32.gmra.mxu0 %v697
        %v1511 = vpop.f32.mrf.mxu0
        %v1512 = vadd.f32 0.0, %v1511
        %1513 = vmatmul.f32.gmra.mxu0 %v700
        %v1514 = vpop.f32.mrf.mxu0
        %v1515 = vadd.f32 0.0, %v1514
        %1516 = vmatmul.f32.gmra.mxu0 %v703
        %v1517 = vpop.f32.mrf.mxu0
        %v1518 = vadd.f32 0.0, %v1517
        %1519 = vmatmul.f32.gmra.mxu0 %v706
        %v1520 = vpop.f32.mrf.mxu0
        %v1521 = vadd.f32 0.0, %v1520
        %1522 = vmatmul.f32.gmra.mxu0 %v709
        %v1523 = vpop.f32.mrf.mxu0
        %v1524 = vadd.f32 0.0, %v1523
        %1525 = vmatmul.f32.gmra.mxu0 %v712
        %v1526 = vpop.f32.mrf.mxu0
        %v1527 = vadd.f32 0.0, %v1526
        %1528 = vmatmul.f32.gmra.mxu0 %v715
        %v1529 = vpop.f32.mrf.mxu0
        %v1530 = vadd.f32 0.0, %v1529
        %1531 = vmatmul.f32.gmra.mxu0 %v718
        %v1532 = vpop.f32.mrf.mxu0
        %v1533 = vadd.f32 0.0, %v1532
        %1534 = vmatmul.f32.gmra.mxu0 %v721
        %v1535 = vpop.f32.mrf.mxu0
        %v1536 = vadd.f32 0.0, %v1535
        %1537 = vmatmul.f32.gmra.mxu0 %v724
        %v1538 = vpop.f32.mrf.mxu0
        %v1539 = vadd.f32 0.0, %v1538
        %1540 = vmatmul.f32.gmra.mxu0 %v727
        %v1541 = vpop.f32.mrf.mxu0
        %v1542 = vadd.f32 0.0, %v1541
        %1543 = vmatmul.f32.gmra.mxu0 %v730
        %v1544 = vpop.f32.mrf.mxu0
        %v1545 = vadd.f32 0.0, %v1544
        %1546 = vmatmul.f32.gmra.mxu0 %v733
        %v1547 = vpop.f32.mrf.mxu0
        %v1548 = vadd.f32 0.0, %v1547
        %1549 = vmatmul.f32.gmra.mxu0 %v736
        %v1550 = vpop.f32.mrf.mxu0
        %v1551 = vadd.f32 0.0, %v1550
        %1552 = vmatmul.f32.gmra.mxu0 %v739
        %v1553 = vpop.f32.mrf.mxu0
        %v1554 = vadd.f32 0.0, %v1553
        %1555 = vmatmul.f32.gmra.mxu0 %v742
        %v1556 = vpop.f32.mrf.mxu0
        %v1557 = vadd.f32 0.0, %v1556
        %1558 = vmatmul.f32.gmra.mxu0 %v745
        %v1559 = vpop.f32.mrf.mxu0
        %v1560 = vadd.f32 0.0, %v1559
        %1561 = vmatmul.f32.gmra.mxu0 %v748
        %v1562 = vpop.f32.mrf.mxu0
        %v1563 = vadd.f32 0.0, %v1562
        %1564 = vmatmul.f32.gmra.mxu0 %v751
        %v1565 = vpop.f32.mrf.mxu0
        %v1566 = vadd.f32 0.0, %v1565
        %1567 = vmatmul.f32.gmra.mxu0 %v754
        %v1568 = vpop.f32.mrf.mxu0
        %v1569 = vadd.f32 0.0, %v1568
        %1570 = vmatmul.f32.gmra.mxu0 %v757
        %v1571 = vpop.f32.mrf.mxu0
        %v1572 = vadd.f32 0.0, %v1571
        %1573 = vmatmul.f32.gmra.mxu0 %v760
        %v1574 = vpop.f32.mrf.mxu0
        %v1575 = vadd.f32 0.0, %v1574
        %1576 = vmatmul.f32.gmra.mxu0 %v763
        %v1577 = vpop.f32.mrf.mxu0
        %v1578 = vadd.f32 0.0, %v1577
        %1579 = vmatmul.f32.gmra.mxu0 %v766
        %v1580 = vpop.f32.mrf.mxu0
        %v1581 = vadd.f32 0.0, %v1580
        %1582 = vmatmul.f32.gmra.mxu0 %v769
        %v1583 = vpop.f32.mrf.mxu0
        %v1584 = vadd.f32 0.0, %v1583
        %1585 = vmatmul.f32.gmra.mxu0 %v772
        %v1586 = vpop.f32.mrf.mxu0
        %v1587 = vadd.f32 0.0, %v1586
        %1588 = vmatmul.f32.gmra.mxu0 %v775
        %v1589 = vpop.f32.mrf.mxu0
        %v1590 = vadd.f32 0.0, %v1589
        %1591 = vmatmul.f32.gmra.mxu0 %v778
        %v1592 = vpop.f32.mrf.mxu0
        %v1593 = vadd.f32 0.0, %v1592
        %1594 = vmatmul.f32.gmra.mxu0 %v781
        %v1595 = vpop.f32.mrf.mxu0
        %v1596 = vadd.f32 0.0, %v1595
        %1597 = vmatmul.f32.gmra.mxu0 %v784
        %v1598 = vpop.f32.mrf.mxu0
        %v1599 = vadd.f32 0.0, %v1598
        %1600 = vmatmul.f32.gmra.mxu0 %v787
        %v1601 = vpop.f32.mrf.mxu0
        %v1602 = vadd.f32 0.0, %v1601
        %1603 = vmatmul.f32.gmra.mxu0 %v790
        %v1604 = vpop.f32.mrf.mxu0
        %v1605 = vadd.f32 0.0, %v1604
        %1606 = vmatmul.f32.gmra.mxu0 %v793
        %v1607 = vpop.f32.mrf.mxu0
        %v1608 = vadd.f32 0.0, %v1607
        %1609 = vmatmul.f32.gmra.mxu0 %v796
        %v1610 = vpop.f32.mrf.mxu0
        %v1611 = vadd.f32 0.0, %v1610
        %1612 = vdwg.mxu0
        %1613 = vmatpush.msra.mxu0 0.0
        %1614 = vmatpush.msra.mxu0 0.0
        %1615 = vmatpush.msra.mxu0 0.0
        %1616 = vmatpush.msra.mxu0 0.0
        %1617 = vmatpush.msra.mxu0 0.0
        %1618 = vmatpush.msra.mxu0 0.0
        %1619 = vmatpush.msra.mxu0 0.0
        %1620 = vmatpush.msra.mxu0 0.0
        %1621 = vmatpush.msra.mxu0 0.0
        %1622 = vmatpush.msra.mxu0 0.0
        %1623 = vmatpush.msra.mxu0 0.0
        %1624 = vmatpush.msra.mxu0 0.0
        %1625 = vmatpush.msra.mxu0 0.0
        %1626 = vmatpush.msra.mxu0 0.0
        %1627 = vmatpush.msra.mxu0 0.0
        %1628 = vmatpush.msra.mxu0 %v806
        %1629 = vmatmul.f32.gmra.mxu0 %v415
        %v1630 = vpop.f32.mrf.mxu0
        %v1631 = vadd.f32 0.0, %v1630
        %1632 = vmatmul.f32.gmra.mxu0 %v418
        %v1633 = vpop.f32.mrf.mxu0
        %v1634 = vadd.f32 0.0, %v1633
        %1635 = vmatmul.f32.gmra.mxu0 %v421
        %v1636 = vpop.f32.mrf.mxu0
        %v1637 = vadd.f32 0.0, %v1636
        %1638 = vmatmul.f32.gmra.mxu0 %v424
        %v1639 = vpop.f32.mrf.mxu0
        %v1640 = vadd.f32 0.0, %v1639
        %1641 = vmatmul.f32.gmra.mxu0 %v427
        %v1642 = vpop.f32.mrf.mxu0
        %v1643 = vadd.f32 0.0, %v1642
        %1644 = vmatmul.f32.gmra.mxu0 %v430
        %v1645 = vpop.f32.mrf.mxu0
        %v1646 = vadd.f32 0.0, %v1645
        %1647 = vmatmul.f32.gmra.mxu0 %v433
        %v1648 = vpop.f32.mrf.mxu0
        %v1649 = vadd.f32 0.0, %v1648
        %1650 = vmatmul.f32.gmra.mxu0 %v436
        %v1651 = vpop.f32.mrf.mxu0
        %v1652 = vadd.f32 0.0, %v1651
        %1653 = vmatmul.f32.gmra.mxu0 %v439
        %v1654 = vpop.f32.mrf.mxu0
        %v1655 = vadd.f32 0.0, %v1654
        %1656 = vmatmul.f32.gmra.mxu0 %v442
        %v1657 = vpop.f32.mrf.mxu0
        %v1658 = vadd.f32 0.0, %v1657
        %1659 = vmatmul.f32.gmra.mxu0 %v445
        %v1660 = vpop.f32.mrf.mxu0
        %v1661 = vadd.f32 0.0, %v1660
        %1662 = vmatmul.f32.gmra.mxu0 %v448
        %v1663 = vpop.f32.mrf.mxu0
        %v1664 = vadd.f32 0.0, %v1663
        %1665 = vmatmul.f32.gmra.mxu0 %v451
        %v1666 = vpop.f32.mrf.mxu0
        %v1667 = vadd.f32 0.0, %v1666
        %1668 = vmatmul.f32.gmra.mxu0 %v454
        %v1669 = vpop.f32.mrf.mxu0
        %v1670 = vadd.f32 0.0, %v1669
        %1671 = vmatmul.f32.gmra.mxu0 %v457
        %v1672 = vpop.f32.mrf.mxu0
        %v1673 = vadd.f32 0.0, %v1672
        %1674 = vmatmul.f32.gmra.mxu0 %v460
        %v1675 = vpop.f32.mrf.mxu0
        %v1676 = vadd.f32 0.0, %v1675
        %1677 = vmatmul.f32.gmra.mxu0 %v463
        %v1678 = vpop.f32.mrf.mxu0
        %v1679 = vadd.f32 0.0, %v1678
        %1680 = vmatmul.f32.gmra.mxu0 %v466
        %v1681 = vpop.f32.mrf.mxu0
        %v1682 = vadd.f32 0.0, %v1681
        %1683 = vmatmul.f32.gmra.mxu0 %v469
        %v1684 = vpop.f32.mrf.mxu0
        %v1685 = vadd.f32 0.0, %v1684
        %1686 = vmatmul.f32.gmra.mxu0 %v472
        %v1687 = vpop.f32.mrf.mxu0
        %v1688 = vadd.f32 0.0, %v1687
        %1689 = vmatmul.f32.gmra.mxu0 %v475
        %v1690 = vpop.f32.mrf.mxu0
        %v1691 = vadd.f32 0.0, %v1690
        %1692 = vmatmul.f32.gmra.mxu0 %v478
        %v1693 = vpop.f32.mrf.mxu0
        %v1694 = vadd.f32 0.0, %v1693
        %1695 = vmatmul.f32.gmra.mxu0 %v481
        %v1696 = vpop.f32.mrf.mxu0
        %v1697 = vadd.f32 0.0, %v1696
        %1698 = vmatmul.f32.gmra.mxu0 %v484
        %v1699 = vpop.f32.mrf.mxu0
        %v1700 = vadd.f32 0.0, %v1699
        %1701 = vmatmul.f32.gmra.mxu0 %v487
        %v1702 = vpop.f32.mrf.mxu0
        %v1703 = vadd.f32 0.0, %v1702
        %1704 = vmatmul.f32.gmra.mxu0 %v490
        %v1705 = vpop.f32.mrf.mxu0
        %v1706 = vadd.f32 0.0, %v1705
        %1707 = vmatmul.f32.gmra.mxu0 %v493
        %v1708 = vpop.f32.mrf.mxu0
        %v1709 = vadd.f32 0.0, %v1708
        %1710 = vmatmul.f32.gmra.mxu0 %v496
        %v1711 = vpop.f32.mrf.mxu0
        %v1712 = vadd.f32 0.0, %v1711
        %1713 = vmatmul.f32.gmra.mxu0 %v499
        %v1714 = vpop.f32.mrf.mxu0
        %v1715 = vadd.f32 0.0, %v1714
        %1716 = vmatmul.f32.gmra.mxu0 %v502
        %v1717 = vpop.f32.mrf.mxu0
        %v1718 = vadd.f32 0.0, %v1717
        %1719 = vmatmul.f32.gmra.mxu0 %v505
        %v1720 = vpop.f32.mrf.mxu0
        %v1721 = vadd.f32 0.0, %v1720
        %1722 = vmatmul.f32.gmra.mxu0 %v508
        %v1723 = vpop.f32.mrf.mxu0
        %v1724 = vadd.f32 0.0, %v1723
        %1725 = vmatmul.f32.gmra.mxu0 %v511
        %v1726 = vpop.f32.mrf.mxu0
        %v1727 = vadd.f32 0.0, %v1726
        %1728 = vmatmul.f32.gmra.mxu0 %v514
        %v1729 = vpop.f32.mrf.mxu0
        %v1730 = vadd.f32 0.0, %v1729
        %1731 = vmatmul.f32.gmra.mxu0 %v517
        %v1732 = vpop.f32.mrf.mxu0
        %v1733 = vadd.f32 0.0, %v1732
        %1734 = vmatmul.f32.gmra.mxu0 %v520
        %v1735 = vpop.f32.mrf.mxu0
        %v1736 = vadd.f32 0.0, %v1735
        %1737 = vmatmul.f32.gmra.mxu0 %v523
        %v1738 = vpop.f32.mrf.mxu0
        %v1739 = vadd.f32 0.0, %v1738
        %1740 = vmatmul.f32.gmra.mxu0 %v526
        %v1741 = vpop.f32.mrf.mxu0
        %v1742 = vadd.f32 0.0, %v1741
        %1743 = vmatmul.f32.gmra.mxu0 %v529
        %v1744 = vpop.f32.mrf.mxu0
        %v1745 = vadd.f32 0.0, %v1744
        %1746 = vmatmul.f32.gmra.mxu0 %v532
        %v1747 = vpop.f32.mrf.mxu0
        %v1748 = vadd.f32 0.0, %v1747
        %1749 = vmatmul.f32.gmra.mxu0 %v535
        %v1750 = vpop.f32.mrf.mxu0
        %v1751 = vadd.f32 0.0, %v1750
        %1752 = vmatmul.f32.gmra.mxu0 %v538
        %v1753 = vpop.f32.mrf.mxu0
        %v1754 = vadd.f32 0.0, %v1753
        %1755 = vmatmul.f32.gmra.mxu0 %v541
        %v1756 = vpop.f32.mrf.mxu0
        %v1757 = vadd.f32 0.0, %v1756
        %1758 = vmatmul.f32.gmra.mxu0 %v544
        %v1759 = vpop.f32.mrf.mxu0
        %v1760 = vadd.f32 0.0, %v1759
        %1761 = vmatmul.f32.gmra.mxu0 %v547
        %v1762 = vpop.f32.mrf.mxu0
        %v1763 = vadd.f32 0.0, %v1762
        %1764 = vmatmul.f32.gmra.mxu0 %v550
        %v1765 = vpop.f32.mrf.mxu0
        %v1766 = vadd.f32 0.0, %v1765
        %1767 = vmatmul.f32.gmra.mxu0 %v553
        %v1768 = vpop.f32.mrf.mxu0
        %v1769 = vadd.f32 0.0, %v1768
        %1770 = vmatmul.f32.gmra.mxu0 %v556
        %v1771 = vpop.f32.mrf.mxu0
        %v1772 = vadd.f32 0.0, %v1771
        %1773 = vmatmul.f32.gmra.mxu0 %v559
        %v1774 = vpop.f32.mrf.mxu0
        %v1775 = vadd.f32 0.0, %v1774
        %1776 = vmatmul.f32.gmra.mxu0 %v562
        %v1777 = vpop.f32.mrf.mxu0
        %v1778 = vadd.f32 0.0, %v1777
        %1779 = vmatmul.f32.gmra.mxu0 %v565
        %v1780 = vpop.f32.mrf.mxu0
        %v1781 = vadd.f32 0.0, %v1780
        %1782 = vmatmul.f32.gmra.mxu0 %v568
        %v1783 = vpop.f32.mrf.mxu0
        %v1784 = vadd.f32 0.0, %v1783
        %1785 = vmatmul.f32.gmra.mxu0 %v571
        %v1786 = vpop.f32.mrf.mxu0
        %v1787 = vadd.f32 0.0, %v1786
        %1788 = vmatmul.f32.gmra.mxu0 %v574
        %v1789 = vpop.f32.mrf.mxu0
        %v1790 = vadd.f32 0.0, %v1789
        %1791 = vmatmul.f32.gmra.mxu0 %v577
        %v1792 = vpop.f32.mrf.mxu0
        %v1793 = vadd.f32 0.0, %v1792
        %1794 = vmatmul.f32.gmra.mxu0 %v580
        %v1795 = vpop.f32.mrf.mxu0
        %v1796 = vadd.f32 0.0, %v1795
        %1797 = vmatmul.f32.gmra.mxu0 %v583
        %v1798 = vpop.f32.mrf.mxu0
        %v1799 = vadd.f32 0.0, %v1798
        %1800 = vmatmul.f32.gmra.mxu0 %v586
        %v1801 = vpop.f32.mrf.mxu0
        %v1802 = vadd.f32 0.0, %v1801
        %1803 = vmatmul.f32.gmra.mxu0 %v589
        %v1804 = vpop.f32.mrf.mxu0
        %v1805 = vadd.f32 0.0, %v1804
        %1806 = vmatmul.f32.gmra.mxu0 %v592
        %v1807 = vpop.f32.mrf.mxu0
        %v1808 = vadd.f32 0.0, %v1807
        %1809 = vmatmul.f32.gmra.mxu0 %v595
        %v1810 = vpop.f32.mrf.mxu0
        %v1811 = vadd.f32 0.0, %v1810
        %1812 = vmatmul.f32.gmra.mxu0 %v598
        %v1813 = vpop.f32.mrf.mxu0
        %v1814 = vadd.f32 0.0, %v1813
        %1815 = vmatmul.f32.gmra.mxu0 %v601
        %v1816 = vpop.f32.mrf.mxu0
        %v1817 = vadd.f32 0.0, %v1816
        %1818 = vmatmul.f32.gmra.mxu0 %v604
        %v1819 = vpop.f32.mrf.mxu0
        %v1820 = vadd.f32 0.0, %v1819
        %1821 = vmatmul.f32.gmra.mxu0 %v607
        %v1822 = vpop.f32.mrf.mxu0
        %v1823 = vadd.f32 0.0, %v1822
        %1824 = vmatmul.f32.gmra.mxu0 %v610
        %v1825 = vpop.f32.mrf.mxu0
        %v1826 = vadd.f32 0.0, %v1825
        %1827 = vmatmul.f32.gmra.mxu0 %v613
        %v1828 = vpop.f32.mrf.mxu0
        %v1829 = vadd.f32 0.0, %v1828
        %1830 = vmatmul.f32.gmra.mxu0 %v616
        %v1831 = vpop.f32.mrf.mxu0
        %v1832 = vadd.f32 0.0, %v1831
        %1833 = vmatmul.f32.gmra.mxu0 %v619
        %v1834 = vpop.f32.mrf.mxu0
        %v1835 = vadd.f32 0.0, %v1834
        %1836 = vmatmul.f32.gmra.mxu0 %v622
        %v1837 = vpop.f32.mrf.mxu0
        %v1838 = vadd.f32 0.0, %v1837
        %1839 = vmatmul.f32.gmra.mxu0 %v625
        %v1840 = vpop.f32.mrf.mxu0
        %v1841 = vadd.f32 0.0, %v1840
        %1842 = vmatmul.f32.gmra.mxu0 %v628
        %v1843 = vpop.f32.mrf.mxu0
        %v1844 = vadd.f32 0.0, %v1843
        %1845 = vmatmul.f32.gmra.mxu0 %v631
        %v1846 = vpop.f32.mrf.mxu0
        %v1847 = vadd.f32 0.0, %v1846
        %1848 = vmatmul.f32.gmra.mxu0 %v634
        %v1849 = vpop.f32.mrf.mxu0
        %v1850 = vadd.f32 0.0, %v1849
        %1851 = vmatmul.f32.gmra.mxu0 %v637
        %v1852 = vpop.f32.mrf.mxu0
        %v1853 = vadd.f32 0.0, %v1852
        %1854 = vmatmul.f32.gmra.mxu0 %v640
        %v1855 = vpop.f32.mrf.mxu0
        %v1856 = vadd.f32 0.0, %v1855
        %1857 = vmatmul.f32.gmra.mxu0 %v643
        %v1858 = vpop.f32.mrf.mxu0
        %v1859 = vadd.f32 0.0, %v1858
        %1860 = vmatmul.f32.gmra.mxu0 %v646
        %v1861 = vpop.f32.mrf.mxu0
        %v1862 = vadd.f32 0.0, %v1861
        %1863 = vmatmul.f32.gmra.mxu0 %v649
        %v1864 = vpop.f32.mrf.mxu0
        %v1865 = vadd.f32 0.0, %v1864
        %1866 = vmatmul.f32.gmra.mxu0 %v652
        %v1867 = vpop.f32.mrf.mxu0
        %v1868 = vadd.f32 0.0, %v1867
        %1869 = vmatmul.f32.gmra.mxu0 %v655
        %v1870 = vpop.f32.mrf.mxu0
        %v1871 = vadd.f32 0.0, %v1870
        %1872 = vmatmul.f32.gmra.mxu0 %v658
        %v1873 = vpop.f32.mrf.mxu0
        %v1874 = vadd.f32 0.0, %v1873
        %1875 = vmatmul.f32.gmra.mxu0 %v661
        %v1876 = vpop.f32.mrf.mxu0
        %v1877 = vadd.f32 0.0, %v1876
        %1878 = vmatmul.f32.gmra.mxu0 %v664
        %v1879 = vpop.f32.mrf.mxu0
        %v1880 = vadd.f32 0.0, %v1879
        %1881 = vmatmul.f32.gmra.mxu0 %v667
        %v1882 = vpop.f32.mrf.mxu0
        %v1883 = vadd.f32 0.0, %v1882
        %1884 = vmatmul.f32.gmra.mxu0 %v670
        %v1885 = vpop.f32.mrf.mxu0
        %v1886 = vadd.f32 0.0, %v1885
        %1887 = vmatmul.f32.gmra.mxu0 %v673
        %v1888 = vpop.f32.mrf.mxu0
        %v1889 = vadd.f32 0.0, %v1888
        %1890 = vmatmul.f32.gmra.mxu0 %v676
        %v1891 = vpop.f32.mrf.mxu0
        %v1892 = vadd.f32 0.0, %v1891
        %1893 = vmatmul.f32.gmra.mxu0 %v679
        %v1894 = vpop.f32.mrf.mxu0
        %v1895 = vadd.f32 0.0, %v1894
        %1896 = vmatmul.f32.gmra.mxu0 %v682
        %v1897 = vpop.f32.mrf.mxu0
        %v1898 = vadd.f32 0.0, %v1897
        %1899 = vmatmul.f32.gmra.mxu0 %v685
        %v1900 = vpop.f32.mrf.mxu0
        %v1901 = vadd.f32 0.0, %v1900
        %1902 = vmatmul.f32.gmra.mxu0 %v688
        %v1903 = vpop.f32.mrf.mxu0
        %v1904 = vadd.f32 0.0, %v1903
        %1905 = vmatmul.f32.gmra.mxu0 %v691
        %v1906 = vpop.f32.mrf.mxu0
        %v1907 = vadd.f32 0.0, %v1906
        %1908 = vmatmul.f32.gmra.mxu0 %v694
        %v1909 = vpop.f32.mrf.mxu0
        %v1910 = vadd.f32 0.0, %v1909
        %1911 = vmatmul.f32.gmra.mxu0 %v697
        %v1912 = vpop.f32.mrf.mxu0
        %v1913 = vadd.f32 0.0, %v1912
        %1914 = vmatmul.f32.gmra.mxu0 %v700
        %v1915 = vpop.f32.mrf.mxu0
        %v1916 = vadd.f32 0.0, %v1915
        %1917 = vmatmul.f32.gmra.mxu0 %v703
        %v1918 = vpop.f32.mrf.mxu0
        %v1919 = vadd.f32 0.0, %v1918
        %1920 = vmatmul.f32.gmra.mxu0 %v706
        %v1921 = vpop.f32.mrf.mxu0
        %v1922 = vadd.f32 0.0, %v1921
        %1923 = vmatmul.f32.gmra.mxu0 %v709
        %v1924 = vpop.f32.mrf.mxu0
        %v1925 = vadd.f32 0.0, %v1924
        %1926 = vmatmul.f32.gmra.mxu0 %v712
        %v1927 = vpop.f32.mrf.mxu0
        %v1928 = vadd.f32 0.0, %v1927
        %1929 = vmatmul.f32.gmra.mxu0 %v715
        %v1930 = vpop.f32.mrf.mxu0
        %v1931 = vadd.f32 0.0, %v1930
        %1932 = vmatmul.f32.gmra.mxu0 %v718
        %v1933 = vpop.f32.mrf.mxu0
        %v1934 = vadd.f32 0.0, %v1933
        %1935 = vmatmul.f32.gmra.mxu0 %v721
        %v1936 = vpop.f32.mrf.mxu0
        %v1937 = vadd.f32 0.0, %v1936
        %1938 = vmatmul.f32.gmra.mxu0 %v724
        %v1939 = vpop.f32.mrf.mxu0
        %v1940 = vadd.f32 0.0, %v1939
        %1941 = vmatmul.f32.gmra.mxu0 %v727
        %v1942 = vpop.f32.mrf.mxu0
        %v1943 = vadd.f32 0.0, %v1942
        %1944 = vmatmul.f32.gmra.mxu0 %v730
        %v1945 = vpop.f32.mrf.mxu0
        %v1946 = vadd.f32 0.0, %v1945
        %1947 = vmatmul.f32.gmra.mxu0 %v733
        %v1948 = vpop.f32.mrf.mxu0
        %v1949 = vadd.f32 0.0, %v1948
        %1950 = vmatmul.f32.gmra.mxu0 %v736
        %v1951 = vpop.f32.mrf.mxu0
        %v1952 = vadd.f32 0.0, %v1951
        %1953 = vmatmul.f32.gmra.mxu0 %v739
        %v1954 = vpop.f32.mrf.mxu0
        %v1955 = vadd.f32 0.0, %v1954
        %1956 = vmatmul.f32.gmra.mxu0 %v742
        %v1957 = vpop.f32.mrf.mxu0
        %v1958 = vadd.f32 0.0, %v1957
        %1959 = vmatmul.f32.gmra.mxu0 %v745
        %v1960 = vpop.f32.mrf.mxu0
        %v1961 = vadd.f32 0.0, %v1960
        %1962 = vmatmul.f32.gmra.mxu0 %v748
        %v1963 = vpop.f32.mrf.mxu0
        %v1964 = vadd.f32 0.0, %v1963
        %1965 = vmatmul.f32.gmra.mxu0 %v751
        %v1966 = vpop.f32.mrf.mxu0
        %v1967 = vadd.f32 0.0, %v1966
        %1968 = vmatmul.f32.gmra.mxu0 %v754
        %v1969 = vpop.f32.mrf.mxu0
        %v1970 = vadd.f32 0.0, %v1969
        %1971 = vmatmul.f32.gmra.mxu0 %v757
        %v1972 = vpop.f32.mrf.mxu0
        %v1973 = vadd.f32 0.0, %v1972
        %1974 = vmatmul.f32.gmra.mxu0 %v760
        %v1975 = vpop.f32.mrf.mxu0
        %v1976 = vadd.f32 0.0, %v1975
        %1977 = vmatmul.f32.gmra.mxu0 %v763
        %v1978 = vpop.f32.mrf.mxu0
        %v1979 = vadd.f32 0.0, %v1978
        %1980 = vmatmul.f32.gmra.mxu0 %v766
        %v1981 = vpop.f32.mrf.mxu0
        %v1982 = vadd.f32 0.0, %v1981
        %1983 = vmatmul.f32.gmra.mxu0 %v769
        %v1984 = vpop.f32.mrf.mxu0
        %v1985 = vadd.f32 0.0, %v1984
        %1986 = vmatmul.f32.gmra.mxu0 %v772
        %v1987 = vpop.f32.mrf.mxu0
        %v1988 = vadd.f32 0.0, %v1987
        %1989 = vmatmul.f32.gmra.mxu0 %v775
        %v1990 = vpop.f32.mrf.mxu0
        %v1991 = vadd.f32 0.0, %v1990
        %1992 = vmatmul.f32.gmra.mxu0 %v778
        %v1993 = vpop.f32.mrf.mxu0
        %v1994 = vadd.f32 0.0, %v1993
        %1995 = vmatmul.f32.gmra.mxu0 %v781
        %v1996 = vpop.f32.mrf.mxu0
        %v1997 = vadd.f32 0.0, %v1996
        %1998 = vmatmul.f32.gmra.mxu0 %v784
        %v1999 = vpop.f32.mrf.mxu0
        %v2000 = vadd.f32 0.0, %v1999
        %2001 = vmatmul.f32.gmra.mxu0 %v787
        %v2002 = vpop.f32.mrf.mxu0
        %v2003 = vadd.f32 0.0, %v2002
        %2004 = vmatmul.f32.gmra.mxu0 %v790
        %v2005 = vpop.f32.mrf.mxu0
        %v2006 = vadd.f32 0.0, %v2005
        %2007 = vmatmul.f32.gmra.mxu0 %v793
        %v2008 = vpop.f32.mrf.mxu0
        %v2009 = vadd.f32 0.0, %v2008
        %2010 = vmatmul.f32.gmra.mxu0 %v796
        %v2011 = vpop.f32.mrf.mxu0
        %v2012 = vadd.f32 0.0, %v2011
        %2013 = vdwg.mxu0
        %2014 = vmatpush.msra.mxu0 0.0
        %2015 = vmatpush.msra.mxu0 0.0
        %2016 = vmatpush.msra.mxu0 0.0
        %2017 = vmatpush.msra.mxu0 0.0
        %2018 = vmatpush.msra.mxu0 0.0
        %2019 = vmatpush.msra.mxu0 0.0
        %2020 = vmatpush.msra.mxu0 0.0
        %2021 = vmatpush.msra.mxu0 0.0
        %2022 = vmatpush.msra.mxu0 0.0
        %2023 = vmatpush.msra.mxu0 0.0
        %2024 = vmatpush.msra.mxu0 0.0
        %2025 = vmatpush.msra.mxu0 0.0
        %2026 = vmatpush.msra.mxu0 0.0
        %2027 = vmatpush.msra.mxu0 0.0
        %2028 = vmatpush.msra.mxu0 0.0
        %2029 = vmatpush.msra.mxu0 %v809
        %2030 = vmatmul.f32.gmra.mxu0 %v415
        %v2031 = vpop.f32.mrf.mxu0
        %v2032 = vadd.f32 0.0, %v2031
        %2033 = vmatmul.f32.gmra.mxu0 %v418
        %v2034 = vpop.f32.mrf.mxu0
        %v2035 = vadd.f32 0.0, %v2034
        %2036 = vmatmul.f32.gmra.mxu0 %v421
        %v2037 = vpop.f32.mrf.mxu0
        %v2038 = vadd.f32 0.0, %v2037
        %2039 = vmatmul.f32.gmra.mxu0 %v424
        %v2040 = vpop.f32.mrf.mxu0
        %v2041 = vadd.f32 0.0, %v2040
        %2042 = vmatmul.f32.gmra.mxu0 %v427
        %v2043 = vpop.f32.mrf.mxu0
        %v2044 = vadd.f32 0.0, %v2043
        %2045 = vmatmul.f32.gmra.mxu0 %v430
        %v2046 = vpop.f32.mrf.mxu0
        %v2047 = vadd.f32 0.0, %v2046
        %2048 = vmatmul.f32.gmra.mxu0 %v433
        %v2049 = vpop.f32.mrf.mxu0
        %v2050 = vadd.f32 0.0, %v2049
        %2051 = vmatmul.f32.gmra.mxu0 %v436
        %v2052 = vpop.f32.mrf.mxu0
        %v2053 = vadd.f32 0.0, %v2052
        %2054 = vmatmul.f32.gmra.mxu0 %v439
        %v2055 = vpop.f32.mrf.mxu0
        %v2056 = vadd.f32 0.0, %v2055
        %2057 = vmatmul.f32.gmra.mxu0 %v442
        %v2058 = vpop.f32.mrf.mxu0
        %v2059 = vadd.f32 0.0, %v2058
        %2060 = vmatmul.f32.gmra.mxu0 %v445
        %v2061 = vpop.f32.mrf.mxu0
        %v2062 = vadd.f32 0.0, %v2061
        %2063 = vmatmul.f32.gmra.mxu0 %v448
        %v2064 = vpop.f32.mrf.mxu0
        %v2065 = vadd.f32 0.0, %v2064
        %2066 = vmatmul.f32.gmra.mxu0 %v451
        %v2067 = vpop.f32.mrf.mxu0
        %v2068 = vadd.f32 0.0, %v2067
        %2069 = vmatmul.f32.gmra.mxu0 %v454
        %v2070 = vpop.f32.mrf.mxu0
        %v2071 = vadd.f32 0.0, %v2070
        %2072 = vmatmul.f32.gmra.mxu0 %v457
        %v2073 = vpop.f32.mrf.mxu0
        %v2074 = vadd.f32 0.0, %v2073
        %2075 = vmatmul.f32.gmra.mxu0 %v460
        %v2076 = vpop.f32.mrf.mxu0
        %v2077 = vadd.f32 0.0, %v2076
        %2078 = vmatmul.f32.gmra.mxu0 %v463
        %v2079 = vpop.f32.mrf.mxu0
        %v2080 = vadd.f32 0.0, %v2079
        %2081 = vmatmul.f32.gmra.mxu0 %v466
        %v2082 = vpop.f32.mrf.mxu0
        %v2083 = vadd.f32 0.0, %v2082
        %2084 = vmatmul.f32.gmra.mxu0 %v469
        %v2085 = vpop.f32.mrf.mxu0
        %v2086 = vadd.f32 0.0, %v2085
        %2087 = vmatmul.f32.gmra.mxu0 %v472
        %v2088 = vpop.f32.mrf.mxu0
        %v2089 = vadd.f32 0.0, %v2088
        %2090 = vmatmul.f32.gmra.mxu0 %v475
        %v2091 = vpop.f32.mrf.mxu0
        %v2092 = vadd.f32 0.0, %v2091
        %2093 = vmatmul.f32.gmra.mxu0 %v478
        %v2094 = vpop.f32.mrf.mxu0
        %v2095 = vadd.f32 0.0, %v2094
        %2096 = vmatmul.f32.gmra.mxu0 %v481
        %v2097 = vpop.f32.mrf.mxu0
        %v2098 = vadd.f32 0.0, %v2097
        %2099 = vmatmul.f32.gmra.mxu0 %v484
        %v2100 = vpop.f32.mrf.mxu0
        %v2101 = vadd.f32 0.0, %v2100
        %2102 = vmatmul.f32.gmra.mxu0 %v487
        %v2103 = vpop.f32.mrf.mxu0
        %v2104 = vadd.f32 0.0, %v2103
        %2105 = vmatmul.f32.gmra.mxu0 %v490
        %v2106 = vpop.f32.mrf.mxu0
        %v2107 = vadd.f32 0.0, %v2106
        %2108 = vmatmul.f32.gmra.mxu0 %v493
        %v2109 = vpop.f32.mrf.mxu0
        %v2110 = vadd.f32 0.0, %v2109
        %2111 = vmatmul.f32.gmra.mxu0 %v496
        %v2112 = vpop.f32.mrf.mxu0
        %v2113 = vadd.f32 0.0, %v2112
        %2114 = vmatmul.f32.gmra.mxu0 %v499
        %v2115 = vpop.f32.mrf.mxu0
        %v2116 = vadd.f32 0.0, %v2115
        %2117 = vmatmul.f32.gmra.mxu0 %v502
        %v2118 = vpop.f32.mrf.mxu0
        %v2119 = vadd.f32 0.0, %v2118
        %2120 = vmatmul.f32.gmra.mxu0 %v505
        %v2121 = vpop.f32.mrf.mxu0
        %v2122 = vadd.f32 0.0, %v2121
        %2123 = vmatmul.f32.gmra.mxu0 %v508
        %v2124 = vpop.f32.mrf.mxu0
        %v2125 = vadd.f32 0.0, %v2124
        %2126 = vmatmul.f32.gmra.mxu0 %v511
        %v2127 = vpop.f32.mrf.mxu0
        %v2128 = vadd.f32 0.0, %v2127
        %2129 = vmatmul.f32.gmra.mxu0 %v514
        %v2130 = vpop.f32.mrf.mxu0
        %v2131 = vadd.f32 0.0, %v2130
        %2132 = vmatmul.f32.gmra.mxu0 %v517
        %v2133 = vpop.f32.mrf.mxu0
        %v2134 = vadd.f32 0.0, %v2133
        %2135 = vmatmul.f32.gmra.mxu0 %v520
        %v2136 = vpop.f32.mrf.mxu0
        %v2137 = vadd.f32 0.0, %v2136
        %2138 = vmatmul.f32.gmra.mxu0 %v523
        %v2139 = vpop.f32.mrf.mxu0
        %v2140 = vadd.f32 0.0, %v2139
        %2141 = vmatmul.f32.gmra.mxu0 %v526
        %v2142 = vpop.f32.mrf.mxu0
        %v2143 = vadd.f32 0.0, %v2142
        %2144 = vmatmul.f32.gmra.mxu0 %v529
        %v2145 = vpop.f32.mrf.mxu0
        %v2146 = vadd.f32 0.0, %v2145
        %2147 = vmatmul.f32.gmra.mxu0 %v532
        %v2148 = vpop.f32.mrf.mxu0
        %v2149 = vadd.f32 0.0, %v2148
        %2150 = vmatmul.f32.gmra.mxu0 %v535
        %v2151 = vpop.f32.mrf.mxu0
        %v2152 = vadd.f32 0.0, %v2151
        %2153 = vmatmul.f32.gmra.mxu0 %v538
        %v2154 = vpop.f32.mrf.mxu0
        %v2155 = vadd.f32 0.0, %v2154
        %2156 = vmatmul.f32.gmra.mxu0 %v541
        %v2157 = vpop.f32.mrf.mxu0
        %v2158 = vadd.f32 0.0, %v2157
        %2159 = vmatmul.f32.gmra.mxu0 %v544
        %v2160 = vpop.f32.mrf.mxu0
        %v2161 = vadd.f32 0.0, %v2160
        %2162 = vmatmul.f32.gmra.mxu0 %v547
        %v2163 = vpop.f32.mrf.mxu0
        %v2164 = vadd.f32 0.0, %v2163
        %2165 = vmatmul.f32.gmra.mxu0 %v550
        %v2166 = vpop.f32.mrf.mxu0
        %v2167 = vadd.f32 0.0, %v2166
        %2168 = vmatmul.f32.gmra.mxu0 %v553
        %v2169 = vpop.f32.mrf.mxu0
        %v2170 = vadd.f32 0.0, %v2169
        %2171 = vmatmul.f32.gmra.mxu0 %v556
        %v2172 = vpop.f32.mrf.mxu0
        %v2173 = vadd.f32 0.0, %v2172
        %2174 = vmatmul.f32.gmra.mxu0 %v559
        %v2175 = vpop.f32.mrf.mxu0
        %v2176 = vadd.f32 0.0, %v2175
        %2177 = vmatmul.f32.gmra.mxu0 %v562
        %v2178 = vpop.f32.mrf.mxu0
        %v2179 = vadd.f32 0.0, %v2178
        %2180 = vmatmul.f32.gmra.mxu0 %v565
        %v2181 = vpop.f32.mrf.mxu0
        %v2182 = vadd.f32 0.0, %v2181
        %2183 = vmatmul.f32.gmra.mxu0 %v568
        %v2184 = vpop.f32.mrf.mxu0
        %v2185 = vadd.f32 0.0, %v2184
        %2186 = vmatmul.f32.gmra.mxu0 %v571
        %v2187 = vpop.f32.mrf.mxu0
        %v2188 = vadd.f32 0.0, %v2187
        %2189 = vmatmul.f32.gmra.mxu0 %v574
        %v2190 = vpop.f32.mrf.mxu0
        %v2191 = vadd.f32 0.0, %v2190
        %2192 = vmatmul.f32.gmra.mxu0 %v577
        %v2193 = vpop.f32.mrf.mxu0
        %v2194 = vadd.f32 0.0, %v2193
        %2195 = vmatmul.f32.gmra.mxu0 %v580
        %v2196 = vpop.f32.mrf.mxu0
        %v2197 = vadd.f32 0.0, %v2196
        %2198 = vmatmul.f32.gmra.mxu0 %v583
        %v2199 = vpop.f32.mrf.mxu0
        %v2200 = vadd.f32 0.0, %v2199
        %2201 = vmatmul.f32.gmra.mxu0 %v586
        %v2202 = vpop.f32.mrf.mxu0
        %v2203 = vadd.f32 0.0, %v2202
        %2204 = vmatmul.f32.gmra.mxu0 %v589
        %v2205 = vpop.f32.mrf.mxu0
        %v2206 = vadd.f32 0.0, %v2205
        %2207 = vmatmul.f32.gmra.mxu0 %v592
        %v2208 = vpop.f32.mrf.mxu0
        %v2209 = vadd.f32 0.0, %v2208
        %2210 = vmatmul.f32.gmra.mxu0 %v595
        %v2211 = vpop.f32.mrf.mxu0
        %v2212 = vadd.f32 0.0, %v2211
        %2213 = vmatmul.f32.gmra.mxu0 %v598
        %v2214 = vpop.f32.mrf.mxu0
        %v2215 = vadd.f32 0.0, %v2214
        %2216 = vmatmul.f32.gmra.mxu0 %v601
        %v2217 = vpop.f32.mrf.mxu0
        %v2218 = vadd.f32 0.0, %v2217
        %2219 = vmatmul.f32.gmra.mxu0 %v604
        %v2220 = vpop.f32.mrf.mxu0
        %v2221 = vadd.f32 0.0, %v2220
        %2222 = vmatmul.f32.gmra.mxu0 %v607
        %v2223 = vpop.f32.mrf.mxu0
        %v2224 = vadd.f32 0.0, %v2223
        %2225 = vmatmul.f32.gmra.mxu0 %v610
        %v2226 = vpop.f32.mrf.mxu0
        %v2227 = vadd.f32 0.0, %v2226
        %2228 = vmatmul.f32.gmra.mxu0 %v613
        %v2229 = vpop.f32.mrf.mxu0
        %v2230 = vadd.f32 0.0, %v2229
        %2231 = vmatmul.f32.gmra.mxu0 %v616
        %v2232 = vpop.f32.mrf.mxu0
        %v2233 = vadd.f32 0.0, %v2232
        %2234 = vmatmul.f32.gmra.mxu0 %v619
        %v2235 = vpop.f32.mrf.mxu0
        %v2236 = vadd.f32 0.0, %v2235
        %2237 = vmatmul.f32.gmra.mxu0 %v622
        %v2238 = vpop.f32.mrf.mxu0
        %v2239 = vadd.f32 0.0, %v2238
        %2240 = vmatmul.f32.gmra.mxu0 %v625
        %v2241 = vpop.f32.mrf.mxu0
        %v2242 = vadd.f32 0.0, %v2241
        %2243 = vmatmul.f32.gmra.mxu0 %v628
        %v2244 = vpop.f32.mrf.mxu0
        %v2245 = vadd.f32 0.0, %v2244
        %2246 = vmatmul.f32.gmra.mxu0 %v631
        %v2247 = vpop.f32.mrf.mxu0
        %v2248 = vadd.f32 0.0, %v2247
        %2249 = vmatmul.f32.gmra.mxu0 %v634
        %v2250 = vpop.f32.mrf.mxu0
        %v2251 = vadd.f32 0.0, %v2250
        %2252 = vmatmul.f32.gmra.mxu0 %v637
        %v2253 = vpop.f32.mrf.mxu0
        %v2254 = vadd.f32 0.0, %v2253
        %2255 = vmatmul.f32.gmra.mxu0 %v640
        %v2256 = vpop.f32.mrf.mxu0
        %v2257 = vadd.f32 0.0, %v2256
        %2258 = vmatmul.f32.gmra.mxu0 %v643
        %v2259 = vpop.f32.mrf.mxu0
        %v2260 = vadd.f32 0.0, %v2259
        %2261 = vmatmul.f32.gmra.mxu0 %v646
        %v2262 = vpop.f32.mrf.mxu0
        %v2263 = vadd.f32 0.0, %v2262
        %2264 = vmatmul.f32.gmra.mxu0 %v649
        %v2265 = vpop.f32.mrf.mxu0
        %v2266 = vadd.f32 0.0, %v2265
        %2267 = vmatmul.f32.gmra.mxu0 %v652
        %v2268 = vpop.f32.mrf.mxu0
        %v2269 = vadd.f32 0.0, %v2268
        %2270 = vmatmul.f32.gmra.mxu0 %v655
        %v2271 = vpop.f32.mrf.mxu0
        %v2272 = vadd.f32 0.0, %v2271
        %2273 = vmatmul.f32.gmra.mxu0 %v658
        %v2274 = vpop.f32.mrf.mxu0
        %v2275 = vadd.f32 0.0, %v2274
        %2276 = vmatmul.f32.gmra.mxu0 %v661
        %v2277 = vpop.f32.mrf.mxu0
        %v2278 = vadd.f32 0.0, %v2277
        %2279 = vmatmul.f32.gmra.mxu0 %v664
        %v2280 = vpop.f32.mrf.mxu0
        %v2281 = vadd.f32 0.0, %v2280
        %2282 = vmatmul.f32.gmra.mxu0 %v667
        %v2283 = vpop.f32.mrf.mxu0
        %v2284 = vadd.f32 0.0, %v2283
        %2285 = vmatmul.f32.gmra.mxu0 %v670
        %v2286 = vpop.f32.mrf.mxu0
        %v2287 = vadd.f32 0.0, %v2286
        %2288 = vmatmul.f32.gmra.mxu0 %v673
        %v2289 = vpop.f32.mrf.mxu0
        %v2290 = vadd.f32 0.0, %v2289
        %2291 = vmatmul.f32.gmra.mxu0 %v676
        %v2292 = vpop.f32.mrf.mxu0
        %v2293 = vadd.f32 0.0, %v2292
        %2294 = vmatmul.f32.gmra.mxu0 %v679
        %v2295 = vpop.f32.mrf.mxu0
        %v2296 = vadd.f32 0.0, %v2295
        %2297 = vmatmul.f32.gmra.mxu0 %v682
        %v2298 = vpop.f32.mrf.mxu0
        %v2299 = vadd.f32 0.0, %v2298
        %2300 = vmatmul.f32.gmra.mxu0 %v685
        %v2301 = vpop.f32.mrf.mxu0
        %v2302 = vadd.f32 0.0, %v2301
        %2303 = vmatmul.f32.gmra.mxu0 %v688
        %v2304 = vpop.f32.mrf.mxu0
        %v2305 = vadd.f32 0.0, %v2304
        %2306 = vmatmul.f32.gmra.mxu0 %v691
        %v2307 = vpop.f32.mrf.mxu0
        %v2308 = vadd.f32 0.0, %v2307
        %2309 = vmatmul.f32.gmra.mxu0 %v694
        %v2310 = vpop.f32.mrf.mxu0
        %v2311 = vadd.f32 0.0, %v2310
        %2312 = vmatmul.f32.gmra.mxu0 %v697
        %v2313 = vpop.f32.mrf.mxu0
        %v2314 = vadd.f32 0.0, %v2313
        %2315 = vmatmul.f32.gmra.mxu0 %v700
        %v2316 = vpop.f32.mrf.mxu0
        %v2317 = vadd.f32 0.0, %v2316
        %2318 = vmatmul.f32.gmra.mxu0 %v703
        %v2319 = vpop.f32.mrf.mxu0
        %v2320 = vadd.f32 0.0, %v2319
        %2321 = vmatmul.f32.gmra.mxu0 %v706
        %v2322 = vpop.f32.mrf.mxu0
        %v2323 = vadd.f32 0.0, %v2322
        %2324 = vmatmul.f32.gmra.mxu0 %v709
        %v2325 = vpop.f32.mrf.mxu0
        %v2326 = vadd.f32 0.0, %v2325
        %2327 = vmatmul.f32.gmra.mxu0 %v712
        %v2328 = vpop.f32.mrf.mxu0
        %v2329 = vadd.f32 0.0, %v2328
        %2330 = vmatmul.f32.gmra.mxu0 %v715
        %v2331 = vpop.f32.mrf.mxu0
        %v2332 = vadd.f32 0.0, %v2331
        %2333 = vmatmul.f32.gmra.mxu0 %v718
        %v2334 = vpop.f32.mrf.mxu0
        %v2335 = vadd.f32 0.0, %v2334
        %2336 = vmatmul.f32.gmra.mxu0 %v721
        %v2337 = vpop.f32.mrf.mxu0
        %v2338 = vadd.f32 0.0, %v2337
        %2339 = vmatmul.f32.gmra.mxu0 %v724
        %v2340 = vpop.f32.mrf.mxu0
        %v2341 = vadd.f32 0.0, %v2340
        %2342 = vmatmul.f32.gmra.mxu0 %v727
        %v2343 = vpop.f32.mrf.mxu0
        %v2344 = vadd.f32 0.0, %v2343
        %2345 = vmatmul.f32.gmra.mxu0 %v730
        %v2346 = vpop.f32.mrf.mxu0
        %v2347 = vadd.f32 0.0, %v2346
        %2348 = vmatmul.f32.gmra.mxu0 %v733
        %v2349 = vpop.f32.mrf.mxu0
        %v2350 = vadd.f32 0.0, %v2349
        %2351 = vmatmul.f32.gmra.mxu0 %v736
        %v2352 = vpop.f32.mrf.mxu0
        %v2353 = vadd.f32 0.0, %v2352
        %2354 = vmatmul.f32.gmra.mxu0 %v739
        %v2355 = vpop.f32.mrf.mxu0
        %v2356 = vadd.f32 0.0, %v2355
        %2357 = vmatmul.f32.gmra.mxu0 %v742
        %v2358 = vpop.f32.mrf.mxu0
        %v2359 = vadd.f32 0.0, %v2358
        %2360 = vmatmul.f32.gmra.mxu0 %v745
        %v2361 = vpop.f32.mrf.mxu0
        %v2362 = vadd.f32 0.0, %v2361
        %2363 = vmatmul.f32.gmra.mxu0 %v748
        %v2364 = vpop.f32.mrf.mxu0
        %v2365 = vadd.f32 0.0, %v2364
        %2366 = vmatmul.f32.gmra.mxu0 %v751
        %v2367 = vpop.f32.mrf.mxu0
        %v2368 = vadd.f32 0.0, %v2367
        %2369 = vmatmul.f32.gmra.mxu0 %v754
        %v2370 = vpop.f32.mrf.mxu0
        %v2371 = vadd.f32 0.0, %v2370
        %2372 = vmatmul.f32.gmra.mxu0 %v757
        %v2373 = vpop.f32.mrf.mxu0
        %v2374 = vadd.f32 0.0, %v2373
        %2375 = vmatmul.f32.gmra.mxu0 %v760
        %v2376 = vpop.f32.mrf.mxu0
        %v2377 = vadd.f32 0.0, %v2376
        %2378 = vmatmul.f32.gmra.mxu0 %v763
        %v2379 = vpop.f32.mrf.mxu0
        %v2380 = vadd.f32 0.0, %v2379
        %2381 = vmatmul.f32.gmra.mxu0 %v766
        %v2382 = vpop.f32.mrf.mxu0
        %v2383 = vadd.f32 0.0, %v2382
        %2384 = vmatmul.f32.gmra.mxu0 %v769
        %v2385 = vpop.f32.mrf.mxu0
        %v2386 = vadd.f32 0.0, %v2385
        %2387 = vmatmul.f32.gmra.mxu0 %v772
        %v2388 = vpop.f32.mrf.mxu0
        %v2389 = vadd.f32 0.0, %v2388
        %2390 = vmatmul.f32.gmra.mxu0 %v775
        %v2391 = vpop.f32.mrf.mxu0
        %v2392 = vadd.f32 0.0, %v2391
        %2393 = vmatmul.f32.gmra.mxu0 %v778
        %v2394 = vpop.f32.mrf.mxu0
        %v2395 = vadd.f32 0.0, %v2394
        %2396 = vmatmul.f32.gmra.mxu0 %v781
        %v2397 = vpop.f32.mrf.mxu0
        %v2398 = vadd.f32 0.0, %v2397
        %2399 = vmatmul.f32.gmra.mxu0 %v784
        %v2400 = vpop.f32.mrf.mxu0
        %v2401 = vadd.f32 0.0, %v2400
        %2402 = vmatmul.f32.gmra.mxu0 %v787
        %v2403 = vpop.f32.mrf.mxu0
        %v2404 = vadd.f32 0.0, %v2403
        %2405 = vmatmul.f32.gmra.mxu0 %v790
        %v2406 = vpop.f32.mrf.mxu0
        %v2407 = vadd.f32 0.0, %v2406
        %2408 = vmatmul.f32.gmra.mxu0 %v793
        %v2409 = vpop.f32.mrf.mxu0
        %v2410 = vadd.f32 0.0, %v2409
        %2411 = vmatmul.f32.gmra.mxu0 %v796
        %v2412 = vpop.f32.mrf.mxu0
        %v2413 = vadd.f32 0.0, %v2412
        %2414 = vdwg.mxu0
        %v2415 = vmin.f32 %v829, %v832
        %v2416 = vmin.f32 %v2415, %v835
        %v2417 = vmin.f32 %v2416, %v838
        %v2418 = vmin.f32 %v2417, %v841
        %v2419 = vmin.f32 %v2418, %v844
        %v2420 = vmin.f32 %v2419, %v847
        %v2421 = vmin.f32 %v2420, %v850
        %v2422 = vmin.f32 %v2421, %v853
        %v2423 = vmin.f32 %v2422, %v856
        %v2424 = vmin.f32 %v2423, %v859
        %v2425 = vmin.f32 %v2424, %v862
        %v2426 = vmin.f32 %v2425, %v865
        %v2427 = vmin.f32 %v2426, %v868
        %v2428 = vmin.f32 %v2427, %v871
        %v2429 = vmin.f32 %v2428, %v874
        %v2430 = vmin.f32 %v2429, %v877
        %v2431 = vmin.f32 %v2430, %v880
        %v2432 = vmin.f32 %v2431, %v883
        %v2433 = vmin.f32 %v2432, %v886
        %v2434 = vmin.f32 %v2433, %v889
        %v2435 = vmin.f32 %v2434, %v892
        %v2436 = vmin.f32 %v2435, %v895
        %v2437 = vmin.f32 %v2436, %v898
        %v2438 = vmin.f32 %v2437, %v901
        %v2439 = vmin.f32 %v2438, %v904
        %v2440 = vmin.f32 %v2439, %v907
        %v2441 = vmin.f32 %v2440, %v910
        %v2442 = vmin.f32 %v2441, %v913
        %v2443 = vmin.f32 %v2442, %v916
        %v2444 = vmin.f32 %v2443, %v919
        %v2445 = vmin.f32 %v2444, %v922
        %v2446 = vmin.f32 %v2445, %v925
        %v2447 = vmin.f32 %v2446, %v928
        %v2448 = vmin.f32 %v2447, %v931
        %v2449 = vmin.f32 %v2448, %v934
        %v2450 = vmin.f32 %v2449, %v937
        %v2451 = vmin.f32 %v2450, %v940
        %v2452 = vmin.f32 %v2451, %v943
        %v2453 = vmin.f32 %v2452, %v946
        %v2454 = vmin.f32 %v2453, %v949
        %v2455 = vmin.f32 %v2454, %v952
        %v2456 = vmin.f32 %v2455, %v955
        %v2457 = vmin.f32 %v2456, %v958
        %v2458 = vmin.f32 %v2457, %v961
        %v2459 = vmin.f32 %v2458, %v964
        %v2460 = vmin.f32 %v2459, %v967
        %v2461 = vmin.f32 %v2460, %v970
        %v2462 = vmin.f32 %v2461, %v973
        %v2463 = vmin.f32 %v2462, %v976
        %v2464 = vmin.f32 %v2463, %v979
        %v2465 = vmin.f32 %v2464, %v982
        %v2466 = vmin.f32 %v2465, %v985
        %v2467 = vmin.f32 %v2466, %v988
        %v2468 = vmin.f32 %v2467, %v991
        %v2469 = vmin.f32 %v2468, %v994
        %v2470 = vmin.f32 %v2469, %v997
        %v2471 = vmin.f32 %v2470, %v1000
        %v2472 = vmin.f32 %v2471, %v1003
        %v2473 = vmin.f32 %v2472, %v1006
        %v2474 = vmin.f32 %v2473, %v1009
        %v2475 = vmin.f32 %v2474, %v1012
        %v2476 = vmin.f32 %v2475, %v1015
        %v2477 = vmin.f32 %v2476, %v1018
        %v2478 = vmin.f32 %v2477, %v1021
        %v2479 = vmin.f32 %v2478, %v1024
        %v2480 = vmin.f32 %v2479, %v1027
        %v2481 = vmin.f32 %v2480, %v1030
        %v2482 = vmin.f32 %v2481, %v1033
        %v2483 = vmin.f32 %v2482, %v1036
        %v2484 = vmin.f32 %v2483, %v1039
        %v2485 = vmin.f32 %v2484, %v1042
        %v2486 = vmin.f32 %v2485, %v1045
        %v2487 = vmin.f32 %v2486, %v1048
        %v2488 = vmin.f32 %v2487, %v1051
        %v2489 = vmin.f32 %v2488, %v1054
        %v2490 = vmin.f32 %v2489, %v1057
        %v2491 = vmin.f32 %v2490, %v1060
        %v2492 = vmin.f32 %v2491, %v1063
        %v2493 = vmin.f32 %v2492, %v1066
        %v2494 = vmin.f32 %v2493, %v1069
        %v2495 = vmin.f32 %v2494, %v1072
        %v2496 = vmin.f32 %v2495, %v1075
        %v2497 = vmin.f32 %v2496, %v1078
        %v2498 = vmin.f32 %v2497, %v1081
        %v2499 = vmin.f32 %v2498, %v1084
        %v2500 = vmin.f32 %v2499, %v1087
        %v2501 = vmin.f32 %v2500, %v1090
        %v2502 = vmin.f32 %v2501, %v1093
        %v2503 = vmin.f32 %v2502, %v1096
        %v2504 = vmin.f32 %v2503, %v1099
        %v2505 = vmin.f32 %v2504, %v1102
        %v2506 = vmin.f32 %v2505, %v1105
        %v2507 = vmin.f32 %v2506, %v1108
        %v2508 = vmin.f32 %v2507, %v1111
        %v2509 = vmin.f32 %v2508, %v1114
        %v2510 = vmin.f32 %v2509, %v1117
        %v2511 = vmin.f32 %v2510, %v1120
        %v2512 = vmin.f32 %v2511, %v1123
        %v2513 = vmin.f32 %v2512, %v1126
        %v2514 = vmin.f32 %v2513, %v1129
        %v2515 = vmin.f32 %v2514, %v1132
        %v2516 = vmin.f32 %v2515, %v1135
        %v2517 = vmin.f32 %v2516, %v1138
        %v2518 = vmin.f32 %v2517, %v1141
        %v2519 = vmin.f32 %v2518, %v1144
        %v2520 = vmin.f32 %v2519, %v1147
        %v2521 = vmin.f32 %v2520, %v1150
        %v2522 = vmin.f32 %v2521, %v1153
        %v2523 = vmin.f32 %v2522, %v1156
        %v2524 = vmin.f32 %v2523, %v1159
        %v2525 = vmin.f32 %v2524, %v1162
        %v2526 = vmin.f32 %v2525, %v1165
        %v2527 = vmin.f32 %v2526, %v1168
        %v2528 = vmin.f32 %v2527, %v1171
        %v2529 = vmin.f32 %v2528, %v1174
        %v2530 = vmin.f32 %v2529, %v1177
        %v2531 = vmin.f32 %v2530, %v1180
        %v2532 = vmin.f32 %v2531, %v1183
        %v2533 = vmin.f32 %v2532, %v1186
        %v2534 = vmin.f32 %v2533, %v1189
        %v2535 = vmin.f32 %v2534, %v1192
        %v2536 = vmin.f32 %v2535, %v1195
        %v2537 = vmin.f32 %v2536, %v1198
        %v2538 = vmin.f32 %v2537, %v1201
        %v2539 = vmin.f32 %v2538, %v1204
        %v2540 = vmin.f32 %v2539, %v1207
        %v2541 = vmin.f32 %v2540, %v1210
        %v2542 = vrot.slane %v2541, 4
        %v2543 = vmin.f32 %v2541, %v2542
        %v2544 = vrot.slane %v2543, 2
        %v2545 = vmin.f32 %v2543, %v2544
        %v2546 = vrot.slane %v2545, 1
        %v2547 = vmin.f32 %v2545, %v2546
        %v2548 = vmin.f32 %v1230, %v1233
        %v2549 = vmin.f32 %v2548, %v1236
        %v2550 = vmin.f32 %v2549, %v1239
        %v2551 = vmin.f32 %v2550, %v1242
        %v2552 = vmin.f32 %v2551, %v1245
        %v2553 = vmin.f32 %v2552, %v1248
        %v2554 = vmin.f32 %v2553, %v1251
        %v2555 = vmin.f32 %v2554, %v1254
        %v2556 = vmin.f32 %v2555, %v1257
        %v2557 = vmin.f32 %v2556, %v1260
        %v2558 = vmin.f32 %v2557, %v1263
        %v2559 = vmin.f32 %v2558, %v1266
        %v2560 = vmin.f32 %v2559, %v1269
        %v2561 = vmin.f32 %v2560, %v1272
        %v2562 = vmin.f32 %v2561, %v1275
        %v2563 = vmin.f32 %v2562, %v1278
        %v2564 = vmin.f32 %v2563, %v1281
        %v2565 = vmin.f32 %v2564, %v1284
        %v2566 = vmin.f32 %v2565, %v1287
        %v2567 = vmin.f32 %v2566, %v1290
        %v2568 = vmin.f32 %v2567, %v1293
        %v2569 = vmin.f32 %v2568, %v1296
        %v2570 = vmin.f32 %v2569, %v1299
        %v2571 = vmin.f32 %v2570, %v1302
        %v2572 = vmin.f32 %v2571, %v1305
        %v2573 = vmin.f32 %v2572, %v1308
        %v2574 = vmin.f32 %v2573, %v1311
        %v2575 = vmin.f32 %v2574, %v1314
        %v2576 = vmin.f32 %v2575, %v1317
        %v2577 = vmin.f32 %v2576, %v1320
        %v2578 = vmin.f32 %v2577, %v1323
        %v2579 = vmin.f32 %v2578, %v1326
        %v2580 = vmin.f32 %v2579, %v1329
        %v2581 = vmin.f32 %v2580, %v1332
        %v2582 = vmin.f32 %v2581, %v1335
        %v2583 = vmin.f32 %v2582, %v1338
        %v2584 = vmin.f32 %v2583, %v1341
        %v2585 = vmin.f32 %v2584, %v1344
        %v2586 = vmin.f32 %v2585, %v1347
        %v2587 = vmin.f32 %v2586, %v1350
        %v2588 = vmin.f32 %v2587, %v1353
        %v2589 = vmin.f32 %v2588, %v1356
        %v2590 = vmin.f32 %v2589, %v1359
        %v2591 = vmin.f32 %v2590, %v1362
        %v2592 = vmin.f32 %v2591, %v1365
        %v2593 = vmin.f32 %v2592, %v1368
        %v2594 = vmin.f32 %v2593, %v1371
        %v2595 = vmin.f32 %v2594, %v1374
        %v2596 = vmin.f32 %v2595, %v1377
        %v2597 = vmin.f32 %v2596, %v1380
        %v2598 = vmin.f32 %v2597, %v1383
        %v2599 = vmin.f32 %v2598, %v1386
        %v2600 = vmin.f32 %v2599, %v1389
        %v2601 = vmin.f32 %v2600, %v1392
        %v2602 = vmin.f32 %v2601, %v1395
        %v2603 = vmin.f32 %v2602, %v1398
        %v2604 = vmin.f32 %v2603, %v1401
        %v2605 = vmin.f32 %v2604, %v1404
        %v2606 = vmin.f32 %v2605, %v1407
        %v2607 = vmin.f32 %v2606, %v1410
        %v2608 = vmin.f32 %v2607, %v1413
        %v2609 = vmin.f32 %v2608, %v1416
        %v2610 = vmin.f32 %v2609, %v1419
        %v2611 = vmin.f32 %v2610, %v1422
        %v2612 = vmin.f32 %v2611, %v1425
        %v2613 = vmin.f32 %v2612, %v1428
        %v2614 = vmin.f32 %v2613, %v1431
        %v2615 = vmin.f32 %v2614, %v1434
        %v2616 = vmin.f32 %v2615, %v1437
        %v2617 = vmin.f32 %v2616, %v1440
        %v2618 = vmin.f32 %v2617, %v1443
        %v2619 = vmin.f32 %v2618, %v1446
        %v2620 = vmin.f32 %v2619, %v1449
        %v2621 = vmin.f32 %v2620, %v1452
        %v2622 = vmin.f32 %v2621, %v1455
        %v2623 = vmin.f32 %v2622, %v1458
        %v2624 = vmin.f32 %v2623, %v1461
        %v2625 = vmin.f32 %v2624, %v1464
        %v2626 = vmin.f32 %v2625, %v1467
        %v2627 = vmin.f32 %v2626, %v1470
        %v2628 = vmin.f32 %v2627, %v1473
        %v2629 = vmin.f32 %v2628, %v1476
        %v2630 = vmin.f32 %v2629, %v1479
        %v2631 = vmin.f32 %v2630, %v1482
        %v2632 = vmin.f32 %v2631, %v1485
        %v2633 = vmin.f32 %v2632, %v1488
        %v2634 = vmin.f32 %v2633, %v1491
        %v2635 = vmin.f32 %v2634, %v1494
        %v2636 = vmin.f32 %v2635, %v1497
        %v2637 = vmin.f32 %v2636, %v1500
        %v2638 = vmin.f32 %v2637, %v1503
        %v2639 = vmin.f32 %v2638, %v1506
        %v2640 = vmin.f32 %v2639, %v1509
        %v2641 = vmin.f32 %v2640, %v1512
        %v2642 = vmin.f32 %v2641, %v1515
        %v2643 = vmin.f32 %v2642, %v1518
        %v2644 = vmin.f32 %v2643, %v1521
        %v2645 = vmin.f32 %v2644, %v1524
        %v2646 = vmin.f32 %v2645, %v1527
        %v2647 = vmin.f32 %v2646, %v1530
        %v2648 = vmin.f32 %v2647, %v1533
        %v2649 = vmin.f32 %v2648, %v1536
        %v2650 = vmin.f32 %v2649, %v1539
        %v2651 = vmin.f32 %v2650, %v1542
        %v2652 = vmin.f32 %v2651, %v1545
        %v2653 = vmin.f32 %v2652, %v1548
        %v2654 = vmin.f32 %v2653, %v1551
        %v2655 = vmin.f32 %v2654, %v1554
        %v2656 = vmin.f32 %v2655, %v1557
        %v2657 = vmin.f32 %v2656, %v1560
        %v2658 = vmin.f32 %v2657, %v1563
        %v2659 = vmin.f32 %v2658, %v1566
        %v2660 = vmin.f32 %v2659, %v1569
        %v2661 = vmin.f32 %v2660, %v1572
        %v2662 = vmin.f32 %v2661, %v1575
        %v2663 = vmin.f32 %v2662, %v1578
        %v2664 = vmin.f32 %v2663, %v1581
        %v2665 = vmin.f32 %v2664, %v1584
        %v2666 = vmin.f32 %v2665, %v1587
        %v2667 = vmin.f32 %v2666, %v1590
        %v2668 = vmin.f32 %v2667, %v1593
        %v2669 = vmin.f32 %v2668, %v1596
        %v2670 = vmin.f32 %v2669, %v1599
        %v2671 = vmin.f32 %v2670, %v1602
        %v2672 = vmin.f32 %v2671, %v1605
        %v2673 = vmin.f32 %v2672, %v1608
        %v2674 = vmin.f32 %v2673, %v1611
        %v2675 = vrot.slane %v2674, 4
        %v2676 = vmin.f32 %v2674, %v2675
        %v2677 = vrot.slane %v2676, 2
        %v2678 = vmin.f32 %v2676, %v2677
        %v2679 = vrot.slane %v2678, 1
        %v2680 = vmin.f32 %v2678, %v2679
        %v2681 = vmin.f32 %v1631, %v1634
        %v2682 = vmin.f32 %v2681, %v1637
        %v2683 = vmin.f32 %v2682, %v1640
        %v2684 = vmin.f32 %v2683, %v1643
        %v2685 = vmin.f32 %v2684, %v1646
        %v2686 = vmin.f32 %v2685, %v1649
        %v2687 = vmin.f32 %v2686, %v1652
        %v2688 = vmin.f32 %v2687, %v1655
        %v2689 = vmin.f32 %v2688, %v1658
        %v2690 = vmin.f32 %v2689, %v1661
        %v2691 = vmin.f32 %v2690, %v1664
        %v2692 = vmin.f32 %v2691, %v1667
        %v2693 = vmin.f32 %v2692, %v1670
        %v2694 = vmin.f32 %v2693, %v1673
        %v2695 = vmin.f32 %v2694, %v1676
        %v2696 = vmin.f32 %v2695, %v1679
        %v2697 = vmin.f32 %v2696, %v1682
        %v2698 = vmin.f32 %v2697, %v1685
        %v2699 = vmin.f32 %v2698, %v1688
        %v2700 = vmin.f32 %v2699, %v1691
        %v2701 = vmin.f32 %v2700, %v1694
        %v2702 = vmin.f32 %v2701, %v1697
        %v2703 = vmin.f32 %v2702, %v1700
        %v2704 = vmin.f32 %v2703, %v1703
        %v2705 = vmin.f32 %v2704, %v1706
        %v2706 = vmin.f32 %v2705, %v1709
        %v2707 = vmin.f32 %v2706, %v1712
        %v2708 = vmin.f32 %v2707, %v1715
        %v2709 = vmin.f32 %v2708, %v1718
        %v2710 = vmin.f32 %v2709, %v1721
        %v2711 = vmin.f32 %v2710, %v1724
        %v2712 = vmin.f32 %v2711, %v1727
        %v2713 = vmin.f32 %v2712, %v1730
        %v2714 = vmin.f32 %v2713, %v1733
        %v2715 = vmin.f32 %v2714, %v1736
        %v2716 = vmin.f32 %v2715, %v1739
        %v2717 = vmin.f32 %v2716, %v1742
        %v2718 = vmin.f32 %v2717, %v1745
        %v2719 = vmin.f32 %v2718, %v1748
        %v2720 = vmin.f32 %v2719, %v1751
        %v2721 = vmin.f32 %v2720, %v1754
        %v2722 = vmin.f32 %v2721, %v1757
        %v2723 = vmin.f32 %v2722, %v1760
        %v2724 = vmin.f32 %v2723, %v1763
        %v2725 = vmin.f32 %v2724, %v1766
        %v2726 = vmin.f32 %v2725, %v1769
        %v2727 = vmin.f32 %v2726, %v1772
        %v2728 = vmin.f32 %v2727, %v1775
        %v2729 = vmin.f32 %v2728, %v1778
        %v2730 = vmin.f32 %v2729, %v1781
        %v2731 = vmin.f32 %v2730, %v1784
        %v2732 = vmin.f32 %v2731, %v1787
        %v2733 = vmin.f32 %v2732, %v1790
        %v2734 = vmin.f32 %v2733, %v1793
        %v2735 = vmin.f32 %v2734, %v1796
        %v2736 = vmin.f32 %v2735, %v1799
        %v2737 = vmin.f32 %v2736, %v1802
        %v2738 = vmin.f32 %v2737, %v1805
        %v2739 = vmin.f32 %v2738, %v1808
        %v2740 = vmin.f32 %v2739, %v1811
        %v2741 = vmin.f32 %v2740, %v1814
        %v2742 = vmin.f32 %v2741, %v1817
        %v2743 = vmin.f32 %v2742, %v1820
        %v2744 = vmin.f32 %v2743, %v1823
        %v2745 = vmin.f32 %v2744, %v1826
        %v2746 = vmin.f32 %v2745, %v1829
        %v2747 = vmin.f32 %v2746, %v1832
        %v2748 = vmin.f32 %v2747, %v1835
        %v2749 = vmin.f32 %v2748, %v1838
        %v2750 = vmin.f32 %v2749, %v1841
        %v2751 = vmin.f32 %v2750, %v1844
        %v2752 = vmin.f32 %v2751, %v1847
        %v2753 = vmin.f32 %v2752, %v1850
        %v2754 = vmin.f32 %v2753, %v1853
        %v2755 = vmin.f32 %v2754, %v1856
        %v2756 = vmin.f32 %v2755, %v1859
        %v2757 = vmin.f32 %v2756, %v1862
        %v2758 = vmin.f32 %v2757, %v1865
        %v2759 = vmin.f32 %v2758, %v1868
        %v2760 = vmin.f32 %v2759, %v1871
        %v2761 = vmin.f32 %v2760, %v1874
        %v2762 = vmin.f32 %v2761, %v1877
        %v2763 = vmin.f32 %v2762, %v1880
        %v2764 = vmin.f32 %v2763, %v1883
        %v2765 = vmin.f32 %v2764, %v1886
        %v2766 = vmin.f32 %v2765, %v1889
        %v2767 = vmin.f32 %v2766, %v1892
        %v2768 = vmin.f32 %v2767, %v1895
        %v2769 = vmin.f32 %v2768, %v1898
        %v2770 = vmin.f32 %v2769, %v1901
        %v2771 = vmin.f32 %v2770, %v1904
        %v2772 = vmin.f32 %v2771, %v1907
        %v2773 = vmin.f32 %v2772, %v1910
        %v2774 = vmin.f32 %v2773, %v1913
        %v2775 = vmin.f32 %v2774, %v1916
        %v2776 = vmin.f32 %v2775, %v1919
        %v2777 = vmin.f32 %v2776, %v1922
        %v2778 = vmin.f32 %v2777, %v1925
        %v2779 = vmin.f32 %v2778, %v1928
        %v2780 = vmin.f32 %v2779, %v1931
        %v2781 = vmin.f32 %v2780, %v1934
        %v2782 = vmin.f32 %v2781, %v1937
        %v2783 = vmin.f32 %v2782, %v1940
        %v2784 = vmin.f32 %v2783, %v1943
        %v2785 = vmin.f32 %v2784, %v1946
        %v2786 = vmin.f32 %v2785, %v1949
        %v2787 = vmin.f32 %v2786, %v1952
        %v2788 = vmin.f32 %v2787, %v1955
        %v2789 = vmin.f32 %v2788, %v1958
        %v2790 = vmin.f32 %v2789, %v1961
        %v2791 = vmin.f32 %v2790, %v1964
        %v2792 = vmin.f32 %v2791, %v1967
        %v2793 = vmin.f32 %v2792, %v1970
        %v2794 = vmin.f32 %v2793, %v1973
        %v2795 = vmin.f32 %v2794, %v1976
        %v2796 = vmin.f32 %v2795, %v1979
        %v2797 = vmin.f32 %v2796, %v1982
        %v2798 = vmin.f32 %v2797, %v1985
        %v2799 = vmin.f32 %v2798, %v1988
        %v2800 = vmin.f32 %v2799, %v1991
        %v2801 = vmin.f32 %v2800, %v1994
        %v2802 = vmin.f32 %v2801, %v1997
        %v2803 = vmin.f32 %v2802, %v2000
        %v2804 = vmin.f32 %v2803, %v2003
        %v2805 = vmin.f32 %v2804, %v2006
        %v2806 = vmin.f32 %v2805, %v2009
        %v2807 = vmin.f32 %v2806, %v2012
        %v2808 = vrot.slane %v2807, 4
        %v2809 = vmin.f32 %v2807, %v2808
        %v2810 = vrot.slane %v2809, 2
        %v2811 = vmin.f32 %v2809, %v2810
        %v2812 = vrot.slane %v2811, 1
        %v2813 = vmin.f32 %v2811, %v2812
        %v2814 = vmin.f32 %v2032, %v2035
        %v2815 = vmin.f32 %v2814, %v2038
        %v2816 = vmin.f32 %v2815, %v2041
        %v2817 = vmin.f32 %v2816, %v2044
        %v2818 = vmin.f32 %v2817, %v2047
        %v2819 = vmin.f32 %v2818, %v2050
        %v2820 = vmin.f32 %v2819, %v2053
        %v2821 = vmin.f32 %v2820, %v2056
        %v2822 = vmin.f32 %v2821, %v2059
        %v2823 = vmin.f32 %v2822, %v2062
        %v2824 = vmin.f32 %v2823, %v2065
        %v2825 = vmin.f32 %v2824, %v2068
        %v2826 = vmin.f32 %v2825, %v2071
        %v2827 = vmin.f32 %v2826, %v2074
        %v2828 = vmin.f32 %v2827, %v2077
        %v2829 = vmin.f32 %v2828, %v2080
        %v2830 = vmin.f32 %v2829, %v2083
        %v2831 = vmin.f32 %v2830, %v2086
        %v2832 = vmin.f32 %v2831, %v2089
        %v2833 = vmin.f32 %v2832, %v2092
        %v2834 = vmin.f32 %v2833, %v2095
        %v2835 = vmin.f32 %v2834, %v2098
        %v2836 = vmin.f32 %v2835, %v2101
        %v2837 = vmin.f32 %v2836, %v2104
        %v2838 = vmin.f32 %v2837, %v2107
        %v2839 = vmin.f32 %v2838, %v2110
        %v2840 = vmin.f32 %v2839, %v2113
        %v2841 = vmin.f32 %v2840, %v2116
        %v2842 = vmin.f32 %v2841, %v2119
        %v2843 = vmin.f32 %v2842, %v2122
        %v2844 = vmin.f32 %v2843, %v2125
        %v2845 = vmin.f32 %v2844, %v2128
        %v2846 = vmin.f32 %v2845, %v2131
        %v2847 = vmin.f32 %v2846, %v2134
        %v2848 = vmin.f32 %v2847, %v2137
        %v2849 = vmin.f32 %v2848, %v2140
        %v2850 = vmin.f32 %v2849, %v2143
        %v2851 = vmin.f32 %v2850, %v2146
        %v2852 = vmin.f32 %v2851, %v2149
        %v2853 = vmin.f32 %v2852, %v2152
        %v2854 = vmin.f32 %v2853, %v2155
        %v2855 = vmin.f32 %v2854, %v2158
        %v2856 = vmin.f32 %v2855, %v2161
        %v2857 = vmin.f32 %v2856, %v2164
        %v2858 = vmin.f32 %v2857, %v2167
        %v2859 = vmin.f32 %v2858, %v2170
        %v2860 = vmin.f32 %v2859, %v2173
        %v2861 = vmin.f32 %v2860, %v2176
        %v2862 = vmin.f32 %v2861, %v2179
        %v2863 = vmin.f32 %v2862, %v2182
        %v2864 = vmin.f32 %v2863, %v2185
        %v2865 = vmin.f32 %v2864, %v2188
        %v2866 = vmin.f32 %v2865, %v2191
        %v2867 = vmin.f32 %v2866, %v2194
        %v2868 = vmin.f32 %v2867, %v2197
        %v2869 = vmin.f32 %v2868, %v2200
        %v2870 = vmin.f32 %v2869, %v2203
        %v2871 = vmin.f32 %v2870, %v2206
        %v2872 = vmin.f32 %v2871, %v2209
        %v2873 = vmin.f32 %v2872, %v2212
        %v2874 = vmin.f32 %v2873, %v2215
        %v2875 = vmin.f32 %v2874, %v2218
        %v2876 = vmin.f32 %v2875, %v2221
        %v2877 = vmin.f32 %v2876, %v2224
        %v2878 = vmin.f32 %v2877, %v2227
        %v2879 = vmin.f32 %v2878, %v2230
        %v2880 = vmin.f32 %v2879, %v2233
        %v2881 = vmin.f32 %v2880, %v2236
        %v2882 = vmin.f32 %v2881, %v2239
        %v2883 = vmin.f32 %v2882, %v2242
        %v2884 = vmin.f32 %v2883, %v2245
        %v2885 = vmin.f32 %v2884, %v2248
        %v2886 = vmin.f32 %v2885, %v2251
        %v2887 = vmin.f32 %v2886, %v2254
        %v2888 = vmin.f32 %v2887, %v2257
        %v2889 = vmin.f32 %v2888, %v2260
        %v2890 = vmin.f32 %v2889, %v2263
        %v2891 = vmin.f32 %v2890, %v2266
        %v2892 = vmin.f32 %v2891, %v2269
        %v2893 = vmin.f32 %v2892, %v2272
        %v2894 = vmin.f32 %v2893, %v2275
        %v2895 = vmin.f32 %v2894, %v2278
        %v2896 = vmin.f32 %v2895, %v2281
        %v2897 = vmin.f32 %v2896, %v2284
        %v2898 = vmin.f32 %v2897, %v2287
        %v2899 = vmin.f32 %v2898, %v2290
        %v2900 = vmin.f32 %v2899, %v2293
        %v2901 = vmin.f32 %v2900, %v2296
        %v2902 = vmin.f32 %v2901, %v2299
        %v2903 = vmin.f32 %v2902, %v2302
        %v2904 = vmin.f32 %v2903, %v2305
        %v2905 = vmin.f32 %v2904, %v2308
        %v2906 = vmin.f32 %v2905, %v2311
        %v2907 = vmin.f32 %v2906, %v2314
        %v2908 = vmin.f32 %v2907, %v2317
        %v2909 = vmin.f32 %v2908, %v2320
        %v2910 = vmin.f32 %v2909, %v2323
        %v2911 = vmin.f32 %v2910, %v2326
        %v2912 = vmin.f32 %v2911, %v2329
        %v2913 = vmin.f32 %v2912, %v2332
        %v2914 = vmin.f32 %v2913, %v2335
        %v2915 = vmin.f32 %v2914, %v2338
        %v2916 = vmin.f32 %v2915, %v2341
        %v2917 = vmin.f32 %v2916, %v2344
        %v2918 = vmin.f32 %v2917, %v2347
        %v2919 = vmin.f32 %v2918, %v2350
        %v2920 = vmin.f32 %v2919, %v2353
        %v2921 = vmin.f32 %v2920, %v2356
        %v2922 = vmin.f32 %v2921, %v2359
        %v2923 = vmin.f32 %v2922, %v2362
        %v2924 = vmin.f32 %v2923, %v2365
        %v2925 = vmin.f32 %v2924, %v2368
        %v2926 = vmin.f32 %v2925, %v2371
        %v2927 = vmin.f32 %v2926, %v2374
        %v2928 = vmin.f32 %v2927, %v2377
        %v2929 = vmin.f32 %v2928, %v2380
        %v2930 = vmin.f32 %v2929, %v2383
        %v2931 = vmin.f32 %v2930, %v2386
        %v2932 = vmin.f32 %v2931, %v2389
        %v2933 = vmin.f32 %v2932, %v2392
        %v2934 = vmin.f32 %v2933, %v2395
        %v2935 = vmin.f32 %v2934, %v2398
        %v2936 = vmin.f32 %v2935, %v2401
        %v2937 = vmin.f32 %v2936, %v2404
        %v2938 = vmin.f32 %v2937, %v2407
        %v2939 = vmin.f32 %v2938, %v2410
        %v2940 = vmin.f32 %v2939, %v2413
        %v2941 = vrot.slane %v2940, 4
        %v2942 = vmin.f32 %v2940, %v2941
        %v2943 = vrot.slane %v2942, 2
        %v2944 = vmin.f32 %v2942, %v2943
        %v2945 = vrot.slane %v2944, 1
        %v2946 = vmin.f32 %v2944, %v2945
        %v2951 = vrot.slane %v2680, 7
        %v2952 = vrot.slane %v2813, 6
        %v2953 = vrot.slane %v2946, 5
        %vm2954 = vcmask 1040384
        %v2955 = vsel %vm2954, %v2547, %v2951
        %vm2956 = vcmask 1042434
        %v2957 = vsel %vm2956, %v2952, %v2953
        %vm2958 = vcmask 1041408
        %v2959 = vsel %vm2958, %v2955, %v2957
        %v2961 = vmin.f32 %v284, %v2959
        %s2962 = scalar_lea.vmem %s268, 1024
        %v2963 = vld [vmem:[%s2962] sm:$0xff]
        %v2964 = vld [vmem:[%s2962 + $0x8] sm:$0xff]
        %v2965 = vld [vmem:[%s2962 + $0x10] sm:$0xff]
        %v2966 = vld [vmem:[%s2962 + $0x18] sm:$0xff]
        %v2967 = vld [vmem:[%s2962 + $0x20] sm:$0xff]
        %v2968 = vld [vmem:[%s2962 + $0x28] sm:$0xff]
        %v2969 = vld [vmem:[%s2962 + $0x30] sm:$0xff]
        %v2970 = vld [vmem:[%s2962 + $0x38] sm:$0xff]
        %v2971 = vld [vmem:[%s2962 + $0x40] sm:$0xff]
        %v2972 = vld [vmem:[%s2962 + $0x48] sm:$0xff]
        %v2973 = vld [vmem:[%s2962 + $0x50] sm:$0xff]
        %v2974 = vld [vmem:[%s2962 + $0x58] sm:$0xff]
        %v2975 = vld [vmem:[%s2962 + $0x60] sm:$0xff]
        %v2976 = vld [vmem:[%s2962 + $0x68] sm:$0xff]
        %v2977 = vld [vmem:[%s2962 + $0x70] sm:$0xff]
        %v2978 = vld [vmem:[%s2962 + $0x78] sm:$0xff]
        %v2979 = vld [vmem:[%s2962 + $0x80] sm:$0xff]
        %v2980 = vld [vmem:[%s2962 + $0x88] sm:$0xff]
        %v2981 = vld [vmem:[%s2962 + $0x90] sm:$0xff]
        %v2982 = vld [vmem:[%s2962 + $0x98] sm:$0xff]
        %v2983 = vld [vmem:[%s2962 + $0xa0] sm:$0xff]
        %v2984 = vld [vmem:[%s2962 + $0xa8] sm:$0xff]
        %v2985 = vld [vmem:[%s2962 + $0xb0] sm:$0xff]
        %v2986 = vld [vmem:[%s2962 + $0xb8] sm:$0xff]
        %v2987 = vld [vmem:[%s2962 + $0xc0] sm:$0xff]
        %v2988 = vld [vmem:[%s2962 + $0xc8] sm:$0xff]
        %v2989 = vld [vmem:[%s2962 + $0xd0] sm:$0xff]
        %v2990 = vld [vmem:[%s2962 + $0xd8] sm:$0xff]
        %v2991 = vld [vmem:[%s2962 + $0xe0] sm:$0xff]
        %v2992 = vld [vmem:[%s2962 + $0xe8] sm:$0xff]
        %v2993 = vld [vmem:[%s2962 + $0xf0] sm:$0xff]
        %v2994 = vld [vmem:[%s2962 + $0xf8] sm:$0xff]
        %v2995 = vld [vmem:[%s2962 + $0x100] sm:$0xff]
        %v2996 = vld [vmem:[%s2962 + $0x108] sm:$0xff]
        %v2997 = vld [vmem:[%s2962 + $0x110] sm:$0xff]
        %v2998 = vld [vmem:[%s2962 + $0x118] sm:$0xff]
        %v2999 = vld [vmem:[%s2962 + $0x120] sm:$0xff]
        %v3000 = vld [vmem:[%s2962 + $0x128] sm:$0xff]
        %v3001 = vld [vmem:[%s2962 + $0x130] sm:$0xff]
        %v3002 = vld [vmem:[%s2962 + $0x138] sm:$0xff]
        %v3003 = vld [vmem:[%s2962 + $0x140] sm:$0xff]
        %v3004 = vld [vmem:[%s2962 + $0x148] sm:$0xff]
        %v3005 = vld [vmem:[%s2962 + $0x150] sm:$0xff]
        %v3006 = vld [vmem:[%s2962 + $0x158] sm:$0xff]
        %v3007 = vld [vmem:[%s2962 + $0x160] sm:$0xff]
        %v3008 = vld [vmem:[%s2962 + $0x168] sm:$0xff]
        %v3009 = vld [vmem:[%s2962 + $0x170] sm:$0xff]
        %v3010 = vld [vmem:[%s2962 + $0x178] sm:$0xff]
        %v3011 = vld [vmem:[%s2962 + $0x180] sm:$0xff]
        %v3012 = vld [vmem:[%s2962 + $0x188] sm:$0xff]
        %v3013 = vld [vmem:[%s2962 + $0x190] sm:$0xff]
        %v3014 = vld [vmem:[%s2962 + $0x198] sm:$0xff]
        %v3015 = vld [vmem:[%s2962 + $0x1a0] sm:$0xff]
        %v3016 = vld [vmem:[%s2962 + $0x1a8] sm:$0xff]
        %v3017 = vld [vmem:[%s2962 + $0x1b0] sm:$0xff]
        %v3018 = vld [vmem:[%s2962 + $0x1b8] sm:$0xff]
        %v3019 = vld [vmem:[%s2962 + $0x1c0] sm:$0xff]
        %v3020 = vld [vmem:[%s2962 + $0x1c8] sm:$0xff]
        %v3021 = vld [vmem:[%s2962 + $0x1d0] sm:$0xff]
        %v3022 = vld [vmem:[%s2962 + $0x1d8] sm:$0xff]
        %v3023 = vld [vmem:[%s2962 + $0x1e0] sm:$0xff]
        %v3024 = vld [vmem:[%s2962 + $0x1e8] sm:$0xff]
        %v3025 = vld [vmem:[%s2962 + $0x1f0] sm:$0xff]
        %v3026 = vld [vmem:[%s2962 + $0x1f8] sm:$0xff]
        %v3027 = vld [vmem:[%s2962 + $0x200] sm:$0xff]
        %v3028 = vld [vmem:[%s2962 + $0x208] sm:$0xff]
        %v3029 = vld [vmem:[%s2962 + $0x210] sm:$0xff]
        %v3030 = vld [vmem:[%s2962 + $0x218] sm:$0xff]
        %v3031 = vld [vmem:[%s2962 + $0x220] sm:$0xff]
        %v3032 = vld [vmem:[%s2962 + $0x228] sm:$0xff]
        %v3033 = vld [vmem:[%s2962 + $0x230] sm:$0xff]
        %v3034 = vld [vmem:[%s2962 + $0x238] sm:$0xff]
        %v3035 = vld [vmem:[%s2962 + $0x240] sm:$0xff]
        %v3036 = vld [vmem:[%s2962 + $0x248] sm:$0xff]
        %v3037 = vld [vmem:[%s2962 + $0x250] sm:$0xff]
        %v3038 = vld [vmem:[%s2962 + $0x258] sm:$0xff]
        %v3039 = vld [vmem:[%s2962 + $0x260] sm:$0xff]
        %v3040 = vld [vmem:[%s2962 + $0x268] sm:$0xff]
        %v3041 = vld [vmem:[%s2962 + $0x270] sm:$0xff]
        %v3042 = vld [vmem:[%s2962 + $0x278] sm:$0xff]
        %v3043 = vld [vmem:[%s2962 + $0x280] sm:$0xff]
        %v3044 = vld [vmem:[%s2962 + $0x288] sm:$0xff]
        %v3045 = vld [vmem:[%s2962 + $0x290] sm:$0xff]
        %v3046 = vld [vmem:[%s2962 + $0x298] sm:$0xff]
        %v3047 = vld [vmem:[%s2962 + $0x2a0] sm:$0xff]
        %v3048 = vld [vmem:[%s2962 + $0x2a8] sm:$0xff]
        %v3049 = vld [vmem:[%s2962 + $0x2b0] sm:$0xff]
        %v3050 = vld [vmem:[%s2962 + $0x2b8] sm:$0xff]
        %v3051 = vld [vmem:[%s2962 + $0x2c0] sm:$0xff]
        %v3052 = vld [vmem:[%s2962 + $0x2c8] sm:$0xff]
        %v3053 = vld [vmem:[%s2962 + $0x2d0] sm:$0xff]
        %v3054 = vld [vmem:[%s2962 + $0x2d8] sm:$0xff]
        %v3055 = vld [vmem:[%s2962 + $0x2e0] sm:$0xff]
        %v3056 = vld [vmem:[%s2962 + $0x2e8] sm:$0xff]
        %v3057 = vld [vmem:[%s2962 + $0x2f0] sm:$0xff]
        %v3058 = vld [vmem:[%s2962 + $0x2f8] sm:$0xff]
        %v3059 = vld [vmem:[%s2962 + $0x300] sm:$0xff]
        %v3060 = vld [vmem:[%s2962 + $0x308] sm:$0xff]
        %v3061 = vld [vmem:[%s2962 + $0x310] sm:$0xff]
        %v3062 = vld [vmem:[%s2962 + $0x318] sm:$0xff]
        %v3063 = vld [vmem:[%s2962 + $0x320] sm:$0xff]
        %v3064 = vld [vmem:[%s2962 + $0x328] sm:$0xff]
        %v3065 = vld [vmem:[%s2962 + $0x330] sm:$0xff]
        %v3066 = vld [vmem:[%s2962 + $0x338] sm:$0xff]
        %v3067 = vld [vmem:[%s2962 + $0x340] sm:$0xff]
        %v3068 = vld [vmem:[%s2962 + $0x348] sm:$0xff]
        %v3069 = vld [vmem:[%s2962 + $0x350] sm:$0xff]
        %v3070 = vld [vmem:[%s2962 + $0x358] sm:$0xff]
        %v3071 = vld [vmem:[%s2962 + $0x360] sm:$0xff]
        %v3072 = vld [vmem:[%s2962 + $0x368] sm:$0xff]
        %v3073 = vld [vmem:[%s2962 + $0x370] sm:$0xff]
        %v3074 = vld [vmem:[%s2962 + $0x378] sm:$0xff]
        %v3075 = vld [vmem:[%s2962 + $0x380] sm:$0xff]
        %v3076 = vld [vmem:[%s2962 + $0x388] sm:$0xff]
        %v3077 = vld [vmem:[%s2962 + $0x390] sm:$0xff]
        %v3078 = vld [vmem:[%s2962 + $0x398] sm:$0xff]
        %v3079 = vld [vmem:[%s2962 + $0x3a0] sm:$0xff]
        %v3080 = vld [vmem:[%s2962 + $0x3a8] sm:$0xff]
        %v3081 = vld [vmem:[%s2962 + $0x3b0] sm:$0xff]
        %v3082 = vld [vmem:[%s2962 + $0x3b8] sm:$0xff]
        %v3083 = vld [vmem:[%s2962 + $0x3c0] sm:$0xff]
        %v3084 = vld [vmem:[%s2962 + $0x3c8] sm:$0xff]
        %v3085 = vld [vmem:[%s2962 + $0x3d0] sm:$0xff]
        %v3086 = vld [vmem:[%s2962 + $0x3d8] sm:$0xff]
        %v3087 = vld [vmem:[%s2962 + $0x3e0] sm:$0xff]
        %v3088 = vld [vmem:[%s2962 + $0x3e8] sm:$0xff]
        %v3089 = vld [vmem:[%s2962 + $0x3f0] sm:$0xff]
        %v3090 = vld [vmem:[%s2962 + $0x3f8] sm:$0xff]
        %v3092 = vsel %vm413, %v2963, 0
        %v3095 = vsel %vm413, %v2964, 0
        %v3098 = vsel %vm413, %v2965, 0
        %v3101 = vsel %vm413, %v2966, 0
        %v3104 = vsel %vm413, %v2967, 0
        %v3107 = vsel %vm413, %v2968, 0
        %v3110 = vsel %vm413, %v2969, 0
        %v3113 = vsel %vm413, %v2970, 0
        %v3116 = vsel %vm413, %v2971, 0
        %v3119 = vsel %vm413, %v2972, 0
        %v3122 = vsel %vm413, %v2973, 0
        %v3125 = vsel %vm413, %v2974, 0
        %v3128 = vsel %vm413, %v2975, 0
        %v3131 = vsel %vm413, %v2976, 0
        %v3134 = vsel %vm413, %v2977, 0
        %v3137 = vsel %vm413, %v2978, 0
        %v3140 = vsel %vm413, %v2979, 0
        %v3143 = vsel %vm413, %v2980, 0
        %v3146 = vsel %vm413, %v2981, 0
        %v3149 = vsel %vm413, %v2982, 0
        %v3152 = vsel %vm413, %v2983, 0
        %v3155 = vsel %vm413, %v2984, 0
        %v3158 = vsel %vm413, %v2985, 0
        %v3161 = vsel %vm413, %v2986, 0
        %v3164 = vsel %vm413, %v2987, 0
        %v3167 = vsel %vm413, %v2988, 0
        %v3170 = vsel %vm413, %v2989, 0
        %v3173 = vsel %vm413, %v2990, 0
        %v3176 = vsel %vm413, %v2991, 0
        %v3179 = vsel %vm413, %v2992, 0
        %v3182 = vsel %vm413, %v2993, 0
        %v3185 = vsel %vm413, %v2994, 0
        %v3188 = vsel %vm413, %v2995, 0
        %v3191 = vsel %vm413, %v2996, 0
        %v3194 = vsel %vm413, %v2997, 0
        %v3197 = vsel %vm413, %v2998, 0
        %v3200 = vsel %vm413, %v2999, 0
        %v3203 = vsel %vm413, %v3000, 0
        %v3206 = vsel %vm413, %v3001, 0
        %v3209 = vsel %vm413, %v3002, 0
        %v3212 = vsel %vm413, %v3003, 0
        %v3215 = vsel %vm413, %v3004, 0
        %v3218 = vsel %vm413, %v3005, 0
        %v3221 = vsel %vm413, %v3006, 0
        %v3224 = vsel %vm413, %v3007, 0
        %v3227 = vsel %vm413, %v3008, 0
        %v3230 = vsel %vm413, %v3009, 0
        %v3233 = vsel %vm413, %v3010, 0
        %v3236 = vsel %vm413, %v3011, 0
        %v3239 = vsel %vm413, %v3012, 0
        %v3242 = vsel %vm413, %v3013, 0
        %v3245 = vsel %vm413, %v3014, 0
        %v3248 = vsel %vm413, %v3015, 0
        %v3251 = vsel %vm413, %v3016, 0
        %v3254 = vsel %vm413, %v3017, 0
        %v3257 = vsel %vm413, %v3018, 0
        %v3260 = vsel %vm413, %v3019, 0
        %v3263 = vsel %vm413, %v3020, 0
        %v3266 = vsel %vm413, %v3021, 0
        %v3269 = vsel %vm413, %v3022, 0
        %v3272 = vsel %vm413, %v3023, 0
        %v3275 = vsel %vm413, %v3024, 0
        %v3278 = vsel %vm413, %v3025, 0
        %v3281 = vsel %vm413, %v3026, 0
        %v3284 = vsel %vm413, %v3027, 0
        %v3287 = vsel %vm413, %v3028, 0
        %v3290 = vsel %vm413, %v3029, 0
        %v3293 = vsel %vm413, %v3030, 0
        %v3296 = vsel %vm413, %v3031, 0
        %v3299 = vsel %vm413, %v3032, 0
        %v3302 = vsel %vm413, %v3033, 0
        %v3305 = vsel %vm413, %v3034, 0
        %v3308 = vsel %vm413, %v3035, 0
        %v3311 = vsel %vm413, %v3036, 0
        %v3314 = vsel %vm413, %v3037, 0
        %v3317 = vsel %vm413, %v3038, 0
        %v3320 = vsel %vm413, %v3039, 0
        %v3323 = vsel %vm413, %v3040, 0
        %v3326 = vsel %vm413, %v3041, 0
        %v3329 = vsel %vm413, %v3042, 0
        %v3332 = vsel %vm413, %v3043, 0
        %v3335 = vsel %vm413, %v3044, 0
        %v3338 = vsel %vm413, %v3045, 0
        %v3341 = vsel %vm413, %v3046, 0
        %v3344 = vsel %vm413, %v3047, 0
        %v3347 = vsel %vm413, %v3048, 0
        %v3350 = vsel %vm413, %v3049, 0
        %v3353 = vsel %vm413, %v3050, 0
        %v3356 = vsel %vm413, %v3051, 0
        %v3359 = vsel %vm413, %v3052, 0
        %v3362 = vsel %vm413, %v3053, 0
        %v3365 = vsel %vm413, %v3054, 0
        %v3368 = vsel %vm413, %v3055, 0
        %v3371 = vsel %vm413, %v3056, 0
        %v3374 = vsel %vm413, %v3057, 0
        %v3377 = vsel %vm413, %v3058, 0
        %v3380 = vsel %vm413, %v3059, 0
        %v3383 = vsel %vm413, %v3060, 0
        %v3386 = vsel %vm413, %v3061, 0
        %v3389 = vsel %vm413, %v3062, 0
        %v3392 = vsel %vm413, %v3063, 0
        %v3395 = vsel %vm413, %v3064, 0
        %v3398 = vsel %vm413, %v3065, 0
        %v3401 = vsel %vm413, %v3066, 0
        %v3404 = vsel %vm413, %v3067, 0
        %v3407 = vsel %vm413, %v3068, 0
        %v3410 = vsel %vm413, %v3069, 0
        %v3413 = vsel %vm413, %v3070, 0
        %v3416 = vsel %vm413, %v3071, 0
        %v3419 = vsel %vm413, %v3072, 0
        %v3422 = vsel %vm413, %v3073, 0
        %v3425 = vsel %vm413, %v3074, 0
        %v3428 = vsel %vm413, %v3075, 0
        %v3431 = vsel %vm413, %v3076, 0
        %v3434 = vsel %vm413, %v3077, 0
        %v3437 = vsel %vm413, %v3078, 0
        %v3440 = vsel %vm413, %v3079, 0
        %v3443 = vsel %vm413, %v3080, 0
        %v3446 = vsel %vm413, %v3081, 0
        %v3449 = vsel %vm413, %v3082, 0
        %v3452 = vsel %vm413, %v3083, 0
        %v3455 = vsel %vm413, %v3084, 0
        %v3458 = vsel %vm413, %v3085, 0
        %v3461 = vsel %vm413, %v3086, 0
        %v3464 = vsel %vm413, %v3087, 0
        %v3467 = vsel %vm413, %v3088, 0
        %v3470 = vsel %vm413, %v3089, 0
        %v3473 = vsel %vm413, %v3090, 0
        %3475 = vmatpush.msra.mxu0 0.0
        %3476 = vmatpush.msra.mxu0 0.0
        %3477 = vmatpush.msra.mxu0 0.0
        %3478 = vmatpush.msra.mxu0 0.0
        %3479 = vmatpush.msra.mxu0 0.0
        %3480 = vmatpush.msra.mxu0 0.0
        %3481 = vmatpush.msra.mxu0 0.0
        %3482 = vmatpush.msra.mxu0 0.0
        %3483 = vmatpush.msra.mxu0 0.0
        %3484 = vmatpush.msra.mxu0 0.0
        %3485 = vmatpush.msra.mxu0 0.0
        %3486 = vmatpush.msra.mxu0 0.0
        %3487 = vmatpush.msra.mxu0 0.0
        %3488 = vmatpush.msra.mxu0 0.0
        %3489 = vmatpush.msra.mxu0 0.0
        %3490 = vmatpush.msra.mxu0 %v800
        %3491 = vmatmul.f32.gmra.mxu0 %v3092
        %v3492 = vpop.f32.mrf.mxu0
        %v3493 = vadd.f32 0.0, %v3492
        %3494 = vmatmul.f32.gmra.mxu0 %v3095
        %v3495 = vpop.f32.mrf.mxu0
        %v3496 = vadd.f32 0.0, %v3495
        %3497 = vmatmul.f32.gmra.mxu0 %v3098
        %v3498 = vpop.f32.mrf.mxu0
        %v3499 = vadd.f32 0.0, %v3498
        %3500 = vmatmul.f32.gmra.mxu0 %v3101
        %v3501 = vpop.f32.mrf.mxu0
        %v3502 = vadd.f32 0.0, %v3501
        %3503 = vmatmul.f32.gmra.mxu0 %v3104
        %v3504 = vpop.f32.mrf.mxu0
        %v3505 = vadd.f32 0.0, %v3504
        %3506 = vmatmul.f32.gmra.mxu0 %v3107
        %v3507 = vpop.f32.mrf.mxu0
        %v3508 = vadd.f32 0.0, %v3507
        %3509 = vmatmul.f32.gmra.mxu0 %v3110
        %v3510 = vpop.f32.mrf.mxu0
        %v3511 = vadd.f32 0.0, %v3510
        %3512 = vmatmul.f32.gmra.mxu0 %v3113
        %v3513 = vpop.f32.mrf.mxu0
        %v3514 = vadd.f32 0.0, %v3513
        %3515 = vmatmul.f32.gmra.mxu0 %v3116
        %v3516 = vpop.f32.mrf.mxu0
        %v3517 = vadd.f32 0.0, %v3516
        %3518 = vmatmul.f32.gmra.mxu0 %v3119
        %v3519 = vpop.f32.mrf.mxu0
        %v3520 = vadd.f32 0.0, %v3519
        %3521 = vmatmul.f32.gmra.mxu0 %v3122
        %v3522 = vpop.f32.mrf.mxu0
        %v3523 = vadd.f32 0.0, %v3522
        %3524 = vmatmul.f32.gmra.mxu0 %v3125
        %v3525 = vpop.f32.mrf.mxu0
        %v3526 = vadd.f32 0.0, %v3525
        %3527 = vmatmul.f32.gmra.mxu0 %v3128
        %v3528 = vpop.f32.mrf.mxu0
        %v3529 = vadd.f32 0.0, %v3528
        %3530 = vmatmul.f32.gmra.mxu0 %v3131
        %v3531 = vpop.f32.mrf.mxu0
        %v3532 = vadd.f32 0.0, %v3531
        %3533 = vmatmul.f32.gmra.mxu0 %v3134
        %v3534 = vpop.f32.mrf.mxu0
        %v3535 = vadd.f32 0.0, %v3534
        %3536 = vmatmul.f32.gmra.mxu0 %v3137
        %v3537 = vpop.f32.mrf.mxu0
        %v3538 = vadd.f32 0.0, %v3537
        %3539 = vmatmul.f32.gmra.mxu0 %v3140
        %v3540 = vpop.f32.mrf.mxu0
        %v3541 = vadd.f32 0.0, %v3540
        %3542 = vmatmul.f32.gmra.mxu0 %v3143
        %v3543 = vpop.f32.mrf.mxu0
        %v3544 = vadd.f32 0.0, %v3543
        %3545 = vmatmul.f32.gmra.mxu0 %v3146
        %v3546 = vpop.f32.mrf.mxu0
        %v3547 = vadd.f32 0.0, %v3546
        %3548 = vmatmul.f32.gmra.mxu0 %v3149
        %v3549 = vpop.f32.mrf.mxu0
        %v3550 = vadd.f32 0.0, %v3549
        %3551 = vmatmul.f32.gmra.mxu0 %v3152
        %v3552 = vpop.f32.mrf.mxu0
        %v3553 = vadd.f32 0.0, %v3552
        %3554 = vmatmul.f32.gmra.mxu0 %v3155
        %v3555 = vpop.f32.mrf.mxu0
        %v3556 = vadd.f32 0.0, %v3555
        %3557 = vmatmul.f32.gmra.mxu0 %v3158
        %v3558 = vpop.f32.mrf.mxu0
        %v3559 = vadd.f32 0.0, %v3558
        %3560 = vmatmul.f32.gmra.mxu0 %v3161
        %v3561 = vpop.f32.mrf.mxu0
        %v3562 = vadd.f32 0.0, %v3561
        %3563 = vmatmul.f32.gmra.mxu0 %v3164
        %v3564 = vpop.f32.mrf.mxu0
        %v3565 = vadd.f32 0.0, %v3564
        %3566 = vmatmul.f32.gmra.mxu0 %v3167
        %v3567 = vpop.f32.mrf.mxu0
        %v3568 = vadd.f32 0.0, %v3567
        %3569 = vmatmul.f32.gmra.mxu0 %v3170
        %v3570 = vpop.f32.mrf.mxu0
        %v3571 = vadd.f32 0.0, %v3570
        %3572 = vmatmul.f32.gmra.mxu0 %v3173
        %v3573 = vpop.f32.mrf.mxu0
        %v3574 = vadd.f32 0.0, %v3573
        %3575 = vmatmul.f32.gmra.mxu0 %v3176
        %v3576 = vpop.f32.mrf.mxu0
        %v3577 = vadd.f32 0.0, %v3576
        %3578 = vmatmul.f32.gmra.mxu0 %v3179
        %v3579 = vpop.f32.mrf.mxu0
        %v3580 = vadd.f32 0.0, %v3579
        %3581 = vmatmul.f32.gmra.mxu0 %v3182
        %v3582 = vpop.f32.mrf.mxu0
        %v3583 = vadd.f32 0.0, %v3582
        %3584 = vmatmul.f32.gmra.mxu0 %v3185
        %v3585 = vpop.f32.mrf.mxu0
        %v3586 = vadd.f32 0.0, %v3585
        %3587 = vmatmul.f32.gmra.mxu0 %v3188
        %v3588 = vpop.f32.mrf.mxu0
        %v3589 = vadd.f32 0.0, %v3588
        %3590 = vmatmul.f32.gmra.mxu0 %v3191
        %v3591 = vpop.f32.mrf.mxu0
        %v3592 = vadd.f32 0.0, %v3591
        %3593 = vmatmul.f32.gmra.mxu0 %v3194
        %v3594 = vpop.f32.mrf.mxu0
        %v3595 = vadd.f32 0.0, %v3594
        %3596 = vmatmul.f32.gmra.mxu0 %v3197
        %v3597 = vpop.f32.mrf.mxu0
        %v3598 = vadd.f32 0.0, %v3597
        %3599 = vmatmul.f32.gmra.mxu0 %v3200
        %v3600 = vpop.f32.mrf.mxu0
        %v3601 = vadd.f32 0.0, %v3600
        %3602 = vmatmul.f32.gmra.mxu0 %v3203
        %v3603 = vpop.f32.mrf.mxu0
        %v3604 = vadd.f32 0.0, %v3603
        %3605 = vmatmul.f32.gmra.mxu0 %v3206
        %v3606 = vpop.f32.mrf.mxu0
        %v3607 = vadd.f32 0.0, %v3606
        %3608 = vmatmul.f32.gmra.mxu0 %v3209
        %v3609 = vpop.f32.mrf.mxu0
        %v3610 = vadd.f32 0.0, %v3609
        %3611 = vmatmul.f32.gmra.mxu0 %v3212
        %v3612 = vpop.f32.mrf.mxu0
        %v3613 = vadd.f32 0.0, %v3612
        %3614 = vmatmul.f32.gmra.mxu0 %v3215
        %v3615 = vpop.f32.mrf.mxu0
        %v3616 = vadd.f32 0.0, %v3615
        %3617 = vmatmul.f32.gmra.mxu0 %v3218
        %v3618 = vpop.f32.mrf.mxu0
        %v3619 = vadd.f32 0.0, %v3618
        %3620 = vmatmul.f32.gmra.mxu0 %v3221
        %v3621 = vpop.f32.mrf.mxu0
        %v3622 = vadd.f32 0.0, %v3621
        %3623 = vmatmul.f32.gmra.mxu0 %v3224
        %v3624 = vpop.f32.mrf.mxu0
        %v3625 = vadd.f32 0.0, %v3624
        %3626 = vmatmul.f32.gmra.mxu0 %v3227
        %v3627 = vpop.f32.mrf.mxu0
        %v3628 = vadd.f32 0.0, %v3627
        %3629 = vmatmul.f32.gmra.mxu0 %v3230
        %v3630 = vpop.f32.mrf.mxu0
        %v3631 = vadd.f32 0.0, %v3630
        %3632 = vmatmul.f32.gmra.mxu0 %v3233
        %v3633 = vpop.f32.mrf.mxu0
        %v3634 = vadd.f32 0.0, %v3633
        %3635 = vmatmul.f32.gmra.mxu0 %v3236
        %v3636 = vpop.f32.mrf.mxu0
        %v3637 = vadd.f32 0.0, %v3636
        %3638 = vmatmul.f32.gmra.mxu0 %v3239
        %v3639 = vpop.f32.mrf.mxu0
        %v3640 = vadd.f32 0.0, %v3639
        %3641 = vmatmul.f32.gmra.mxu0 %v3242
        %v3642 = vpop.f32.mrf.mxu0
        %v3643 = vadd.f32 0.0, %v3642
        %3644 = vmatmul.f32.gmra.mxu0 %v3245
        %v3645 = vpop.f32.mrf.mxu0
        %v3646 = vadd.f32 0.0, %v3645
        %3647 = vmatmul.f32.gmra.mxu0 %v3248
        %v3648 = vpop.f32.mrf.mxu0
        %v3649 = vadd.f32 0.0, %v3648
        %3650 = vmatmul.f32.gmra.mxu0 %v3251
        %v3651 = vpop.f32.mrf.mxu0
        %v3652 = vadd.f32 0.0, %v3651
        %3653 = vmatmul.f32.gmra.mxu0 %v3254
        %v3654 = vpop.f32.mrf.mxu0
        %v3655 = vadd.f32 0.0, %v3654
        %3656 = vmatmul.f32.gmra.mxu0 %v3257
        %v3657 = vpop.f32.mrf.mxu0
        %v3658 = vadd.f32 0.0, %v3657
        %3659 = vmatmul.f32.gmra.mxu0 %v3260
        %v3660 = vpop.f32.mrf.mxu0
        %v3661 = vadd.f32 0.0, %v3660
        %3662 = vmatmul.f32.gmra.mxu0 %v3263
        %v3663 = vpop.f32.mrf.mxu0
        %v3664 = vadd.f32 0.0, %v3663
        %3665 = vmatmul.f32.gmra.mxu0 %v3266
        %v3666 = vpop.f32.mrf.mxu0
        %v3667 = vadd.f32 0.0, %v3666
        %3668 = vmatmul.f32.gmra.mxu0 %v3269
        %v3669 = vpop.f32.mrf.mxu0
        %v3670 = vadd.f32 0.0, %v3669
        %3671 = vmatmul.f32.gmra.mxu0 %v3272
        %v3672 = vpop.f32.mrf.mxu0
        %v3673 = vadd.f32 0.0, %v3672
        %3674 = vmatmul.f32.gmra.mxu0 %v3275
        %v3675 = vpop.f32.mrf.mxu0
        %v3676 = vadd.f32 0.0, %v3675
        %3677 = vmatmul.f32.gmra.mxu0 %v3278
        %v3678 = vpop.f32.mrf.mxu0
        %v3679 = vadd.f32 0.0, %v3678
        %3680 = vmatmul.f32.gmra.mxu0 %v3281
        %v3681 = vpop.f32.mrf.mxu0
        %v3682 = vadd.f32 0.0, %v3681
        %3683 = vmatmul.f32.gmra.mxu0 %v3284
        %v3684 = vpop.f32.mrf.mxu0
        %v3685 = vadd.f32 0.0, %v3684
        %3686 = vmatmul.f32.gmra.mxu0 %v3287
        %v3687 = vpop.f32.mrf.mxu0
        %v3688 = vadd.f32 0.0, %v3687
        %3689 = vmatmul.f32.gmra.mxu0 %v3290
        %v3690 = vpop.f32.mrf.mxu0
        %v3691 = vadd.f32 0.0, %v3690
        %3692 = vmatmul.f32.gmra.mxu0 %v3293
        %v3693 = vpop.f32.mrf.mxu0
        %v3694 = vadd.f32 0.0, %v3693
        %3695 = vmatmul.f32.gmra.mxu0 %v3296
        %v3696 = vpop.f32.mrf.mxu0
        %v3697 = vadd.f32 0.0, %v3696
        %3698 = vmatmul.f32.gmra.mxu0 %v3299
        %v3699 = vpop.f32.mrf.mxu0
        %v3700 = vadd.f32 0.0, %v3699
        %3701 = vmatmul.f32.gmra.mxu0 %v3302
        %v3702 = vpop.f32.mrf.mxu0
        %v3703 = vadd.f32 0.0, %v3702
        %3704 = vmatmul.f32.gmra.mxu0 %v3305
        %v3705 = vpop.f32.mrf.mxu0
        %v3706 = vadd.f32 0.0, %v3705
        %3707 = vmatmul.f32.gmra.mxu0 %v3308
        %v3708 = vpop.f32.mrf.mxu0
        %v3709 = vadd.f32 0.0, %v3708
        %3710 = vmatmul.f32.gmra.mxu0 %v3311
        %v3711 = vpop.f32.mrf.mxu0
        %v3712 = vadd.f32 0.0, %v3711
        %3713 = vmatmul.f32.gmra.mxu0 %v3314
        %v3714 = vpop.f32.mrf.mxu0
        %v3715 = vadd.f32 0.0, %v3714
        %3716 = vmatmul.f32.gmra.mxu0 %v3317
        %v3717 = vpop.f32.mrf.mxu0
        %v3718 = vadd.f32 0.0, %v3717
        %3719 = vmatmul.f32.gmra.mxu0 %v3320
        %v3720 = vpop.f32.mrf.mxu0
        %v3721 = vadd.f32 0.0, %v3720
        %3722 = vmatmul.f32.gmra.mxu0 %v3323
        %v3723 = vpop.f32.mrf.mxu0
        %v3724 = vadd.f32 0.0, %v3723
        %3725 = vmatmul.f32.gmra.mxu0 %v3326
        %v3726 = vpop.f32.mrf.mxu0
        %v3727 = vadd.f32 0.0, %v3726
        %3728 = vmatmul.f32.gmra.mxu0 %v3329
        %v3729 = vpop.f32.mrf.mxu0
        %v3730 = vadd.f32 0.0, %v3729
        %3731 = vmatmul.f32.gmra.mxu0 %v3332
        %v3732 = vpop.f32.mrf.mxu0
        %v3733 = vadd.f32 0.0, %v3732
        %3734 = vmatmul.f32.gmra.mxu0 %v3335
        %v3735 = vpop.f32.mrf.mxu0
        %v3736 = vadd.f32 0.0, %v3735
        %3737 = vmatmul.f32.gmra.mxu0 %v3338
        %v3738 = vpop.f32.mrf.mxu0
        %v3739 = vadd.f32 0.0, %v3738
        %3740 = vmatmul.f32.gmra.mxu0 %v3341
        %v3741 = vpop.f32.mrf.mxu0
        %v3742 = vadd.f32 0.0, %v3741
        %3743 = vmatmul.f32.gmra.mxu0 %v3344
        %v3744 = vpop.f32.mrf.mxu0
        %v3745 = vadd.f32 0.0, %v3744
        %3746 = vmatmul.f32.gmra.mxu0 %v3347
        %v3747 = vpop.f32.mrf.mxu0
        %v3748 = vadd.f32 0.0, %v3747
        %3749 = vmatmul.f32.gmra.mxu0 %v3350
        %v3750 = vpop.f32.mrf.mxu0
        %v3751 = vadd.f32 0.0, %v3750
        %3752 = vmatmul.f32.gmra.mxu0 %v3353
        %v3753 = vpop.f32.mrf.mxu0
        %v3754 = vadd.f32 0.0, %v3753
        %3755 = vmatmul.f32.gmra.mxu0 %v3356
        %v3756 = vpop.f32.mrf.mxu0
        %v3757 = vadd.f32 0.0, %v3756
        %3758 = vmatmul.f32.gmra.mxu0 %v3359
        %v3759 = vpop.f32.mrf.mxu0
        %v3760 = vadd.f32 0.0, %v3759
        %3761 = vmatmul.f32.gmra.mxu0 %v3362
        %v3762 = vpop.f32.mrf.mxu0
        %v3763 = vadd.f32 0.0, %v3762
        %3764 = vmatmul.f32.gmra.mxu0 %v3365
        %v3765 = vpop.f32.mrf.mxu0
        %v3766 = vadd.f32 0.0, %v3765
        %3767 = vmatmul.f32.gmra.mxu0 %v3368
        %v3768 = vpop.f32.mrf.mxu0
        %v3769 = vadd.f32 0.0, %v3768
        %3770 = vmatmul.f32.gmra.mxu0 %v3371
        %v3771 = vpop.f32.mrf.mxu0
        %v3772 = vadd.f32 0.0, %v3771
        %3773 = vmatmul.f32.gmra.mxu0 %v3374
        %v3774 = vpop.f32.mrf.mxu0
        %v3775 = vadd.f32 0.0, %v3774
        %3776 = vmatmul.f32.gmra.mxu0 %v3377
        %v3777 = vpop.f32.mrf.mxu0
        %v3778 = vadd.f32 0.0, %v3777
        %3779 = vmatmul.f32.gmra.mxu0 %v3380
        %v3780 = vpop.f32.mrf.mxu0
        %v3781 = vadd.f32 0.0, %v3780
        %3782 = vmatmul.f32.gmra.mxu0 %v3383
        %v3783 = vpop.f32.mrf.mxu0
        %v3784 = vadd.f32 0.0, %v3783
        %3785 = vmatmul.f32.gmra.mxu0 %v3386
        %v3786 = vpop.f32.mrf.mxu0
        %v3787 = vadd.f32 0.0, %v3786
        %3788 = vmatmul.f32.gmra.mxu0 %v3389
        %v3789 = vpop.f32.mrf.mxu0
        %v3790 = vadd.f32 0.0, %v3789
        %3791 = vmatmul.f32.gmra.mxu0 %v3392
        %v3792 = vpop.f32.mrf.mxu0
        %v3793 = vadd.f32 0.0, %v3792
        %3794 = vmatmul.f32.gmra.mxu0 %v3395
        %v3795 = vpop.f32.mrf.mxu0
        %v3796 = vadd.f32 0.0, %v3795
        %3797 = vmatmul.f32.gmra.mxu0 %v3398
        %v3798 = vpop.f32.mrf.mxu0
        %v3799 = vadd.f32 0.0, %v3798
        %3800 = vmatmul.f32.gmra.mxu0 %v3401
        %v3801 = vpop.f32.mrf.mxu0
        %v3802 = vadd.f32 0.0, %v3801
        %3803 = vmatmul.f32.gmra.mxu0 %v3404
        %v3804 = vpop.f32.mrf.mxu0
        %v3805 = vadd.f32 0.0, %v3804
        %3806 = vmatmul.f32.gmra.mxu0 %v3407
        %v3807 = vpop.f32.mrf.mxu0
        %v3808 = vadd.f32 0.0, %v3807
        %3809 = vmatmul.f32.gmra.mxu0 %v3410
        %v3810 = vpop.f32.mrf.mxu0
        %v3811 = vadd.f32 0.0, %v3810
        %3812 = vmatmul.f32.gmra.mxu0 %v3413
        %v3813 = vpop.f32.mrf.mxu0
        %v3814 = vadd.f32 0.0, %v3813
        %3815 = vmatmul.f32.gmra.mxu0 %v3416
        %v3816 = vpop.f32.mrf.mxu0
        %v3817 = vadd.f32 0.0, %v3816
        %3818 = vmatmul.f32.gmra.mxu0 %v3419
        %v3819 = vpop.f32.mrf.mxu0
        %v3820 = vadd.f32 0.0, %v3819
        %3821 = vmatmul.f32.gmra.mxu0 %v3422
        %v3822 = vpop.f32.mrf.mxu0
        %v3823 = vadd.f32 0.0, %v3822
        %3824 = vmatmul.f32.gmra.mxu0 %v3425
        %v3825 = vpop.f32.mrf.mxu0
        %v3826 = vadd.f32 0.0, %v3825
        %3827 = vmatmul.f32.gmra.mxu0 %v3428
        %v3828 = vpop.f32.mrf.mxu0
        %v3829 = vadd.f32 0.0, %v3828
        %3830 = vmatmul.f32.gmra.mxu0 %v3431
        %v3831 = vpop.f32.mrf.mxu0
        %v3832 = vadd.f32 0.0, %v3831
        %3833 = vmatmul.f32.gmra.mxu0 %v3434
        %v3834 = vpop.f32.mrf.mxu0
        %v3835 = vadd.f32 0.0, %v3834
        %3836 = vmatmul.f32.gmra.mxu0 %v3437
        %v3837 = vpop.f32.mrf.mxu0
        %v3838 = vadd.f32 0.0, %v3837
        %3839 = vmatmul.f32.gmra.mxu0 %v3440
        %v3840 = vpop.f32.mrf.mxu0
        %v3841 = vadd.f32 0.0, %v3840
        %3842 = vmatmul.f32.gmra.mxu0 %v3443
        %v3843 = vpop.f32.mrf.mxu0
        %v3844 = vadd.f32 0.0, %v3843
        %3845 = vmatmul.f32.gmra.mxu0 %v3446
        %v3846 = vpop.f32.mrf.mxu0
        %v3847 = vadd.f32 0.0, %v3846
        %3848 = vmatmul.f32.gmra.mxu0 %v3449
        %v3849 = vpop.f32.mrf.mxu0
        %v3850 = vadd.f32 0.0, %v3849
        %3851 = vmatmul.f32.gmra.mxu0 %v3452
        %v3852 = vpop.f32.mrf.mxu0
        %v3853 = vadd.f32 0.0, %v3852
        %3854 = vmatmul.f32.gmra.mxu0 %v3455
        %v3855 = vpop.f32.mrf.mxu0
        %v3856 = vadd.f32 0.0, %v3855
        %3857 = vmatmul.f32.gmra.mxu0 %v3458
        %v3858 = vpop.f32.mrf.mxu0
        %v3859 = vadd.f32 0.0, %v3858
        %3860 = vmatmul.f32.gmra.mxu0 %v3461
        %v3861 = vpop.f32.mrf.mxu0
        %v3862 = vadd.f32 0.0, %v3861
        %3863 = vmatmul.f32.gmra.mxu0 %v3464
        %v3864 = vpop.f32.mrf.mxu0
        %v3865 = vadd.f32 0.0, %v3864
        %3866 = vmatmul.f32.gmra.mxu0 %v3467
        %v3867 = vpop.f32.mrf.mxu0
        %v3868 = vadd.f32 0.0, %v3867
        %3869 = vmatmul.f32.gmra.mxu0 %v3470
        %v3870 = vpop.f32.mrf.mxu0
        %v3871 = vadd.f32 0.0, %v3870
        %3872 = vmatmul.f32.gmra.mxu0 %v3473
        %v3873 = vpop.f32.mrf.mxu0
        %v3874 = vadd.f32 0.0, %v3873
        %3875 = vdwg.mxu0
        %3876 = vmatpush.msra.mxu0 0.0
        %3877 = vmatpush.msra.mxu0 0.0
        %3878 = vmatpush.msra.mxu0 0.0
        %3879 = vmatpush.msra.mxu0 0.0
        %3880 = vmatpush.msra.mxu0 0.0
        %3881 = vmatpush.msra.mxu0 0.0
        %3882 = vmatpush.msra.mxu0 0.0
        %3883 = vmatpush.msra.mxu0 0.0
        %3884 = vmatpush.msra.mxu0 0.0
        %3885 = vmatpush.msra.mxu0 0.0
        %3886 = vmatpush.msra.mxu0 0.0
        %3887 = vmatpush.msra.mxu0 0.0
        %3888 = vmatpush.msra.mxu0 0.0
        %3889 = vmatpush.msra.mxu0 0.0
        %3890 = vmatpush.msra.mxu0 0.0
        %3891 = vmatpush.msra.mxu0 %v803
        %3892 = vmatmul.f32.gmra.mxu0 %v3092
        %v3893 = vpop.f32.mrf.mxu0
        %v3894 = vadd.f32 0.0, %v3893
        %3895 = vmatmul.f32.gmra.mxu0 %v3095
        %v3896 = vpop.f32.mrf.mxu0
        %v3897 = vadd.f32 0.0, %v3896
        %3898 = vmatmul.f32.gmra.mxu0 %v3098
        %v3899 = vpop.f32.mrf.mxu0
        %v3900 = vadd.f32 0.0, %v3899
        %3901 = vmatmul.f32.gmra.mxu0 %v3101
        %v3902 = vpop.f32.mrf.mxu0
        %v3903 = vadd.f32 0.0, %v3902
        %3904 = vmatmul.f32.gmra.mxu0 %v3104
        %v3905 = vpop.f32.mrf.mxu0
        %v3906 = vadd.f32 0.0, %v3905
        %3907 = vmatmul.f32.gmra.mxu0 %v3107
        %v3908 = vpop.f32.mrf.mxu0
        %v3909 = vadd.f32 0.0, %v3908
        %3910 = vmatmul.f32.gmra.mxu0 %v3110
        %v3911 = vpop.f32.mrf.mxu0
        %v3912 = vadd.f32 0.0, %v3911
        %3913 = vmatmul.f32.gmra.mxu0 %v3113
        %v3914 = vpop.f32.mrf.mxu0
        %v3915 = vadd.f32 0.0, %v3914
        %3916 = vmatmul.f32.gmra.mxu0 %v3116
        %v3917 = vpop.f32.mrf.mxu0
        %v3918 = vadd.f32 0.0, %v3917
        %3919 = vmatmul.f32.gmra.mxu0 %v3119
        %v3920 = vpop.f32.mrf.mxu0
        %v3921 = vadd.f32 0.0, %v3920
        %3922 = vmatmul.f32.gmra.mxu0 %v3122
        %v3923 = vpop.f32.mrf.mxu0
        %v3924 = vadd.f32 0.0, %v3923
        %3925 = vmatmul.f32.gmra.mxu0 %v3125
        %v3926 = vpop.f32.mrf.mxu0
        %v3927 = vadd.f32 0.0, %v3926
        %3928 = vmatmul.f32.gmra.mxu0 %v3128
        %v3929 = vpop.f32.mrf.mxu0
        %v3930 = vadd.f32 0.0, %v3929
        %3931 = vmatmul.f32.gmra.mxu0 %v3131
        %v3932 = vpop.f32.mrf.mxu0
        %v3933 = vadd.f32 0.0, %v3932
        %3934 = vmatmul.f32.gmra.mxu0 %v3134
        %v3935 = vpop.f32.mrf.mxu0
        %v3936 = vadd.f32 0.0, %v3935
        %3937 = vmatmul.f32.gmra.mxu0 %v3137
        %v3938 = vpop.f32.mrf.mxu0
        %v3939 = vadd.f32 0.0, %v3938
        %3940 = vmatmul.f32.gmra.mxu0 %v3140
        %v3941 = vpop.f32.mrf.mxu0
        %v3942 = vadd.f32 0.0, %v3941
        %3943 = vmatmul.f32.gmra.mxu0 %v3143
        %v3944 = vpop.f32.mrf.mxu0
        %v3945 = vadd.f32 0.0, %v3944
        %3946 = vmatmul.f32.gmra.mxu0 %v3146
        %v3947 = vpop.f32.mrf.mxu0
        %v3948 = vadd.f32 0.0, %v3947
        %3949 = vmatmul.f32.gmra.mxu0 %v3149
        %v3950 = vpop.f32.mrf.mxu0
        %v3951 = vadd.f32 0.0, %v3950
        %3952 = vmatmul.f32.gmra.mxu0 %v3152
        %v3953 = vpop.f32.mrf.mxu0
        %v3954 = vadd.f32 0.0, %v3953
        %3955 = vmatmul.f32.gmra.mxu0 %v3155
        %v3956 = vpop.f32.mrf.mxu0
        %v3957 = vadd.f32 0.0, %v3956
        %3958 = vmatmul.f32.gmra.mxu0 %v3158
        %v3959 = vpop.f32.mrf.mxu0
        %v3960 = vadd.f32 0.0, %v3959
        %3961 = vmatmul.f32.gmra.mxu0 %v3161
        %v3962 = vpop.f32.mrf.mxu0
        %v3963 = vadd.f32 0.0, %v3962
        %3964 = vmatmul.f32.gmra.mxu0 %v3164
        %v3965 = vpop.f32.mrf.mxu0
        %v3966 = vadd.f32 0.0, %v3965
        %3967 = vmatmul.f32.gmra.mxu0 %v3167
        %v3968 = vpop.f32.mrf.mxu0
        %v3969 = vadd.f32 0.0, %v3968
        %3970 = vmatmul.f32.gmra.mxu0 %v3170
        %v3971 = vpop.f32.mrf.mxu0
        %v3972 = vadd.f32 0.0, %v3971
        %3973 = vmatmul.f32.gmra.mxu0 %v3173
        %v3974 = vpop.f32.mrf.mxu0
        %v3975 = vadd.f32 0.0, %v3974
        %3976 = vmatmul.f32.gmra.mxu0 %v3176
        %v3977 = vpop.f32.mrf.mxu0
        %v3978 = vadd.f32 0.0, %v3977
        %3979 = vmatmul.f32.gmra.mxu0 %v3179
        %v3980 = vpop.f32.mrf.mxu0
        %v3981 = vadd.f32 0.0, %v3980
        %3982 = vmatmul.f32.gmra.mxu0 %v3182
        %v3983 = vpop.f32.mrf.mxu0
        %v3984 = vadd.f32 0.0, %v3983
        %3985 = vmatmul.f32.gmra.mxu0 %v3185
        %v3986 = vpop.f32.mrf.mxu0
        %v3987 = vadd.f32 0.0, %v3986
        %3988 = vmatmul.f32.gmra.mxu0 %v3188
        %v3989 = vpop.f32.mrf.mxu0
        %v3990 = vadd.f32 0.0, %v3989
        %3991 = vmatmul.f32.gmra.mxu0 %v3191
        %v3992 = vpop.f32.mrf.mxu0
        %v3993 = vadd.f32 0.0, %v3992
        %3994 = vmatmul.f32.gmra.mxu0 %v3194
        %v3995 = vpop.f32.mrf.mxu0
        %v3996 = vadd.f32 0.0, %v3995
        %3997 = vmatmul.f32.gmra.mxu0 %v3197
        %v3998 = vpop.f32.mrf.mxu0
        %v3999 = vadd.f32 0.0, %v3998
        %4000 = vmatmul.f32.gmra.mxu0 %v3200
        %v4001 = vpop.f32.mrf.mxu0
        %v4002 = vadd.f32 0.0, %v4001
        %4003 = vmatmul.f32.gmra.mxu0 %v3203
        %v4004 = vpop.f32.mrf.mxu0
        %v4005 = vadd.f32 0.0, %v4004
        %4006 = vmatmul.f32.gmra.mxu0 %v3206
        %v4007 = vpop.f32.mrf.mxu0
        %v4008 = vadd.f32 0.0, %v4007
        %4009 = vmatmul.f32.gmra.mxu0 %v3209
        %v4010 = vpop.f32.mrf.mxu0
        %v4011 = vadd.f32 0.0, %v4010
        %4012 = vmatmul.f32.gmra.mxu0 %v3212
        %v4013 = vpop.f32.mrf.mxu0
        %v4014 = vadd.f32 0.0, %v4013
        %4015 = vmatmul.f32.gmra.mxu0 %v3215
        %v4016 = vpop.f32.mrf.mxu0
        %v4017 = vadd.f32 0.0, %v4016
        %4018 = vmatmul.f32.gmra.mxu0 %v3218
        %v4019 = vpop.f32.mrf.mxu0
        %v4020 = vadd.f32 0.0, %v4019
        %4021 = vmatmul.f32.gmra.mxu0 %v3221
        %v4022 = vpop.f32.mrf.mxu0
        %v4023 = vadd.f32 0.0, %v4022
        %4024 = vmatmul.f32.gmra.mxu0 %v3224
        %v4025 = vpop.f32.mrf.mxu0
        %v4026 = vadd.f32 0.0, %v4025
        %4027 = vmatmul.f32.gmra.mxu0 %v3227
        %v4028 = vpop.f32.mrf.mxu0
        %v4029 = vadd.f32 0.0, %v4028
        %4030 = vmatmul.f32.gmra.mxu0 %v3230
        %v4031 = vpop.f32.mrf.mxu0
        %v4032 = vadd.f32 0.0, %v4031
        %4033 = vmatmul.f32.gmra.mxu0 %v3233
        %v4034 = vpop.f32.mrf.mxu0
        %v4035 = vadd.f32 0.0, %v4034
        %4036 = vmatmul.f32.gmra.mxu0 %v3236
        %v4037 = vpop.f32.mrf.mxu0
        %v4038 = vadd.f32 0.0, %v4037
        %4039 = vmatmul.f32.gmra.mxu0 %v3239
        %v4040 = vpop.f32.mrf.mxu0
        %v4041 = vadd.f32 0.0, %v4040
        %4042 = vmatmul.f32.gmra.mxu0 %v3242
        %v4043 = vpop.f32.mrf.mxu0
        %v4044 = vadd.f32 0.0, %v4043
        %4045 = vmatmul.f32.gmra.mxu0 %v3245
        %v4046 = vpop.f32.mrf.mxu0
        %v4047 = vadd.f32 0.0, %v4046
        %4048 = vmatmul.f32.gmra.mxu0 %v3248
        %v4049 = vpop.f32.mrf.mxu0
        %v4050 = vadd.f32 0.0, %v4049
        %4051 = vmatmul.f32.gmra.mxu0 %v3251
        %v4052 = vpop.f32.mrf.mxu0
        %v4053 = vadd.f32 0.0, %v4052
        %4054 = vmatmul.f32.gmra.mxu0 %v3254
        %v4055 = vpop.f32.mrf.mxu0
        %v4056 = vadd.f32 0.0, %v4055
        %4057 = vmatmul.f32.gmra.mxu0 %v3257
        %v4058 = vpop.f32.mrf.mxu0
        %v4059 = vadd.f32 0.0, %v4058
        %4060 = vmatmul.f32.gmra.mxu0 %v3260
        %v4061 = vpop.f32.mrf.mxu0
        %v4062 = vadd.f32 0.0, %v4061
        %4063 = vmatmul.f32.gmra.mxu0 %v3263
        %v4064 = vpop.f32.mrf.mxu0
        %v4065 = vadd.f32 0.0, %v4064
        %4066 = vmatmul.f32.gmra.mxu0 %v3266
        %v4067 = vpop.f32.mrf.mxu0
        %v4068 = vadd.f32 0.0, %v4067
        %4069 = vmatmul.f32.gmra.mxu0 %v3269
        %v4070 = vpop.f32.mrf.mxu0
        %v4071 = vadd.f32 0.0, %v4070
        %4072 = vmatmul.f32.gmra.mxu0 %v3272
        %v4073 = vpop.f32.mrf.mxu0
        %v4074 = vadd.f32 0.0, %v4073
        %4075 = vmatmul.f32.gmra.mxu0 %v3275
        %v4076 = vpop.f32.mrf.mxu0
        %v4077 = vadd.f32 0.0, %v4076
        %4078 = vmatmul.f32.gmra.mxu0 %v3278
        %v4079 = vpop.f32.mrf.mxu0
        %v4080 = vadd.f32 0.0, %v4079
        %4081 = vmatmul.f32.gmra.mxu0 %v3281
        %v4082 = vpop.f32.mrf.mxu0
        %v4083 = vadd.f32 0.0, %v4082
        %4084 = vmatmul.f32.gmra.mxu0 %v3284
        %v4085 = vpop.f32.mrf.mxu0
        %v4086 = vadd.f32 0.0, %v4085
        %4087 = vmatmul.f32.gmra.mxu0 %v3287
        %v4088 = vpop.f32.mrf.mxu0
        %v4089 = vadd.f32 0.0, %v4088
        %4090 = vmatmul.f32.gmra.mxu0 %v3290
        %v4091 = vpop.f32.mrf.mxu0
        %v4092 = vadd.f32 0.0, %v4091
        %4093 = vmatmul.f32.gmra.mxu0 %v3293
        %v4094 = vpop.f32.mrf.mxu0
        %v4095 = vadd.f32 0.0, %v4094
        %4096 = vmatmul.f32.gmra.mxu0 %v3296
        %v4097 = vpop.f32.mrf.mxu0
        %v4098 = vadd.f32 0.0, %v4097
        %4099 = vmatmul.f32.gmra.mxu0 %v3299
        %v4100 = vpop.f32.mrf.mxu0
        %v4101 = vadd.f32 0.0, %v4100
        %4102 = vmatmul.f32.gmra.mxu0 %v3302
        %v4103 = vpop.f32.mrf.mxu0
        %v4104 = vadd.f32 0.0, %v4103
        %4105 = vmatmul.f32.gmra.mxu0 %v3305
        %v4106 = vpop.f32.mrf.mxu0
        %v4107 = vadd.f32 0.0, %v4106
        %4108 = vmatmul.f32.gmra.mxu0 %v3308
        %v4109 = vpop.f32.mrf.mxu0
        %v4110 = vadd.f32 0.0, %v4109
        %4111 = vmatmul.f32.gmra.mxu0 %v3311
        %v4112 = vpop.f32.mrf.mxu0
        %v4113 = vadd.f32 0.0, %v4112
        %4114 = vmatmul.f32.gmra.mxu0 %v3314
        %v4115 = vpop.f32.mrf.mxu0
        %v4116 = vadd.f32 0.0, %v4115
        %4117 = vmatmul.f32.gmra.mxu0 %v3317
        %v4118 = vpop.f32.mrf.mxu0
        %v4119 = vadd.f32 0.0, %v4118
        %4120 = vmatmul.f32.gmra.mxu0 %v3320
        %v4121 = vpop.f32.mrf.mxu0
        %v4122 = vadd.f32 0.0, %v4121
        %4123 = vmatmul.f32.gmra.mxu0 %v3323
        %v4124 = vpop.f32.mrf.mxu0
        %v4125 = vadd.f32 0.0, %v4124
        %4126 = vmatmul.f32.gmra.mxu0 %v3326
        %v4127 = vpop.f32.mrf.mxu0
        %v4128 = vadd.f32 0.0, %v4127
        %4129 = vmatmul.f32.gmra.mxu0 %v3329
        %v4130 = vpop.f32.mrf.mxu0
        %v4131 = vadd.f32 0.0, %v4130
        %4132 = vmatmul.f32.gmra.mxu0 %v3332
        %v4133 = vpop.f32.mrf.mxu0
        %v4134 = vadd.f32 0.0, %v4133
        %4135 = vmatmul.f32.gmra.mxu0 %v3335
        %v4136 = vpop.f32.mrf.mxu0
        %v4137 = vadd.f32 0.0, %v4136
        %4138 = vmatmul.f32.gmra.mxu0 %v3338
        %v4139 = vpop.f32.mrf.mxu0
        %v4140 = vadd.f32 0.0, %v4139
        %4141 = vmatmul.f32.gmra.mxu0 %v3341
        %v4142 = vpop.f32.mrf.mxu0
        %v4143 = vadd.f32 0.0, %v4142
        %4144 = vmatmul.f32.gmra.mxu0 %v3344
        %v4145 = vpop.f32.mrf.mxu0
        %v4146 = vadd.f32 0.0, %v4145
        %4147 = vmatmul.f32.gmra.mxu0 %v3347
        %v4148 = vpop.f32.mrf.mxu0
        %v4149 = vadd.f32 0.0, %v4148
        %4150 = vmatmul.f32.gmra.mxu0 %v3350
        %v4151 = vpop.f32.mrf.mxu0
        %v4152 = vadd.f32 0.0, %v4151
        %4153 = vmatmul.f32.gmra.mxu0 %v3353
        %v4154 = vpop.f32.mrf.mxu0
        %v4155 = vadd.f32 0.0, %v4154
        %4156 = vmatmul.f32.gmra.mxu0 %v3356
        %v4157 = vpop.f32.mrf.mxu0
        %v4158 = vadd.f32 0.0, %v4157
        %4159 = vmatmul.f32.gmra.mxu0 %v3359
        %v4160 = vpop.f32.mrf.mxu0
        %v4161 = vadd.f32 0.0, %v4160
        %4162 = vmatmul.f32.gmra.mxu0 %v3362
        %v4163 = vpop.f32.mrf.mxu0
        %v4164 = vadd.f32 0.0, %v4163
        %4165 = vmatmul.f32.gmra.mxu0 %v3365
        %v4166 = vpop.f32.mrf.mxu0
        %v4167 = vadd.f32 0.0, %v4166
        %4168 = vmatmul.f32.gmra.mxu0 %v3368
        %v4169 = vpop.f32.mrf.mxu0
        %v4170 = vadd.f32 0.0, %v4169
        %4171 = vmatmul.f32.gmra.mxu0 %v3371
        %v4172 = vpop.f32.mrf.mxu0
        %v4173 = vadd.f32 0.0, %v4172
        %4174 = vmatmul.f32.gmra.mxu0 %v3374
        %v4175 = vpop.f32.mrf.mxu0
        %v4176 = vadd.f32 0.0, %v4175
        %4177 = vmatmul.f32.gmra.mxu0 %v3377
        %v4178 = vpop.f32.mrf.mxu0
        %v4179 = vadd.f32 0.0, %v4178
        %4180 = vmatmul.f32.gmra.mxu0 %v3380
        %v4181 = vpop.f32.mrf.mxu0
        %v4182 = vadd.f32 0.0, %v4181
        %4183 = vmatmul.f32.gmra.mxu0 %v3383
        %v4184 = vpop.f32.mrf.mxu0
        %v4185 = vadd.f32 0.0, %v4184
        %4186 = vmatmul.f32.gmra.mxu0 %v3386
        %v4187 = vpop.f32.mrf.mxu0
        %v4188 = vadd.f32 0.0, %v4187
        %4189 = vmatmul.f32.gmra.mxu0 %v3389
        %v4190 = vpop.f32.mrf.mxu0
        %v4191 = vadd.f32 0.0, %v4190
        %4192 = vmatmul.f32.gmra.mxu0 %v3392
        %v4193 = vpop.f32.mrf.mxu0
        %v4194 = vadd.f32 0.0, %v4193
        %4195 = vmatmul.f32.gmra.mxu0 %v3395
        %v4196 = vpop.f32.mrf.mxu0
        %v4197 = vadd.f32 0.0, %v4196
        %4198 = vmatmul.f32.gmra.mxu0 %v3398
        %v4199 = vpop.f32.mrf.mxu0
        %v4200 = vadd.f32 0.0, %v4199
        %4201 = vmatmul.f32.gmra.mxu0 %v3401
        %v4202 = vpop.f32.mrf.mxu0
        %v4203 = vadd.f32 0.0, %v4202
        %4204 = vmatmul.f32.gmra.mxu0 %v3404
        %v4205 = vpop.f32.mrf.mxu0
        %v4206 = vadd.f32 0.0, %v4205
        %4207 = vmatmul.f32.gmra.mxu0 %v3407
        %v4208 = vpop.f32.mrf.mxu0
        %v4209 = vadd.f32 0.0, %v4208
        %4210 = vmatmul.f32.gmra.mxu0 %v3410
        %v4211 = vpop.f32.mrf.mxu0
        %v4212 = vadd.f32 0.0, %v4211
        %4213 = vmatmul.f32.gmra.mxu0 %v3413
        %v4214 = vpop.f32.mrf.mxu0
        %v4215 = vadd.f32 0.0, %v4214
        %4216 = vmatmul.f32.gmra.mxu0 %v3416
        %v4217 = vpop.f32.mrf.mxu0
        %v4218 = vadd.f32 0.0, %v4217
        %4219 = vmatmul.f32.gmra.mxu0 %v3419
        %v4220 = vpop.f32.mrf.mxu0
        %v4221 = vadd.f32 0.0, %v4220
        %4222 = vmatmul.f32.gmra.mxu0 %v3422
        %v4223 = vpop.f32.mrf.mxu0
        %v4224 = vadd.f32 0.0, %v4223
        %4225 = vmatmul.f32.gmra.mxu0 %v3425
        %v4226 = vpop.f32.mrf.mxu0
        %v4227 = vadd.f32 0.0, %v4226
        %4228 = vmatmul.f32.gmra.mxu0 %v3428
        %v4229 = vpop.f32.mrf.mxu0
        %v4230 = vadd.f32 0.0, %v4229
        %4231 = vmatmul.f32.gmra.mxu0 %v3431
        %v4232 = vpop.f32.mrf.mxu0
        %v4233 = vadd.f32 0.0, %v4232
        %4234 = vmatmul.f32.gmra.mxu0 %v3434
        %v4235 = vpop.f32.mrf.mxu0
        %v4236 = vadd.f32 0.0, %v4235
        %4237 = vmatmul.f32.gmra.mxu0 %v3437
        %v4238 = vpop.f32.mrf.mxu0
        %v4239 = vadd.f32 0.0, %v4238
        %4240 = vmatmul.f32.gmra.mxu0 %v3440
        %v4241 = vpop.f32.mrf.mxu0
        %v4242 = vadd.f32 0.0, %v4241
        %4243 = vmatmul.f32.gmra.mxu0 %v3443
        %v4244 = vpop.f32.mrf.mxu0
        %v4245 = vadd.f32 0.0, %v4244
        %4246 = vmatmul.f32.gmra.mxu0 %v3446
        %v4247 = vpop.f32.mrf.mxu0
        %v4248 = vadd.f32 0.0, %v4247
        %4249 = vmatmul.f32.gmra.mxu0 %v3449
        %v4250 = vpop.f32.mrf.mxu0
        %v4251 = vadd.f32 0.0, %v4250
        %4252 = vmatmul.f32.gmra.mxu0 %v3452
        %v4253 = vpop.f32.mrf.mxu0
        %v4254 = vadd.f32 0.0, %v4253
        %4255 = vmatmul.f32.gmra.mxu0 %v3455
        %v4256 = vpop.f32.mrf.mxu0
        %v4257 = vadd.f32 0.0, %v4256
        %4258 = vmatmul.f32.gmra.mxu0 %v3458
        %v4259 = vpop.f32.mrf.mxu0
        %v4260 = vadd.f32 0.0, %v4259
        %4261 = vmatmul.f32.gmra.mxu0 %v3461
        %v4262 = vpop.f32.mrf.mxu0
        %v4263 = vadd.f32 0.0, %v4262
        %4264 = vmatmul.f32.gmra.mxu0 %v3464
        %v4265 = vpop.f32.mrf.mxu0
        %v4266 = vadd.f32 0.0, %v4265
        %4267 = vmatmul.f32.gmra.mxu0 %v3467
        %v4268 = vpop.f32.mrf.mxu0
        %v4269 = vadd.f32 0.0, %v4268
        %4270 = vmatmul.f32.gmra.mxu0 %v3470
        %v4271 = vpop.f32.mrf.mxu0
        %v4272 = vadd.f32 0.0, %v4271
        %4273 = vmatmul.f32.gmra.mxu0 %v3473
        %v4274 = vpop.f32.mrf.mxu0
        %v4275 = vadd.f32 0.0, %v4274
        %4276 = vdwg.mxu0
        %4277 = vmatpush.msra.mxu0 0.0
        %4278 = vmatpush.msra.mxu0 0.0
        %4279 = vmatpush.msra.mxu0 0.0
        %4280 = vmatpush.msra.mxu0 0.0
        %4281 = vmatpush.msra.mxu0 0.0
        %4282 = vmatpush.msra.mxu0 0.0
        %4283 = vmatpush.msra.mxu0 0.0
        %4284 = vmatpush.msra.mxu0 0.0
        %4285 = vmatpush.msra.mxu0 0.0
        %4286 = vmatpush.msra.mxu0 0.0
        %4287 = vmatpush.msra.mxu0 0.0
        %4288 = vmatpush.msra.mxu0 0.0
        %4289 = vmatpush.msra.mxu0 0.0
        %4290 = vmatpush.msra.mxu0 0.0
        %4291 = vmatpush.msra.mxu0 0.0
        %4292 = vmatpush.msra.mxu0 %v806
        %4293 = vmatmul.f32.gmra.mxu0 %v3092
        %v4294 = vpop.f32.mrf.mxu0
        %v4295 = vadd.f32 0.0, %v4294
        %4296 = vmatmul.f32.gmra.mxu0 %v3095
        %v4297 = vpop.f32.mrf.mxu0
        %v4298 = vadd.f32 0.0, %v4297
        %4299 = vmatmul.f32.gmra.mxu0 %v3098
        %v4300 = vpop.f32.mrf.mxu0
        %v4301 = vadd.f32 0.0, %v4300
        %4302 = vmatmul.f32.gmra.mxu0 %v3101
        %v4303 = vpop.f32.mrf.mxu0
        %v4304 = vadd.f32 0.0, %v4303
        %4305 = vmatmul.f32.gmra.mxu0 %v3104
        %v4306 = vpop.f32.mrf.mxu0
        %v4307 = vadd.f32 0.0, %v4306
        %4308 = vmatmul.f32.gmra.mxu0 %v3107
        %v4309 = vpop.f32.mrf.mxu0
        %v4310 = vadd.f32 0.0, %v4309
        %4311 = vmatmul.f32.gmra.mxu0 %v3110
        %v4312 = vpop.f32.mrf.mxu0
        %v4313 = vadd.f32 0.0, %v4312
        %4314 = vmatmul.f32.gmra.mxu0 %v3113
        %v4315 = vpop.f32.mrf.mxu0
        %v4316 = vadd.f32 0.0, %v4315
        %4317 = vmatmul.f32.gmra.mxu0 %v3116
        %v4318 = vpop.f32.mrf.mxu0
        %v4319 = vadd.f32 0.0, %v4318
        %4320 = vmatmul.f32.gmra.mxu0 %v3119
        %v4321 = vpop.f32.mrf.mxu0
        %v4322 = vadd.f32 0.0, %v4321
        %4323 = vmatmul.f32.gmra.mxu0 %v3122
        %v4324 = vpop.f32.mrf.mxu0
        %v4325 = vadd.f32 0.0, %v4324
        %4326 = vmatmul.f32.gmra.mxu0 %v3125
        %v4327 = vpop.f32.mrf.mxu0
        %v4328 = vadd.f32 0.0, %v4327
        %4329 = vmatmul.f32.gmra.mxu0 %v3128
        %v4330 = vpop.f32.mrf.mxu0
        %v4331 = vadd.f32 0.0, %v4330
        %4332 = vmatmul.f32.gmra.mxu0 %v3131
        %v4333 = vpop.f32.mrf.mxu0
        %v4334 = vadd.f32 0.0, %v4333
        %4335 = vmatmul.f32.gmra.mxu0 %v3134
        %v4336 = vpop.f32.mrf.mxu0
        %v4337 = vadd.f32 0.0, %v4336
        %4338 = vmatmul.f32.gmra.mxu0 %v3137
        %v4339 = vpop.f32.mrf.mxu0
        %v4340 = vadd.f32 0.0, %v4339
        %4341 = vmatmul.f32.gmra.mxu0 %v3140
        %v4342 = vpop.f32.mrf.mxu0
        %v4343 = vadd.f32 0.0, %v4342
        %4344 = vmatmul.f32.gmra.mxu0 %v3143
        %v4345 = vpop.f32.mrf.mxu0
        %v4346 = vadd.f32 0.0, %v4345
        %4347 = vmatmul.f32.gmra.mxu0 %v3146
        %v4348 = vpop.f32.mrf.mxu0
        %v4349 = vadd.f32 0.0, %v4348
        %4350 = vmatmul.f32.gmra.mxu0 %v3149
        %v4351 = vpop.f32.mrf.mxu0
        %v4352 = vadd.f32 0.0, %v4351
        %4353 = vmatmul.f32.gmra.mxu0 %v3152
        %v4354 = vpop.f32.mrf.mxu0
        %v4355 = vadd.f32 0.0, %v4354
        %4356 = vmatmul.f32.gmra.mxu0 %v3155
        %v4357 = vpop.f32.mrf.mxu0
        %v4358 = vadd.f32 0.0, %v4357
        %4359 = vmatmul.f32.gmra.mxu0 %v3158
        %v4360 = vpop.f32.mrf.mxu0
        %v4361 = vadd.f32 0.0, %v4360
        %4362 = vmatmul.f32.gmra.mxu0 %v3161
        %v4363 = vpop.f32.mrf.mxu0
        %v4364 = vadd.f32 0.0, %v4363
        %4365 = vmatmul.f32.gmra.mxu0 %v3164
        %v4366 = vpop.f32.mrf.mxu0
        %v4367 = vadd.f32 0.0, %v4366
        %4368 = vmatmul.f32.gmra.mxu0 %v3167
        %v4369 = vpop.f32.mrf.mxu0
        %v4370 = vadd.f32 0.0, %v4369
        %4371 = vmatmul.f32.gmra.mxu0 %v3170
        %v4372 = vpop.f32.mrf.mxu0
        %v4373 = vadd.f32 0.0, %v4372
        %4374 = vmatmul.f32.gmra.mxu0 %v3173
        %v4375 = vpop.f32.mrf.mxu0
        %v4376 = vadd.f32 0.0, %v4375
        %4377 = vmatmul.f32.gmra.mxu0 %v3176
        %v4378 = vpop.f32.mrf.mxu0
        %v4379 = vadd.f32 0.0, %v4378
        %4380 = vmatmul.f32.gmra.mxu0 %v3179
        %v4381 = vpop.f32.mrf.mxu0
        %v4382 = vadd.f32 0.0, %v4381
        %4383 = vmatmul.f32.gmra.mxu0 %v3182
        %v4384 = vpop.f32.mrf.mxu0
        %v4385 = vadd.f32 0.0, %v4384
        %4386 = vmatmul.f32.gmra.mxu0 %v3185
        %v4387 = vpop.f32.mrf.mxu0
        %v4388 = vadd.f32 0.0, %v4387
        %4389 = vmatmul.f32.gmra.mxu0 %v3188
        %v4390 = vpop.f32.mrf.mxu0
        %v4391 = vadd.f32 0.0, %v4390
        %4392 = vmatmul.f32.gmra.mxu0 %v3191
        %v4393 = vpop.f32.mrf.mxu0
        %v4394 = vadd.f32 0.0, %v4393
        %4395 = vmatmul.f32.gmra.mxu0 %v3194
        %v4396 = vpop.f32.mrf.mxu0
        %v4397 = vadd.f32 0.0, %v4396
        %4398 = vmatmul.f32.gmra.mxu0 %v3197
        %v4399 = vpop.f32.mrf.mxu0
        %v4400 = vadd.f32 0.0, %v4399
        %4401 = vmatmul.f32.gmra.mxu0 %v3200
        %v4402 = vpop.f32.mrf.mxu0
        %v4403 = vadd.f32 0.0, %v4402
        %4404 = vmatmul.f32.gmra.mxu0 %v3203
        %v4405 = vpop.f32.mrf.mxu0
        %v4406 = vadd.f32 0.0, %v4405
        %4407 = vmatmul.f32.gmra.mxu0 %v3206
        %v4408 = vpop.f32.mrf.mxu0
        %v4409 = vadd.f32 0.0, %v4408
        %4410 = vmatmul.f32.gmra.mxu0 %v3209
        %v4411 = vpop.f32.mrf.mxu0
        %v4412 = vadd.f32 0.0, %v4411
        %4413 = vmatmul.f32.gmra.mxu0 %v3212
        %v4414 = vpop.f32.mrf.mxu0
        %v4415 = vadd.f32 0.0, %v4414
        %4416 = vmatmul.f32.gmra.mxu0 %v3215
        %v4417 = vpop.f32.mrf.mxu0
        %v4418 = vadd.f32 0.0, %v4417
        %4419 = vmatmul.f32.gmra.mxu0 %v3218
        %v4420 = vpop.f32.mrf.mxu0
        %v4421 = vadd.f32 0.0, %v4420
        %4422 = vmatmul.f32.gmra.mxu0 %v3221
        %v4423 = vpop.f32.mrf.mxu0
        %v4424 = vadd.f32 0.0, %v4423
        %4425 = vmatmul.f32.gmra.mxu0 %v3224
        %v4426 = vpop.f32.mrf.mxu0
        %v4427 = vadd.f32 0.0, %v4426
        %4428 = vmatmul.f32.gmra.mxu0 %v3227
        %v4429 = vpop.f32.mrf.mxu0
        %v4430 = vadd.f32 0.0, %v4429
        %4431 = vmatmul.f32.gmra.mxu0 %v3230
        %v4432 = vpop.f32.mrf.mxu0
        %v4433 = vadd.f32 0.0, %v4432
        %4434 = vmatmul.f32.gmra.mxu0 %v3233
        %v4435 = vpop.f32.mrf.mxu0
        %v4436 = vadd.f32 0.0, %v4435
        %4437 = vmatmul.f32.gmra.mxu0 %v3236
        %v4438 = vpop.f32.mrf.mxu0
        %v4439 = vadd.f32 0.0, %v4438
        %4440 = vmatmul.f32.gmra.mxu0 %v3239
        %v4441 = vpop.f32.mrf.mxu0
        %v4442 = vadd.f32 0.0, %v4441
        %4443 = vmatmul.f32.gmra.mxu0 %v3242
        %v4444 = vpop.f32.mrf.mxu0
        %v4445 = vadd.f32 0.0, %v4444
        %4446 = vmatmul.f32.gmra.mxu0 %v3245
        %v4447 = vpop.f32.mrf.mxu0
        %v4448 = vadd.f32 0.0, %v4447
        %4449 = vmatmul.f32.gmra.mxu0 %v3248
        %v4450 = vpop.f32.mrf.mxu0
        %v4451 = vadd.f32 0.0, %v4450
        %4452 = vmatmul.f32.gmra.mxu0 %v3251
        %v4453 = vpop.f32.mrf.mxu0
        %v4454 = vadd.f32 0.0, %v4453
        %4455 = vmatmul.f32.gmra.mxu0 %v3254
        %v4456 = vpop.f32.mrf.mxu0
        %v4457 = vadd.f32 0.0, %v4456
        %4458 = vmatmul.f32.gmra.mxu0 %v3257
        %v4459 = vpop.f32.mrf.mxu0
        %v4460 = vadd.f32 0.0, %v4459
        %4461 = vmatmul.f32.gmra.mxu0 %v3260
        %v4462 = vpop.f32.mrf.mxu0
        %v4463 = vadd.f32 0.0, %v4462
        %4464 = vmatmul.f32.gmra.mxu0 %v3263
        %v4465 = vpop.f32.mrf.mxu0
        %v4466 = vadd.f32 0.0, %v4465
        %4467 = vmatmul.f32.gmra.mxu0 %v3266
        %v4468 = vpop.f32.mrf.mxu0
        %v4469 = vadd.f32 0.0, %v4468
        %4470 = vmatmul.f32.gmra.mxu0 %v3269
        %v4471 = vpop.f32.mrf.mxu0
        %v4472 = vadd.f32 0.0, %v4471
        %4473 = vmatmul.f32.gmra.mxu0 %v3272
        %v4474 = vpop.f32.mrf.mxu0
        %v4475 = vadd.f32 0.0, %v4474
        %4476 = vmatmul.f32.gmra.mxu0 %v3275
        %v4477 = vpop.f32.mrf.mxu0
        %v4478 = vadd.f32 0.0, %v4477
        %4479 = vmatmul.f32.gmra.mxu0 %v3278
        %v4480 = vpop.f32.mrf.mxu0
        %v4481 = vadd.f32 0.0, %v4480
        %4482 = vmatmul.f32.gmra.mxu0 %v3281
        %v4483 = vpop.f32.mrf.mxu0
        %v4484 = vadd.f32 0.0, %v4483
        %4485 = vmatmul.f32.gmra.mxu0 %v3284
        %v4486 = vpop.f32.mrf.mxu0
        %v4487 = vadd.f32 0.0, %v4486
        %4488 = vmatmul.f32.gmra.mxu0 %v3287
        %v4489 = vpop.f32.mrf.mxu0
        %v4490 = vadd.f32 0.0, %v4489
        %4491 = vmatmul.f32.gmra.mxu0 %v3290
        %v4492 = vpop.f32.mrf.mxu0
        %v4493 = vadd.f32 0.0, %v4492
        %4494 = vmatmul.f32.gmra.mxu0 %v3293
        %v4495 = vpop.f32.mrf.mxu0
        %v4496 = vadd.f32 0.0, %v4495
        %4497 = vmatmul.f32.gmra.mxu0 %v3296
        %v4498 = vpop.f32.mrf.mxu0
        %v4499 = vadd.f32 0.0, %v4498
        %4500 = vmatmul.f32.gmra.mxu0 %v3299
        %v4501 = vpop.f32.mrf.mxu0
        %v4502 = vadd.f32 0.0, %v4501
        %4503 = vmatmul.f32.gmra.mxu0 %v3302
        %v4504 = vpop.f32.mrf.mxu0
        %v4505 = vadd.f32 0.0, %v4504
        %4506 = vmatmul.f32.gmra.mxu0 %v3305
        %v4507 = vpop.f32.mrf.mxu0
        %v4508 = vadd.f32 0.0, %v4507
        %4509 = vmatmul.f32.gmra.mxu0 %v3308
        %v4510 = vpop.f32.mrf.mxu0
        %v4511 = vadd.f32 0.0, %v4510
        %4512 = vmatmul.f32.gmra.mxu0 %v3311
        %v4513 = vpop.f32.mrf.mxu0
        %v4514 = vadd.f32 0.0, %v4513
        %4515 = vmatmul.f32.gmra.mxu0 %v3314
        %v4516 = vpop.f32.mrf.mxu0
        %v4517 = vadd.f32 0.0, %v4516
        %4518 = vmatmul.f32.gmra.mxu0 %v3317
        %v4519 = vpop.f32.mrf.mxu0
        %v4520 = vadd.f32 0.0, %v4519
        %4521 = vmatmul.f32.gmra.mxu0 %v3320
        %v4522 = vpop.f32.mrf.mxu0
        %v4523 = vadd.f32 0.0, %v4522
        %4524 = vmatmul.f32.gmra.mxu0 %v3323
        %v4525 = vpop.f32.mrf.mxu0
        %v4526 = vadd.f32 0.0, %v4525
        %4527 = vmatmul.f32.gmra.mxu0 %v3326
        %v4528 = vpop.f32.mrf.mxu0
        %v4529 = vadd.f32 0.0, %v4528
        %4530 = vmatmul.f32.gmra.mxu0 %v3329
        %v4531 = vpop.f32.mrf.mxu0
        %v4532 = vadd.f32 0.0, %v4531
        %4533 = vmatmul.f32.gmra.mxu0 %v3332
        %v4534 = vpop.f32.mrf.mxu0
        %v4535 = vadd.f32 0.0, %v4534
        %4536 = vmatmul.f32.gmra.mxu0 %v3335
        %v4537 = vpop.f32.mrf.mxu0
        %v4538 = vadd.f32 0.0, %v4537
        %4539 = vmatmul.f32.gmra.mxu0 %v3338
        %v4540 = vpop.f32.mrf.mxu0
        %v4541 = vadd.f32 0.0, %v4540
        %4542 = vmatmul.f32.gmra.mxu0 %v3341
        %v4543 = vpop.f32.mrf.mxu0
        %v4544 = vadd.f32 0.0, %v4543
        %4545 = vmatmul.f32.gmra.mxu0 %v3344
        %v4546 = vpop.f32.mrf.mxu0
        %v4547 = vadd.f32 0.0, %v4546
        %4548 = vmatmul.f32.gmra.mxu0 %v3347
        %v4549 = vpop.f32.mrf.mxu0
        %v4550 = vadd.f32 0.0, %v4549
        %4551 = vmatmul.f32.gmra.mxu0 %v3350
        %v4552 = vpop.f32.mrf.mxu0
        %v4553 = vadd.f32 0.0, %v4552
        %4554 = vmatmul.f32.gmra.mxu0 %v3353
        %v4555 = vpop.f32.mrf.mxu0
        %v4556 = vadd.f32 0.0, %v4555
        %4557 = vmatmul.f32.gmra.mxu0 %v3356
        %v4558 = vpop.f32.mrf.mxu0
        %v4559 = vadd.f32 0.0, %v4558
        %4560 = vmatmul.f32.gmra.mxu0 %v3359
        %v4561 = vpop.f32.mrf.mxu0
        %v4562 = vadd.f32 0.0, %v4561
        %4563 = vmatmul.f32.gmra.mxu0 %v3362
        %v4564 = vpop.f32.mrf.mxu0
        %v4565 = vadd.f32 0.0, %v4564
        %4566 = vmatmul.f32.gmra.mxu0 %v3365
        %v4567 = vpop.f32.mrf.mxu0
        %v4568 = vadd.f32 0.0, %v4567
        %4569 = vmatmul.f32.gmra.mxu0 %v3368
        %v4570 = vpop.f32.mrf.mxu0
        %v4571 = vadd.f32 0.0, %v4570
        %4572 = vmatmul.f32.gmra.mxu0 %v3371
        %v4573 = vpop.f32.mrf.mxu0
        %v4574 = vadd.f32 0.0, %v4573
        %4575 = vmatmul.f32.gmra.mxu0 %v3374
        %v4576 = vpop.f32.mrf.mxu0
        %v4577 = vadd.f32 0.0, %v4576
        %4578 = vmatmul.f32.gmra.mxu0 %v3377
        %v4579 = vpop.f32.mrf.mxu0
        %v4580 = vadd.f32 0.0, %v4579
        %4581 = vmatmul.f32.gmra.mxu0 %v3380
        %v4582 = vpop.f32.mrf.mxu0
        %v4583 = vadd.f32 0.0, %v4582
        %4584 = vmatmul.f32.gmra.mxu0 %v3383
        %v4585 = vpop.f32.mrf.mxu0
        %v4586 = vadd.f32 0.0, %v4585
        %4587 = vmatmul.f32.gmra.mxu0 %v3386
        %v4588 = vpop.f32.mrf.mxu0
        %v4589 = vadd.f32 0.0, %v4588
        %4590 = vmatmul.f32.gmra.mxu0 %v3389
        %v4591 = vpop.f32.mrf.mxu0
        %v4592 = vadd.f32 0.0, %v4591
        %4593 = vmatmul.f32.gmra.mxu0 %v3392
        %v4594 = vpop.f32.mrf.mxu0
        %v4595 = vadd.f32 0.0, %v4594
        %4596 = vmatmul.f32.gmra.mxu0 %v3395
        %v4597 = vpop.f32.mrf.mxu0
        %v4598 = vadd.f32 0.0, %v4597
        %4599 = vmatmul.f32.gmra.mxu0 %v3398
        %v4600 = vpop.f32.mrf.mxu0
        %v4601 = vadd.f32 0.0, %v4600
        %4602 = vmatmul.f32.gmra.mxu0 %v3401
        %v4603 = vpop.f32.mrf.mxu0
        %v4604 = vadd.f32 0.0, %v4603
        %4605 = vmatmul.f32.gmra.mxu0 %v3404
        %v4606 = vpop.f32.mrf.mxu0
        %v4607 = vadd.f32 0.0, %v4606
        %4608 = vmatmul.f32.gmra.mxu0 %v3407
        %v4609 = vpop.f32.mrf.mxu0
        %v4610 = vadd.f32 0.0, %v4609
        %4611 = vmatmul.f32.gmra.mxu0 %v3410
        %v4612 = vpop.f32.mrf.mxu0
        %v4613 = vadd.f32 0.0, %v4612
        %4614 = vmatmul.f32.gmra.mxu0 %v3413
        %v4615 = vpop.f32.mrf.mxu0
        %v4616 = vadd.f32 0.0, %v4615
        %4617 = vmatmul.f32.gmra.mxu0 %v3416
        %v4618 = vpop.f32.mrf.mxu0
        %v4619 = vadd.f32 0.0, %v4618
        %4620 = vmatmul.f32.gmra.mxu0 %v3419
        %v4621 = vpop.f32.mrf.mxu0
        %v4622 = vadd.f32 0.0, %v4621
        %4623 = vmatmul.f32.gmra.mxu0 %v3422
        %v4624 = vpop.f32.mrf.mxu0
        %v4625 = vadd.f32 0.0, %v4624
        %4626 = vmatmul.f32.gmra.mxu0 %v3425
        %v4627 = vpop.f32.mrf.mxu0
        %v4628 = vadd.f32 0.0, %v4627
        %4629 = vmatmul.f32.gmra.mxu0 %v3428
        %v4630 = vpop.f32.mrf.mxu0
        %v4631 = vadd.f32 0.0, %v4630
        %4632 = vmatmul.f32.gmra.mxu0 %v3431
        %v4633 = vpop.f32.mrf.mxu0
        %v4634 = vadd.f32 0.0, %v4633
        %4635 = vmatmul.f32.gmra.mxu0 %v3434
        %v4636 = vpop.f32.mrf.mxu0
        %v4637 = vadd.f32 0.0, %v4636
        %4638 = vmatmul.f32.gmra.mxu0 %v3437
        %v4639 = vpop.f32.mrf.mxu0
        %v4640 = vadd.f32 0.0, %v4639
        %4641 = vmatmul.f32.gmra.mxu0 %v3440
        %v4642 = vpop.f32.mrf.mxu0
        %v4643 = vadd.f32 0.0, %v4642
        %4644 = vmatmul.f32.gmra.mxu0 %v3443
        %v4645 = vpop.f32.mrf.mxu0
        %v4646 = vadd.f32 0.0, %v4645
        %4647 = vmatmul.f32.gmra.mxu0 %v3446
        %v4648 = vpop.f32.mrf.mxu0
        %v4649 = vadd.f32 0.0, %v4648
        %4650 = vmatmul.f32.gmra.mxu0 %v3449
        %v4651 = vpop.f32.mrf.mxu0
        %v4652 = vadd.f32 0.0, %v4651
        %4653 = vmatmul.f32.gmra.mxu0 %v3452
        %v4654 = vpop.f32.mrf.mxu0
        %v4655 = vadd.f32 0.0, %v4654
        %4656 = vmatmul.f32.gmra.mxu0 %v3455
        %v4657 = vpop.f32.mrf.mxu0
        %v4658 = vadd.f32 0.0, %v4657
        %4659 = vmatmul.f32.gmra.mxu0 %v3458
        %v4660 = vpop.f32.mrf.mxu0
        %v4661 = vadd.f32 0.0, %v4660
        %4662 = vmatmul.f32.gmra.mxu0 %v3461
        %v4663 = vpop.f32.mrf.mxu0
        %v4664 = vadd.f32 0.0, %v4663
        %4665 = vmatmul.f32.gmra.mxu0 %v3464
        %v4666 = vpop.f32.mrf.mxu0
        %v4667 = vadd.f32 0.0, %v4666
        %4668 = vmatmul.f32.gmra.mxu0 %v3467
        %v4669 = vpop.f32.mrf.mxu0
        %v4670 = vadd.f32 0.0, %v4669
        %4671 = vmatmul.f32.gmra.mxu0 %v3470
        %v4672 = vpop.f32.mrf.mxu0
        %v4673 = vadd.f32 0.0, %v4672
        %4674 = vmatmul.f32.gmra.mxu0 %v3473
        %v4675 = vpop.f32.mrf.mxu0
        %v4676 = vadd.f32 0.0, %v4675
        %4677 = vdwg.mxu0
        %4678 = vmatpush.msra.mxu0 0.0
        %4679 = vmatpush.msra.mxu0 0.0
        %4680 = vmatpush.msra.mxu0 0.0
        %4681 = vmatpush.msra.mxu0 0.0
        %4682 = vmatpush.msra.mxu0 0.0
        %4683 = vmatpush.msra.mxu0 0.0
        %4684 = vmatpush.msra.mxu0 0.0
        %4685 = vmatpush.msra.mxu0 0.0
        %4686 = vmatpush.msra.mxu0 0.0
        %4687 = vmatpush.msra.mxu0 0.0
        %4688 = vmatpush.msra.mxu0 0.0
        %4689 = vmatpush.msra.mxu0 0.0
        %4690 = vmatpush.msra.mxu0 0.0
        %4691 = vmatpush.msra.mxu0 0.0
        %4692 = vmatpush.msra.mxu0 0.0
        %4693 = vmatpush.msra.mxu0 %v809
        %4694 = vmatmul.f32.gmra.mxu0 %v3092
        %v4695 = vpop.f32.mrf.mxu0
        %v4696 = vadd.f32 0.0, %v4695
        %4697 = vmatmul.f32.gmra.mxu0 %v3095
        %v4698 = vpop.f32.mrf.mxu0
        %v4699 = vadd.f32 0.0, %v4698
        %4700 = vmatmul.f32.gmra.mxu0 %v3098
        %v4701 = vpop.f32.mrf.mxu0
        %v4702 = vadd.f32 0.0, %v4701
        %4703 = vmatmul.f32.gmra.mxu0 %v3101
        %v4704 = vpop.f32.mrf.mxu0
        %v4705 = vadd.f32 0.0, %v4704
        %4706 = vmatmul.f32.gmra.mxu0 %v3104
        %v4707 = vpop.f32.mrf.mxu0
        %v4708 = vadd.f32 0.0, %v4707
        %4709 = vmatmul.f32.gmra.mxu0 %v3107
        %v4710 = vpop.f32.mrf.mxu0
        %v4711 = vadd.f32 0.0, %v4710
        %4712 = vmatmul.f32.gmra.mxu0 %v3110
        %v4713 = vpop.f32.mrf.mxu0
        %v4714 = vadd.f32 0.0, %v4713
        %4715 = vmatmul.f32.gmra.mxu0 %v3113
        %v4716 = vpop.f32.mrf.mxu0
        %v4717 = vadd.f32 0.0, %v4716
        %4718 = vmatmul.f32.gmra.mxu0 %v3116
        %v4719 = vpop.f32.mrf.mxu0
        %v4720 = vadd.f32 0.0, %v4719
        %4721 = vmatmul.f32.gmra.mxu0 %v3119
        %v4722 = vpop.f32.mrf.mxu0
        %v4723 = vadd.f32 0.0, %v4722
        %4724 = vmatmul.f32.gmra.mxu0 %v3122
        %v4725 = vpop.f32.mrf.mxu0
        %v4726 = vadd.f32 0.0, %v4725
        %4727 = vmatmul.f32.gmra.mxu0 %v3125
        %v4728 = vpop.f32.mrf.mxu0
        %v4729 = vadd.f32 0.0, %v4728
        %4730 = vmatmul.f32.gmra.mxu0 %v3128
        %v4731 = vpop.f32.mrf.mxu0
        %v4732 = vadd.f32 0.0, %v4731
        %4733 = vmatmul.f32.gmra.mxu0 %v3131
        %v4734 = vpop.f32.mrf.mxu0
        %v4735 = vadd.f32 0.0, %v4734
        %4736 = vmatmul.f32.gmra.mxu0 %v3134
        %v4737 = vpop.f32.mrf.mxu0
        %v4738 = vadd.f32 0.0, %v4737
        %4739 = vmatmul.f32.gmra.mxu0 %v3137
        %v4740 = vpop.f32.mrf.mxu0
        %v4741 = vadd.f32 0.0, %v4740
        %4742 = vmatmul.f32.gmra.mxu0 %v3140
        %v4743 = vpop.f32.mrf.mxu0
        %v4744 = vadd.f32 0.0, %v4743
        %4745 = vmatmul.f32.gmra.mxu0 %v3143
        %v4746 = vpop.f32.mrf.mxu0
        %v4747 = vadd.f32 0.0, %v4746
        %4748 = vmatmul.f32.gmra.mxu0 %v3146
        %v4749 = vpop.f32.mrf.mxu0
        %v4750 = vadd.f32 0.0, %v4749
        %4751 = vmatmul.f32.gmra.mxu0 %v3149
        %v4752 = vpop.f32.mrf.mxu0
        %v4753 = vadd.f32 0.0, %v4752
        %4754 = vmatmul.f32.gmra.mxu0 %v3152
        %v4755 = vpop.f32.mrf.mxu0
        %v4756 = vadd.f32 0.0, %v4755
        %4757 = vmatmul.f32.gmra.mxu0 %v3155
        %v4758 = vpop.f32.mrf.mxu0
        %v4759 = vadd.f32 0.0, %v4758
        %4760 = vmatmul.f32.gmra.mxu0 %v3158
        %v4761 = vpop.f32.mrf.mxu0
        %v4762 = vadd.f32 0.0, %v4761
        %4763 = vmatmul.f32.gmra.mxu0 %v3161
        %v4764 = vpop.f32.mrf.mxu0
        %v4765 = vadd.f32 0.0, %v4764
        %4766 = vmatmul.f32.gmra.mxu0 %v3164
        %v4767 = vpop.f32.mrf.mxu0
        %v4768 = vadd.f32 0.0, %v4767
        %4769 = vmatmul.f32.gmra.mxu0 %v3167
        %v4770 = vpop.f32.mrf.mxu0
        %v4771 = vadd.f32 0.0, %v4770
        %4772 = vmatmul.f32.gmra.mxu0 %v3170
        %v4773 = vpop.f32.mrf.mxu0
        %v4774 = vadd.f32 0.0, %v4773
        %4775 = vmatmul.f32.gmra.mxu0 %v3173
        %v4776 = vpop.f32.mrf.mxu0
        %v4777 = vadd.f32 0.0, %v4776
        %4778 = vmatmul.f32.gmra.mxu0 %v3176
        %v4779 = vpop.f32.mrf.mxu0
        %v4780 = vadd.f32 0.0, %v4779
        %4781 = vmatmul.f32.gmra.mxu0 %v3179
        %v4782 = vpop.f32.mrf.mxu0
        %v4783 = vadd.f32 0.0, %v4782
        %4784 = vmatmul.f32.gmra.mxu0 %v3182
        %v4785 = vpop.f32.mrf.mxu0
        %v4786 = vadd.f32 0.0, %v4785
        %4787 = vmatmul.f32.gmra.mxu0 %v3185
        %v4788 = vpop.f32.mrf.mxu0
        %v4789 = vadd.f32 0.0, %v4788
        %4790 = vmatmul.f32.gmra.mxu0 %v3188
        %v4791 = vpop.f32.mrf.mxu0
        %v4792 = vadd.f32 0.0, %v4791
        %4793 = vmatmul.f32.gmra.mxu0 %v3191
        %v4794 = vpop.f32.mrf.mxu0
        %v4795 = vadd.f32 0.0, %v4794
        %4796 = vmatmul.f32.gmra.mxu0 %v3194
        %v4797 = vpop.f32.mrf.mxu0
        %v4798 = vadd.f32 0.0, %v4797
        %4799 = vmatmul.f32.gmra.mxu0 %v3197
        %v4800 = vpop.f32.mrf.mxu0
        %v4801 = vadd.f32 0.0, %v4800
        %4802 = vmatmul.f32.gmra.mxu0 %v3200
        %v4803 = vpop.f32.mrf.mxu0
        %v4804 = vadd.f32 0.0, %v4803
        %4805 = vmatmul.f32.gmra.mxu0 %v3203
        %v4806 = vpop.f32.mrf.mxu0
        %v4807 = vadd.f32 0.0, %v4806
        %4808 = vmatmul.f32.gmra.mxu0 %v3206
        %v4809 = vpop.f32.mrf.mxu0
        %v4810 = vadd.f32 0.0, %v4809
        %4811 = vmatmul.f32.gmra.mxu0 %v3209
        %v4812 = vpop.f32.mrf.mxu0
        %v4813 = vadd.f32 0.0, %v4812
        %4814 = vmatmul.f32.gmra.mxu0 %v3212
        %v4815 = vpop.f32.mrf.mxu0
        %v4816 = vadd.f32 0.0, %v4815
        %4817 = vmatmul.f32.gmra.mxu0 %v3215
        %v4818 = vpop.f32.mrf.mxu0
        %v4819 = vadd.f32 0.0, %v4818
        %4820 = vmatmul.f32.gmra.mxu0 %v3218
        %v4821 = vpop.f32.mrf.mxu0
        %v4822 = vadd.f32 0.0, %v4821
        %4823 = vmatmul.f32.gmra.mxu0 %v3221
        %v4824 = vpop.f32.mrf.mxu0
        %v4825 = vadd.f32 0.0, %v4824
        %4826 = vmatmul.f32.gmra.mxu0 %v3224
        %v4827 = vpop.f32.mrf.mxu0
        %v4828 = vadd.f32 0.0, %v4827
        %4829 = vmatmul.f32.gmra.mxu0 %v3227
        %v4830 = vpop.f32.mrf.mxu0
        %v4831 = vadd.f32 0.0, %v4830
        %4832 = vmatmul.f32.gmra.mxu0 %v3230
        %v4833 = vpop.f32.mrf.mxu0
        %v4834 = vadd.f32 0.0, %v4833
        %4835 = vmatmul.f32.gmra.mxu0 %v3233
        %v4836 = vpop.f32.mrf.mxu0
        %v4837 = vadd.f32 0.0, %v4836
        %4838 = vmatmul.f32.gmra.mxu0 %v3236
        %v4839 = vpop.f32.mrf.mxu0
        %v4840 = vadd.f32 0.0, %v4839
        %4841 = vmatmul.f32.gmra.mxu0 %v3239
        %v4842 = vpop.f32.mrf.mxu0
        %v4843 = vadd.f32 0.0, %v4842
        %4844 = vmatmul.f32.gmra.mxu0 %v3242
        %v4845 = vpop.f32.mrf.mxu0
        %v4846 = vadd.f32 0.0, %v4845
        %4847 = vmatmul.f32.gmra.mxu0 %v3245
        %v4848 = vpop.f32.mrf.mxu0
        %v4849 = vadd.f32 0.0, %v4848
        %4850 = vmatmul.f32.gmra.mxu0 %v3248
        %v4851 = vpop.f32.mrf.mxu0
        %v4852 = vadd.f32 0.0, %v4851
        %4853 = vmatmul.f32.gmra.mxu0 %v3251
        %v4854 = vpop.f32.mrf.mxu0
        %v4855 = vadd.f32 0.0, %v4854
        %4856 = vmatmul.f32.gmra.mxu0 %v3254
        %v4857 = vpop.f32.mrf.mxu0
        %v4858 = vadd.f32 0.0, %v4857
        %4859 = vmatmul.f32.gmra.mxu0 %v3257
        %v4860 = vpop.f32.mrf.mxu0
        %v4861 = vadd.f32 0.0, %v4860
        %4862 = vmatmul.f32.gmra.mxu0 %v3260
        %v4863 = vpop.f32.mrf.mxu0
        %v4864 = vadd.f32 0.0, %v4863
        %4865 = vmatmul.f32.gmra.mxu0 %v3263
        %v4866 = vpop.f32.mrf.mxu0
        %v4867 = vadd.f32 0.0, %v4866
        %4868 = vmatmul.f32.gmra.mxu0 %v3266
        %v4869 = vpop.f32.mrf.mxu0
        %v4870 = vadd.f32 0.0, %v4869
        %4871 = vmatmul.f32.gmra.mxu0 %v3269
        %v4872 = vpop.f32.mrf.mxu0
        %v4873 = vadd.f32 0.0, %v4872
        %4874 = vmatmul.f32.gmra.mxu0 %v3272
        %v4875 = vpop.f32.mrf.mxu0
        %v4876 = vadd.f32 0.0, %v4875
        %4877 = vmatmul.f32.gmra.mxu0 %v3275
        %v4878 = vpop.f32.mrf.mxu0
        %v4879 = vadd.f32 0.0, %v4878
        %4880 = vmatmul.f32.gmra.mxu0 %v3278
        %v4881 = vpop.f32.mrf.mxu0
        %v4882 = vadd.f32 0.0, %v4881
        %4883 = vmatmul.f32.gmra.mxu0 %v3281
        %v4884 = vpop.f32.mrf.mxu0
        %v4885 = vadd.f32 0.0, %v4884
        %4886 = vmatmul.f32.gmra.mxu0 %v3284
        %v4887 = vpop.f32.mrf.mxu0
        %v4888 = vadd.f32 0.0, %v4887
        %4889 = vmatmul.f32.gmra.mxu0 %v3287
        %v4890 = vpop.f32.mrf.mxu0
        %v4891 = vadd.f32 0.0, %v4890
        %4892 = vmatmul.f32.gmra.mxu0 %v3290
        %v4893 = vpop.f32.mrf.mxu0
        %v4894 = vadd.f32 0.0, %v4893
        %4895 = vmatmul.f32.gmra.mxu0 %v3293
        %v4896 = vpop.f32.mrf.mxu0
        %v4897 = vadd.f32 0.0, %v4896
        %4898 = vmatmul.f32.gmra.mxu0 %v3296
        %v4899 = vpop.f32.mrf.mxu0
        %v4900 = vadd.f32 0.0, %v4899
        %4901 = vmatmul.f32.gmra.mxu0 %v3299
        %v4902 = vpop.f32.mrf.mxu0
        %v4903 = vadd.f32 0.0, %v4902
        %4904 = vmatmul.f32.gmra.mxu0 %v3302
        %v4905 = vpop.f32.mrf.mxu0
        %v4906 = vadd.f32 0.0, %v4905
        %4907 = vmatmul.f32.gmra.mxu0 %v3305
        %v4908 = vpop.f32.mrf.mxu0
        %v4909 = vadd.f32 0.0, %v4908
        %4910 = vmatmul.f32.gmra.mxu0 %v3308
        %v4911 = vpop.f32.mrf.mxu0
        %v4912 = vadd.f32 0.0, %v4911
        %4913 = vmatmul.f32.gmra.mxu0 %v3311
        %v4914 = vpop.f32.mrf.mxu0
        %v4915 = vadd.f32 0.0, %v4914
        %4916 = vmatmul.f32.gmra.mxu0 %v3314
        %v4917 = vpop.f32.mrf.mxu0
        %v4918 = vadd.f32 0.0, %v4917
        %4919 = vmatmul.f32.gmra.mxu0 %v3317
        %v4920 = vpop.f32.mrf.mxu0
        %v4921 = vadd.f32 0.0, %v4920
        %4922 = vmatmul.f32.gmra.mxu0 %v3320
        %v4923 = vpop.f32.mrf.mxu0
        %v4924 = vadd.f32 0.0, %v4923
        %4925 = vmatmul.f32.gmra.mxu0 %v3323
        %v4926 = vpop.f32.mrf.mxu0
        %v4927 = vadd.f32 0.0, %v4926
        %4928 = vmatmul.f32.gmra.mxu0 %v3326
        %v4929 = vpop.f32.mrf.mxu0
        %v4930 = vadd.f32 0.0, %v4929
        %4931 = vmatmul.f32.gmra.mxu0 %v3329
        %v4932 = vpop.f32.mrf.mxu0
        %v4933 = vadd.f32 0.0, %v4932
        %4934 = vmatmul.f32.gmra.mxu0 %v3332
        %v4935 = vpop.f32.mrf.mxu0
        %v4936 = vadd.f32 0.0, %v4935
        %4937 = vmatmul.f32.gmra.mxu0 %v3335
        %v4938 = vpop.f32.mrf.mxu0
        %v4939 = vadd.f32 0.0, %v4938
        %4940 = vmatmul.f32.gmra.mxu0 %v3338
        %v4941 = vpop.f32.mrf.mxu0
        %v4942 = vadd.f32 0.0, %v4941
        %4943 = vmatmul.f32.gmra.mxu0 %v3341
        %v4944 = vpop.f32.mrf.mxu0
        %v4945 = vadd.f32 0.0, %v4944
        %4946 = vmatmul.f32.gmra.mxu0 %v3344
        %v4947 = vpop.f32.mrf.mxu0
        %v4948 = vadd.f32 0.0, %v4947
        %4949 = vmatmul.f32.gmra.mxu0 %v3347
        %v4950 = vpop.f32.mrf.mxu0
        %v4951 = vadd.f32 0.0, %v4950
        %4952 = vmatmul.f32.gmra.mxu0 %v3350
        %v4953 = vpop.f32.mrf.mxu0
        %v4954 = vadd.f32 0.0, %v4953
        %4955 = vmatmul.f32.gmra.mxu0 %v3353
        %v4956 = vpop.f32.mrf.mxu0
        %v4957 = vadd.f32 0.0, %v4956
        %4958 = vmatmul.f32.gmra.mxu0 %v3356
        %v4959 = vpop.f32.mrf.mxu0
        %v4960 = vadd.f32 0.0, %v4959
        %4961 = vmatmul.f32.gmra.mxu0 %v3359
        %v4962 = vpop.f32.mrf.mxu0
        %v4963 = vadd.f32 0.0, %v4962
        %4964 = vmatmul.f32.gmra.mxu0 %v3362
        %v4965 = vpop.f32.mrf.mxu0
        %v4966 = vadd.f32 0.0, %v4965
        %4967 = vmatmul.f32.gmra.mxu0 %v3365
        %v4968 = vpop.f32.mrf.mxu0
        %v4969 = vadd.f32 0.0, %v4968
        %4970 = vmatmul.f32.gmra.mxu0 %v3368
        %v4971 = vpop.f32.mrf.mxu0
        %v4972 = vadd.f32 0.0, %v4971
        %4973 = vmatmul.f32.gmra.mxu0 %v3371
        %v4974 = vpop.f32.mrf.mxu0
        %v4975 = vadd.f32 0.0, %v4974
        %4976 = vmatmul.f32.gmra.mxu0 %v3374
        %v4977 = vpop.f32.mrf.mxu0
        %v4978 = vadd.f32 0.0, %v4977
        %4979 = vmatmul.f32.gmra.mxu0 %v3377
        %v4980 = vpop.f32.mrf.mxu0
        %v4981 = vadd.f32 0.0, %v4980
        %4982 = vmatmul.f32.gmra.mxu0 %v3380
        %v4983 = vpop.f32.mrf.mxu0
        %v4984 = vadd.f32 0.0, %v4983
        %4985 = vmatmul.f32.gmra.mxu0 %v3383
        %v4986 = vpop.f32.mrf.mxu0
        %v4987 = vadd.f32 0.0, %v4986
        %4988 = vmatmul.f32.gmra.mxu0 %v3386
        %v4989 = vpop.f32.mrf.mxu0
        %v4990 = vadd.f32 0.0, %v4989
        %4991 = vmatmul.f32.gmra.mxu0 %v3389
        %v4992 = vpop.f32.mrf.mxu0
        %v4993 = vadd.f32 0.0, %v4992
        %4994 = vmatmul.f32.gmra.mxu0 %v3392
        %v4995 = vpop.f32.mrf.mxu0
        %v4996 = vadd.f32 0.0, %v4995
        %4997 = vmatmul.f32.gmra.mxu0 %v3395
        %v4998 = vpop.f32.mrf.mxu0
        %v4999 = vadd.f32 0.0, %v4998
        %5000 = vmatmul.f32.gmra.mxu0 %v3398
        %v5001 = vpop.f32.mrf.mxu0
        %v5002 = vadd.f32 0.0, %v5001
        %5003 = vmatmul.f32.gmra.mxu0 %v3401
        %v5004 = vpop.f32.mrf.mxu0
        %v5005 = vadd.f32 0.0, %v5004
        %5006 = vmatmul.f32.gmra.mxu0 %v3404
        %v5007 = vpop.f32.mrf.mxu0
        %v5008 = vadd.f32 0.0, %v5007
        %5009 = vmatmul.f32.gmra.mxu0 %v3407
        %v5010 = vpop.f32.mrf.mxu0
        %v5011 = vadd.f32 0.0, %v5010
        %5012 = vmatmul.f32.gmra.mxu0 %v3410
        %v5013 = vpop.f32.mrf.mxu0
        %v5014 = vadd.f32 0.0, %v5013
        %5015 = vmatmul.f32.gmra.mxu0 %v3413
        %v5016 = vpop.f32.mrf.mxu0
        %v5017 = vadd.f32 0.0, %v5016
        %5018 = vmatmul.f32.gmra.mxu0 %v3416
        %v5019 = vpop.f32.mrf.mxu0
        %v5020 = vadd.f32 0.0, %v5019
        %5021 = vmatmul.f32.gmra.mxu0 %v3419
        %v5022 = vpop.f32.mrf.mxu0
        %v5023 = vadd.f32 0.0, %v5022
        %5024 = vmatmul.f32.gmra.mxu0 %v3422
        %v5025 = vpop.f32.mrf.mxu0
        %v5026 = vadd.f32 0.0, %v5025
        %5027 = vmatmul.f32.gmra.mxu0 %v3425
        %v5028 = vpop.f32.mrf.mxu0
        %v5029 = vadd.f32 0.0, %v5028
        %5030 = vmatmul.f32.gmra.mxu0 %v3428
        %v5031 = vpop.f32.mrf.mxu0
        %v5032 = vadd.f32 0.0, %v5031
        %5033 = vmatmul.f32.gmra.mxu0 %v3431
        %v5034 = vpop.f32.mrf.mxu0
        %v5035 = vadd.f32 0.0, %v5034
        %5036 = vmatmul.f32.gmra.mxu0 %v3434
        %v5037 = vpop.f32.mrf.mxu0
        %v5038 = vadd.f32 0.0, %v5037
        %5039 = vmatmul.f32.gmra.mxu0 %v3437
        %v5040 = vpop.f32.mrf.mxu0
        %v5041 = vadd.f32 0.0, %v5040
        %5042 = vmatmul.f32.gmra.mxu0 %v3440
        %v5043 = vpop.f32.mrf.mxu0
        %v5044 = vadd.f32 0.0, %v5043
        %5045 = vmatmul.f32.gmra.mxu0 %v3443
        %v5046 = vpop.f32.mrf.mxu0
        %v5047 = vadd.f32 0.0, %v5046
        %5048 = vmatmul.f32.gmra.mxu0 %v3446
        %v5049 = vpop.f32.mrf.mxu0
        %v5050 = vadd.f32 0.0, %v5049
        %5051 = vmatmul.f32.gmra.mxu0 %v3449
        %v5052 = vpop.f32.mrf.mxu0
        %v5053 = vadd.f32 0.0, %v5052
        %5054 = vmatmul.f32.gmra.mxu0 %v3452
        %v5055 = vpop.f32.mrf.mxu0
        %v5056 = vadd.f32 0.0, %v5055
        %5057 = vmatmul.f32.gmra.mxu0 %v3455
        %v5058 = vpop.f32.mrf.mxu0
        %v5059 = vadd.f32 0.0, %v5058
        %5060 = vmatmul.f32.gmra.mxu0 %v3458
        %v5061 = vpop.f32.mrf.mxu0
        %v5062 = vadd.f32 0.0, %v5061
        %5063 = vmatmul.f32.gmra.mxu0 %v3461
        %v5064 = vpop.f32.mrf.mxu0
        %v5065 = vadd.f32 0.0, %v5064
        %5066 = vmatmul.f32.gmra.mxu0 %v3464
        %v5067 = vpop.f32.mrf.mxu0
        %v5068 = vadd.f32 0.0, %v5067
        %5069 = vmatmul.f32.gmra.mxu0 %v3467
        %v5070 = vpop.f32.mrf.mxu0
        %v5071 = vadd.f32 0.0, %v5070
        %5072 = vmatmul.f32.gmra.mxu0 %v3470
        %v5073 = vpop.f32.mrf.mxu0
        %v5074 = vadd.f32 0.0, %v5073
        %5075 = vmatmul.f32.gmra.mxu0 %v3473
        %v5076 = vpop.f32.mrf.mxu0
        %v5077 = vadd.f32 0.0, %v5076
        %5078 = vdwg.mxu0
        %v5079 = vmin.f32 %v3493, %v3496
        %v5080 = vmin.f32 %v5079, %v3499
        %v5081 = vmin.f32 %v5080, %v3502
        %v5082 = vmin.f32 %v5081, %v3505
        %v5083 = vmin.f32 %v5082, %v3508
        %v5084 = vmin.f32 %v5083, %v3511
        %v5085 = vmin.f32 %v5084, %v3514
        %v5086 = vmin.f32 %v5085, %v3517
        %v5087 = vmin.f32 %v5086, %v3520
        %v5088 = vmin.f32 %v5087, %v3523
        %v5089 = vmin.f32 %v5088, %v3526
        %v5090 = vmin.f32 %v5089, %v3529
        %v5091 = vmin.f32 %v5090, %v3532
        %v5092 = vmin.f32 %v5091, %v3535
        %v5093 = vmin.f32 %v5092, %v3538
        %v5094 = vmin.f32 %v5093, %v3541
        %v5095 = vmin.f32 %v5094, %v3544
        %v5096 = vmin.f32 %v5095, %v3547
        %v5097 = vmin.f32 %v5096, %v3550
        %v5098 = vmin.f32 %v5097, %v3553
        %v5099 = vmin.f32 %v5098, %v3556
        %v5100 = vmin.f32 %v5099, %v3559
        %v5101 = vmin.f32 %v5100, %v3562
        %v5102 = vmin.f32 %v5101, %v3565
        %v5103 = vmin.f32 %v5102, %v3568
        %v5104 = vmin.f32 %v5103, %v3571
        %v5105 = vmin.f32 %v5104, %v3574
        %v5106 = vmin.f32 %v5105, %v3577
        %v5107 = vmin.f32 %v5106, %v3580
        %v5108 = vmin.f32 %v5107, %v3583
        %v5109 = vmin.f32 %v5108, %v3586
        %v5110 = vmin.f32 %v5109, %v3589
        %v5111 = vmin.f32 %v5110, %v3592
        %v5112 = vmin.f32 %v5111, %v3595
        %v5113 = vmin.f32 %v5112, %v3598
        %v5114 = vmin.f32 %v5113, %v3601
        %v5115 = vmin.f32 %v5114, %v3604
        %v5116 = vmin.f32 %v5115, %v3607
        %v5117 = vmin.f32 %v5116, %v3610
        %v5118 = vmin.f32 %v5117, %v3613
        %v5119 = vmin.f32 %v5118, %v3616
        %v5120 = vmin.f32 %v5119, %v3619
        %v5121 = vmin.f32 %v5120, %v3622
        %v5122 = vmin.f32 %v5121, %v3625
        %v5123 = vmin.f32 %v5122, %v3628
        %v5124 = vmin.f32 %v5123, %v3631
        %v5125 = vmin.f32 %v5124, %v3634
        %v5126 = vmin.f32 %v5125, %v3637
        %v5127 = vmin.f32 %v5126, %v3640
        %v5128 = vmin.f32 %v5127, %v3643
        %v5129 = vmin.f32 %v5128, %v3646
        %v5130 = vmin.f32 %v5129, %v3649
        %v5131 = vmin.f32 %v5130, %v3652
        %v5132 = vmin.f32 %v5131, %v3655
        %v5133 = vmin.f32 %v5132, %v3658
        %v5134 = vmin.f32 %v5133, %v3661
        %v5135 = vmin.f32 %v5134, %v3664
        %v5136 = vmin.f32 %v5135, %v3667
        %v5137 = vmin.f32 %v5136, %v3670
        %v5138 = vmin.f32 %v5137, %v3673
        %v5139 = vmin.f32 %v5138, %v3676
        %v5140 = vmin.f32 %v5139, %v3679
        %v5141 = vmin.f32 %v5140, %v3682
        %v5142 = vmin.f32 %v5141, %v3685
        %v5143 = vmin.f32 %v5142, %v3688
        %v5144 = vmin.f32 %v5143, %v3691
        %v5145 = vmin.f32 %v5144, %v3694
        %v5146 = vmin.f32 %v5145, %v3697
        %v5147 = vmin.f32 %v5146, %v3700
        %v5148 = vmin.f32 %v5147, %v3703
        %v5149 = vmin.f32 %v5148, %v3706
        %v5150 = vmin.f32 %v5149, %v3709
        %v5151 = vmin.f32 %v5150, %v3712
        %v5152 = vmin.f32 %v5151, %v3715
        %v5153 = vmin.f32 %v5152, %v3718
        %v5154 = vmin.f32 %v5153, %v3721
        %v5155 = vmin.f32 %v5154, %v3724
        %v5156 = vmin.f32 %v5155, %v3727
        %v5157 = vmin.f32 %v5156, %v3730
        %v5158 = vmin.f32 %v5157, %v3733
        %v5159 = vmin.f32 %v5158, %v3736
        %v5160 = vmin.f32 %v5159, %v3739
        %v5161 = vmin.f32 %v5160, %v3742
        %v5162 = vmin.f32 %v5161, %v3745
        %v5163 = vmin.f32 %v5162, %v3748
        %v5164 = vmin.f32 %v5163, %v3751
        %v5165 = vmin.f32 %v5164, %v3754
        %v5166 = vmin.f32 %v5165, %v3757
        %v5167 = vmin.f32 %v5166, %v3760
        %v5168 = vmin.f32 %v5167, %v3763
        %v5169 = vmin.f32 %v5168, %v3766
        %v5170 = vmin.f32 %v5169, %v3769
        %v5171 = vmin.f32 %v5170, %v3772
        %v5172 = vmin.f32 %v5171, %v3775
        %v5173 = vmin.f32 %v5172, %v3778
        %v5174 = vmin.f32 %v5173, %v3781
        %v5175 = vmin.f32 %v5174, %v3784
        %v5176 = vmin.f32 %v5175, %v3787
        %v5177 = vmin.f32 %v5176, %v3790
        %v5178 = vmin.f32 %v5177, %v3793
        %v5179 = vmin.f32 %v5178, %v3796
        %v5180 = vmin.f32 %v5179, %v3799
        %v5181 = vmin.f32 %v5180, %v3802
        %v5182 = vmin.f32 %v5181, %v3805
        %v5183 = vmin.f32 %v5182, %v3808
        %v5184 = vmin.f32 %v5183, %v3811
        %v5185 = vmin.f32 %v5184, %v3814
        %v5186 = vmin.f32 %v5185, %v3817
        %v5187 = vmin.f32 %v5186, %v3820
        %v5188 = vmin.f32 %v5187, %v3823
        %v5189 = vmin.f32 %v5188, %v3826
        %v5190 = vmin.f32 %v5189, %v3829
        %v5191 = vmin.f32 %v5190, %v3832
        %v5192 = vmin.f32 %v5191, %v3835
        %v5193 = vmin.f32 %v5192, %v3838
        %v5194 = vmin.f32 %v5193, %v3841
        %v5195 = vmin.f32 %v5194, %v3844
        %v5196 = vmin.f32 %v5195, %v3847
        %v5197 = vmin.f32 %v5196, %v3850
        %v5198 = vmin.f32 %v5197, %v3853
        %v5199 = vmin.f32 %v5198, %v3856
        %v5200 = vmin.f32 %v5199, %v3859
        %v5201 = vmin.f32 %v5200, %v3862
        %v5202 = vmin.f32 %v5201, %v3865
        %v5203 = vmin.f32 %v5202, %v3868
        %v5204 = vmin.f32 %v5203, %v3871
        %v5205 = vmin.f32 %v5204, %v3874
        %v5206 = vrot.slane %v5205, 4
        %v5207 = vmin.f32 %v5205, %v5206
        %v5208 = vrot.slane %v5207, 2
        %v5209 = vmin.f32 %v5207, %v5208
        %v5210 = vrot.slane %v5209, 1
        %v5211 = vmin.f32 %v5209, %v5210
        %v5212 = vmin.f32 %v3894, %v3897
        %v5213 = vmin.f32 %v5212, %v3900
        %v5214 = vmin.f32 %v5213, %v3903
        %v5215 = vmin.f32 %v5214, %v3906
        %v5216 = vmin.f32 %v5215, %v3909
        %v5217 = vmin.f32 %v5216, %v3912
        %v5218 = vmin.f32 %v5217, %v3915
        %v5219 = vmin.f32 %v5218, %v3918
        %v5220 = vmin.f32 %v5219, %v3921
        %v5221 = vmin.f32 %v5220, %v3924
        %v5222 = vmin.f32 %v5221, %v3927
        %v5223 = vmin.f32 %v5222, %v3930
        %v5224 = vmin.f32 %v5223, %v3933
        %v5225 = vmin.f32 %v5224, %v3936
        %v5226 = vmin.f32 %v5225, %v3939
        %v5227 = vmin.f32 %v5226, %v3942
        %v5228 = vmin.f32 %v5227, %v3945
        %v5229 = vmin.f32 %v5228, %v3948
        %v5230 = vmin.f32 %v5229, %v3951
        %v5231 = vmin.f32 %v5230, %v3954
        %v5232 = vmin.f32 %v5231, %v3957
        %v5233 = vmin.f32 %v5232, %v3960
        %v5234 = vmin.f32 %v5233, %v3963
        %v5235 = vmin.f32 %v5234, %v3966
        %v5236 = vmin.f32 %v5235, %v3969
        %v5237 = vmin.f32 %v5236, %v3972
        %v5238 = vmin.f32 %v5237, %v3975
        %v5239 = vmin.f32 %v5238, %v3978
        %v5240 = vmin.f32 %v5239, %v3981
        %v5241 = vmin.f32 %v5240, %v3984
        %v5242 = vmin.f32 %v5241, %v3987
        %v5243 = vmin.f32 %v5242, %v3990
        %v5244 = vmin.f32 %v5243, %v3993
        %v5245 = vmin.f32 %v5244, %v3996
        %v5246 = vmin.f32 %v5245, %v3999
        %v5247 = vmin.f32 %v5246, %v4002
        %v5248 = vmin.f32 %v5247, %v4005
        %v5249 = vmin.f32 %v5248, %v4008
        %v5250 = vmin.f32 %v5249, %v4011
        %v5251 = vmin.f32 %v5250, %v4014
        %v5252 = vmin.f32 %v5251, %v4017
        %v5253 = vmin.f32 %v5252, %v4020
        %v5254 = vmin.f32 %v5253, %v4023
        %v5255 = vmin.f32 %v5254, %v4026
        %v5256 = vmin.f32 %v5255, %v4029
        %v5257 = vmin.f32 %v5256, %v4032
        %v5258 = vmin.f32 %v5257, %v4035
        %v5259 = vmin.f32 %v5258, %v4038
        %v5260 = vmin.f32 %v5259, %v4041
        %v5261 = vmin.f32 %v5260, %v4044
        %v5262 = vmin.f32 %v5261, %v4047
        %v5263 = vmin.f32 %v5262, %v4050
        %v5264 = vmin.f32 %v5263, %v4053
        %v5265 = vmin.f32 %v5264, %v4056
        %v5266 = vmin.f32 %v5265, %v4059
        %v5267 = vmin.f32 %v5266, %v4062
        %v5268 = vmin.f32 %v5267, %v4065
        %v5269 = vmin.f32 %v5268, %v4068
        %v5270 = vmin.f32 %v5269, %v4071
        %v5271 = vmin.f32 %v5270, %v4074
        %v5272 = vmin.f32 %v5271, %v4077
        %v5273 = vmin.f32 %v5272, %v4080
        %v5274 = vmin.f32 %v5273, %v4083
        %v5275 = vmin.f32 %v5274, %v4086
        %v5276 = vmin.f32 %v5275, %v4089
        %v5277 = vmin.f32 %v5276, %v4092
        %v5278 = vmin.f32 %v5277, %v4095
        %v5279 = vmin.f32 %v5278, %v4098
        %v5280 = vmin.f32 %v5279, %v4101
        %v5281 = vmin.f32 %v5280, %v4104
        %v5282 = vmin.f32 %v5281, %v4107
        %v5283 = vmin.f32 %v5282, %v4110
        %v5284 = vmin.f32 %v5283, %v4113
        %v5285 = vmin.f32 %v5284, %v4116
        %v5286 = vmin.f32 %v5285, %v4119
        %v5287 = vmin.f32 %v5286, %v4122
        %v5288 = vmin.f32 %v5287, %v4125
        %v5289 = vmin.f32 %v5288, %v4128
        %v5290 = vmin.f32 %v5289, %v4131
        %v5291 = vmin.f32 %v5290, %v4134
        %v5292 = vmin.f32 %v5291, %v4137
        %v5293 = vmin.f32 %v5292, %v4140
        %v5294 = vmin.f32 %v5293, %v4143
        %v5295 = vmin.f32 %v5294, %v4146
        %v5296 = vmin.f32 %v5295, %v4149
        %v5297 = vmin.f32 %v5296, %v4152
        %v5298 = vmin.f32 %v5297, %v4155
        %v5299 = vmin.f32 %v5298, %v4158
        %v5300 = vmin.f32 %v5299, %v4161
        %v5301 = vmin.f32 %v5300, %v4164
        %v5302 = vmin.f32 %v5301, %v4167
        %v5303 = vmin.f32 %v5302, %v4170
        %v5304 = vmin.f32 %v5303, %v4173
        %v5305 = vmin.f32 %v5304, %v4176
        %v5306 = vmin.f32 %v5305, %v4179
        %v5307 = vmin.f32 %v5306, %v4182
        %v5308 = vmin.f32 %v5307, %v4185
        %v5309 = vmin.f32 %v5308, %v4188
        %v5310 = vmin.f32 %v5309, %v4191
        %v5311 = vmin.f32 %v5310, %v4194
        %v5312 = vmin.f32 %v5311, %v4197
        %v5313 = vmin.f32 %v5312, %v4200
        %v5314 = vmin.f32 %v5313, %v4203
        %v5315 = vmin.f32 %v5314, %v4206
        %v5316 = vmin.f32 %v5315, %v4209
        %v5317 = vmin.f32 %v5316, %v4212
        %v5318 = vmin.f32 %v5317, %v4215
        %v5319 = vmin.f32 %v5318, %v4218
        %v5320 = vmin.f32 %v5319, %v4221
        %v5321 = vmin.f32 %v5320, %v4224
        %v5322 = vmin.f32 %v5321, %v4227
        %v5323 = vmin.f32 %v5322, %v4230
        %v5324 = vmin.f32 %v5323, %v4233
        %v5325 = vmin.f32 %v5324, %v4236
        %v5326 = vmin.f32 %v5325, %v4239
        %v5327 = vmin.f32 %v5326, %v4242
        %v5328 = vmin.f32 %v5327, %v4245
        %v5329 = vmin.f32 %v5328, %v4248
        %v5330 = vmin.f32 %v5329, %v4251
        %v5331 = vmin.f32 %v5330, %v4254
        %v5332 = vmin.f32 %v5331, %v4257
        %v5333 = vmin.f32 %v5332, %v4260
        %v5334 = vmin.f32 %v5333, %v4263
        %v5335 = vmin.f32 %v5334, %v4266
        %v5336 = vmin.f32 %v5335, %v4269
        %v5337 = vmin.f32 %v5336, %v4272
        %v5338 = vmin.f32 %v5337, %v4275
        %v5339 = vrot.slane %v5338, 4
        %v5340 = vmin.f32 %v5338, %v5339
        %v5341 = vrot.slane %v5340, 2
        %v5342 = vmin.f32 %v5340, %v5341
        %v5343 = vrot.slane %v5342, 1
        %v5344 = vmin.f32 %v5342, %v5343
        %v5345 = vmin.f32 %v4295, %v4298
        %v5346 = vmin.f32 %v5345, %v4301
        %v5347 = vmin.f32 %v5346, %v4304
        %v5348 = vmin.f32 %v5347, %v4307
        %v5349 = vmin.f32 %v5348, %v4310
        %v5350 = vmin.f32 %v5349, %v4313
        %v5351 = vmin.f32 %v5350, %v4316
        %v5352 = vmin.f32 %v5351, %v4319
        %v5353 = vmin.f32 %v5352, %v4322
        %v5354 = vmin.f32 %v5353, %v4325
        %v5355 = vmin.f32 %v5354, %v4328
        %v5356 = vmin.f32 %v5355, %v4331
        %v5357 = vmin.f32 %v5356, %v4334
        %v5358 = vmin.f32 %v5357, %v4337
        %v5359 = vmin.f32 %v5358, %v4340
        %v5360 = vmin.f32 %v5359, %v4343
        %v5361 = vmin.f32 %v5360, %v4346
        %v5362 = vmin.f32 %v5361, %v4349
        %v5363 = vmin.f32 %v5362, %v4352
        %v5364 = vmin.f32 %v5363, %v4355
        %v5365 = vmin.f32 %v5364, %v4358
        %v5366 = vmin.f32 %v5365, %v4361
        %v5367 = vmin.f32 %v5366, %v4364
        %v5368 = vmin.f32 %v5367, %v4367
        %v5369 = vmin.f32 %v5368, %v4370
        %v5370 = vmin.f32 %v5369, %v4373
        %v5371 = vmin.f32 %v5370, %v4376
        %v5372 = vmin.f32 %v5371, %v4379
        %v5373 = vmin.f32 %v5372, %v4382
        %v5374 = vmin.f32 %v5373, %v4385
        %v5375 = vmin.f32 %v5374, %v4388
        %v5376 = vmin.f32 %v5375, %v4391
        %v5377 = vmin.f32 %v5376, %v4394
        %v5378 = vmin.f32 %v5377, %v4397
        %v5379 = vmin.f32 %v5378, %v4400
        %v5380 = vmin.f32 %v5379, %v4403
        %v5381 = vmin.f32 %v5380, %v4406
        %v5382 = vmin.f32 %v5381, %v4409
        %v5383 = vmin.f32 %v5382, %v4412
        %v5384 = vmin.f32 %v5383, %v4415
        %v5385 = vmin.f32 %v5384, %v4418
        %v5386 = vmin.f32 %v5385, %v4421
        %v5387 = vmin.f32 %v5386, %v4424
        %v5388 = vmin.f32 %v5387, %v4427
        %v5389 = vmin.f32 %v5388, %v4430
        %v5390 = vmin.f32 %v5389, %v4433
        %v5391 = vmin.f32 %v5390, %v4436
        %v5392 = vmin.f32 %v5391, %v4439
        %v5393 = vmin.f32 %v5392, %v4442
        %v5394 = vmin.f32 %v5393, %v4445
        %v5395 = vmin.f32 %v5394, %v4448
        %v5396 = vmin.f32 %v5395, %v4451
        %v5397 = vmin.f32 %v5396, %v4454
        %v5398 = vmin.f32 %v5397, %v4457
        %v5399 = vmin.f32 %v5398, %v4460
        %v5400 = vmin.f32 %v5399, %v4463
        %v5401 = vmin.f32 %v5400, %v4466
        %v5402 = vmin.f32 %v5401, %v4469
        %v5403 = vmin.f32 %v5402, %v4472
        %v5404 = vmin.f32 %v5403, %v4475
        %v5405 = vmin.f32 %v5404, %v4478
        %v5406 = vmin.f32 %v5405, %v4481
        %v5407 = vmin.f32 %v5406, %v4484
        %v5408 = vmin.f32 %v5407, %v4487
        %v5409 = vmin.f32 %v5408, %v4490
        %v5410 = vmin.f32 %v5409, %v4493
        %v5411 = vmin.f32 %v5410, %v4496
        %v5412 = vmin.f32 %v5411, %v4499
        %v5413 = vmin.f32 %v5412, %v4502
        %v5414 = vmin.f32 %v5413, %v4505
        %v5415 = vmin.f32 %v5414, %v4508
        %v5416 = vmin.f32 %v5415, %v4511
        %v5417 = vmin.f32 %v5416, %v4514
        %v5418 = vmin.f32 %v5417, %v4517
        %v5419 = vmin.f32 %v5418, %v4520
        %v5420 = vmin.f32 %v5419, %v4523
        %v5421 = vmin.f32 %v5420, %v4526
        %v5422 = vmin.f32 %v5421, %v4529
        %v5423 = vmin.f32 %v5422, %v4532
        %v5424 = vmin.f32 %v5423, %v4535
        %v5425 = vmin.f32 %v5424, %v4538
        %v5426 = vmin.f32 %v5425, %v4541
        %v5427 = vmin.f32 %v5426, %v4544
        %v5428 = vmin.f32 %v5427, %v4547
        %v5429 = vmin.f32 %v5428, %v4550
        %v5430 = vmin.f32 %v5429, %v4553
        %v5431 = vmin.f32 %v5430, %v4556
        %v5432 = vmin.f32 %v5431, %v4559
        %v5433 = vmin.f32 %v5432, %v4562
        %v5434 = vmin.f32 %v5433, %v4565
        %v5435 = vmin.f32 %v5434, %v4568
        %v5436 = vmin.f32 %v5435, %v4571
        %v5437 = vmin.f32 %v5436, %v4574
        %v5438 = vmin.f32 %v5437, %v4577
        %v5439 = vmin.f32 %v5438, %v4580
        %v5440 = vmin.f32 %v5439, %v4583
        %v5441 = vmin.f32 %v5440, %v4586
        %v5442 = vmin.f32 %v5441, %v4589
        %v5443 = vmin.f32 %v5442, %v4592
        %v5444 = vmin.f32 %v5443, %v4595
        %v5445 = vmin.f32 %v5444, %v4598
        %v5446 = vmin.f32 %v5445, %v4601
        %v5447 = vmin.f32 %v5446, %v4604
        %v5448 = vmin.f32 %v5447, %v4607
        %v5449 = vmin.f32 %v5448, %v4610
        %v5450 = vmin.f32 %v5449, %v4613
        %v5451 = vmin.f32 %v5450, %v4616
        %v5452 = vmin.f32 %v5451, %v4619
        %v5453 = vmin.f32 %v5452, %v4622
        %v5454 = vmin.f32 %v5453, %v4625
        %v5455 = vmin.f32 %v5454, %v4628
        %v5456 = vmin.f32 %v5455, %v4631
        %v5457 = vmin.f32 %v5456, %v4634
        %v5458 = vmin.f32 %v5457, %v4637
        %v5459 = vmin.f32 %v5458, %v4640
        %v5460 = vmin.f32 %v5459, %v4643
        %v5461 = vmin.f32 %v5460, %v4646
        %v5462 = vmin.f32 %v5461, %v4649
        %v5463 = vmin.f32 %v5462, %v4652
        %v5464 = vmin.f32 %v5463, %v4655
        %v5465 = vmin.f32 %v5464, %v4658
        %v5466 = vmin.f32 %v5465, %v4661
        %v5467 = vmin.f32 %v5466, %v4664
        %v5468 = vmin.f32 %v5467, %v4667
        %v5469 = vmin.f32 %v5468, %v4670
        %v5470 = vmin.f32 %v5469, %v4673
        %v5471 = vmin.f32 %v5470, %v4676
        %v5472 = vrot.slane %v5471, 4
        %v5473 = vmin.f32 %v5471, %v5472
        %v5474 = vrot.slane %v5473, 2
        %v5475 = vmin.f32 %v5473, %v5474
        %v5476 = vrot.slane %v5475, 1
        %v5477 = vmin.f32 %v5475, %v5476
        %v5478 = vmin.f32 %v4696, %v4699
        %v5479 = vmin.f32 %v5478, %v4702
        %v5480 = vmin.f32 %v5479, %v4705
        %v5481 = vmin.f32 %v5480, %v4708
        %v5482 = vmin.f32 %v5481, %v4711
        %v5483 = vmin.f32 %v5482, %v4714
        %v5484 = vmin.f32 %v5483, %v4717
        %v5485 = vmin.f32 %v5484, %v4720
        %v5486 = vmin.f32 %v5485, %v4723
        %v5487 = vmin.f32 %v5486, %v4726
        %v5488 = vmin.f32 %v5487, %v4729
        %v5489 = vmin.f32 %v5488, %v4732
        %v5490 = vmin.f32 %v5489, %v4735
        %v5491 = vmin.f32 %v5490, %v4738
        %v5492 = vmin.f32 %v5491, %v4741
        %v5493 = vmin.f32 %v5492, %v4744
        %v5494 = vmin.f32 %v5493, %v4747
        %v5495 = vmin.f32 %v5494, %v4750
        %v5496 = vmin.f32 %v5495, %v4753
        %v5497 = vmin.f32 %v5496, %v4756
        %v5498 = vmin.f32 %v5497, %v4759
        %v5499 = vmin.f32 %v5498, %v4762
        %v5500 = vmin.f32 %v5499, %v4765
        %v5501 = vmin.f32 %v5500, %v4768
        %v5502 = vmin.f32 %v5501, %v4771
        %v5503 = vmin.f32 %v5502, %v4774
        %v5504 = vmin.f32 %v5503, %v4777
        %v5505 = vmin.f32 %v5504, %v4780
        %v5506 = vmin.f32 %v5505, %v4783
        %v5507 = vmin.f32 %v5506, %v4786
        %v5508 = vmin.f32 %v5507, %v4789
        %v5509 = vmin.f32 %v5508, %v4792
        %v5510 = vmin.f32 %v5509, %v4795
        %v5511 = vmin.f32 %v5510, %v4798
        %v5512 = vmin.f32 %v5511, %v4801
        %v5513 = vmin.f32 %v5512, %v4804
        %v5514 = vmin.f32 %v5513, %v4807
        %v5515 = vmin.f32 %v5514, %v4810
        %v5516 = vmin.f32 %v5515, %v4813
        %v5517 = vmin.f32 %v5516, %v4816
        %v5518 = vmin.f32 %v5517, %v4819
        %v5519 = vmin.f32 %v5518, %v4822
        %v5520 = vmin.f32 %v5519, %v4825
        %v5521 = vmin.f32 %v5520, %v4828
        %v5522 = vmin.f32 %v5521, %v4831
        %v5523 = vmin.f32 %v5522, %v4834
        %v5524 = vmin.f32 %v5523, %v4837
        %v5525 = vmin.f32 %v5524, %v4840
        %v5526 = vmin.f32 %v5525, %v4843
        %v5527 = vmin.f32 %v5526, %v4846
        %v5528 = vmin.f32 %v5527, %v4849
        %v5529 = vmin.f32 %v5528, %v4852
        %v5530 = vmin.f32 %v5529, %v4855
        %v5531 = vmin.f32 %v5530, %v4858
        %v5532 = vmin.f32 %v5531, %v4861
        %v5533 = vmin.f32 %v5532, %v4864
        %v5534 = vmin.f32 %v5533, %v4867
        %v5535 = vmin.f32 %v5534, %v4870
        %v5536 = vmin.f32 %v5535, %v4873
        %v5537 = vmin.f32 %v5536, %v4876
        %v5538 = vmin.f32 %v5537, %v4879
        %v5539 = vmin.f32 %v5538, %v4882
        %v5540 = vmin.f32 %v5539, %v4885
        %v5541 = vmin.f32 %v5540, %v4888
        %v5542 = vmin.f32 %v5541, %v4891
        %v5543 = vmin.f32 %v5542, %v4894
        %v5544 = vmin.f32 %v5543, %v4897
        %v5545 = vmin.f32 %v5544, %v4900
        %v5546 = vmin.f32 %v5545, %v4903
        %v5547 = vmin.f32 %v5546, %v4906
        %v5548 = vmin.f32 %v5547, %v4909
        %v5549 = vmin.f32 %v5548, %v4912
        %v5550 = vmin.f32 %v5549, %v4915
        %v5551 = vmin.f32 %v5550, %v4918
        %v5552 = vmin.f32 %v5551, %v4921
        %v5553 = vmin.f32 %v5552, %v4924
        %v5554 = vmin.f32 %v5553, %v4927
        %v5555 = vmin.f32 %v5554, %v4930
        %v5556 = vmin.f32 %v5555, %v4933
        %v5557 = vmin.f32 %v5556, %v4936
        %v5558 = vmin.f32 %v5557, %v4939
        %v5559 = vmin.f32 %v5558, %v4942
        %v5560 = vmin.f32 %v5559, %v4945
        %v5561 = vmin.f32 %v5560, %v4948
        %v5562 = vmin.f32 %v5561, %v4951
        %v5563 = vmin.f32 %v5562, %v4954
        %v5564 = vmin.f32 %v5563, %v4957
        %v5565 = vmin.f32 %v5564, %v4960
        %v5566 = vmin.f32 %v5565, %v4963
        %v5567 = vmin.f32 %v5566, %v4966
        %v5568 = vmin.f32 %v5567, %v4969
        %v5569 = vmin.f32 %v5568, %v4972
        %v5570 = vmin.f32 %v5569, %v4975
        %v5571 = vmin.f32 %v5570, %v4978
        %v5572 = vmin.f32 %v5571, %v4981
        %v5573 = vmin.f32 %v5572, %v4984
        %v5574 = vmin.f32 %v5573, %v4987
        %v5575 = vmin.f32 %v5574, %v4990
        %v5576 = vmin.f32 %v5575, %v4993
        %v5577 = vmin.f32 %v5576, %v4996
        %v5578 = vmin.f32 %v5577, %v4999
        %v5579 = vmin.f32 %v5578, %v5002
        %v5580 = vmin.f32 %v5579, %v5005
        %v5581 = vmin.f32 %v5580, %v5008
        %v5582 = vmin.f32 %v5581, %v5011
        %v5583 = vmin.f32 %v5582, %v5014
        %v5584 = vmin.f32 %v5583, %v5017
        %v5585 = vmin.f32 %v5584, %v5020
        %v5586 = vmin.f32 %v5585, %v5023
        %v5587 = vmin.f32 %v5586, %v5026
        %v5588 = vmin.f32 %v5587, %v5029
        %v5589 = vmin.f32 %v5588, %v5032
        %v5590 = vmin.f32 %v5589, %v5035
        %v5591 = vmin.f32 %v5590, %v5038
        %v5592 = vmin.f32 %v5591, %v5041
        %v5593 = vmin.f32 %v5592, %v5044
        %v5594 = vmin.f32 %v5593, %v5047
        %v5595 = vmin.f32 %v5594, %v5050
        %v5596 = vmin.f32 %v5595, %v5053
        %v5597 = vmin.f32 %v5596, %v5056
        %v5598 = vmin.f32 %v5597, %v5059
        %v5599 = vmin.f32 %v5598, %v5062
        %v5600 = vmin.f32 %v5599, %v5065
        %v5601 = vmin.f32 %v5600, %v5068
        %v5602 = vmin.f32 %v5601, %v5071
        %v5603 = vmin.f32 %v5602, %v5074
        %v5604 = vmin.f32 %v5603, %v5077
        %v5605 = vrot.slane %v5604, 4
        %v5606 = vmin.f32 %v5604, %v5605
        %v5607 = vrot.slane %v5606, 2
        %v5608 = vmin.f32 %v5606, %v5607
        %v5609 = vrot.slane %v5608, 1
        %v5610 = vmin.f32 %v5608, %v5609
        %v5615 = vrot.slane %v5344, 7
        %v5616 = vrot.slane %v5477, 6
        %v5617 = vrot.slane %v5610, 5
        %v5618 = vsel %vm2954, %v5211, %v5615
        %v5619 = vsel %vm2956, %v5616, %v5617
        %v5620 = vsel %vm2958, %v5618, %v5619
        %v5622 = vmin.f32 %v2961, %v5620
        %v5623 = vlaneseq
        %vm5624 = vcmp.ge.s32.totalorder %v5623, 0
        %vm5625 = vcmp.lt.s32.totalorder %v5623, 512
        %vm5626 = vmand %vm5624, %vm5625
        %5627 = vst.msk [vmem:[#allocation2] sm:$0xf] %vm5626, %v5622
        // Predicated region
        $region41: #{tpu_custom_call.1} parent=35 // pred_check
          %p5628 = pneg %p271
        $region42: #{tpu_custom_call.1} parent=35 // pred_check_branch
          %5630 = sbr.rel (%p5628) target = $region44
        $region43: #{tpu_custom_call.1} parent=35 // pred_region
          %v5631 = vld [vmem:[#allocation2] sm:$0xf]
          %v5632 = vld [vmem:[%s262] sm:$0xf]
          %v5633 = vadd.f32 %v5631, %v5632
          %v5634 = vmax.f32 %v5633, 0.0
          %v5635 = vrsqrt.pop %v5634
          %v5636 = vmul.f32 %v5635, %v5634
          %v5637 = vmul.f32 %v5636, %v5635
          %v5638 = vmul.f32 0.5, %v5637
          %v5639 = vsub.f32 1.5, %v5638
          %v5640 = vmul.f32 %v5635, %v5639
          %v5641 = vmul.f32 %v5634, %v5640
          %vm5642 = vcmp.eq.f32.partialorder %v5634, inf
          %v5643 = vsel %vm5642, %v5634, %v5641
          %vm5644 = vcmp.eq.f32.partialorder %v5634, 0.0
          %v5645 = vand.u32 %v5634, 2147483648
          %v5646 = vsel %vm5644, %v5645, %v5643
          %v5647 = vld [vmem:[%s257] sm:$0xf]
          %v5648 = vxor.u32 %v5647, 2147483648
          %v5649 = vmul.f32 %v5648, 1.442695
          %v5650 = vpow.pop %v5649
          %v5651 = vadd.f32 %v5650, 1.0
          %v5652 = vrcp.pop %v5651
          %v5653 = vmul.f32 %v5651, %v5652
          %v5654 = vsub.f32 1.0, %v5653
          %v5655 = vmul.f32 %v5652, %v5654
          %v5656 = vadd.f32 %v5652, %v5655
          %vm5657 = vweird.f32 %v5651
          %vm5658 = vweird.f32 %v5652
          %vm5659 = vmor %vm5657, %vm5658
          %v5660 = vsel %vm5659, %v5652, %v5656
          %v5661 = vand.u32 2147483647, %v5651
          %vm5662 = vcmp.eq.f32.partialorder %v5661, 8.507059e+37
          %v5663 = vand.u32 %v5651, 2147483648
          %v5664 = vor.u32 1.1754944e-38, %v5663
          %v5665 = vsel %vm5662, %v5664, %v5660
          %v5666 = vmul.f32 1.0, %v5665
          %v5667 = vmul.f32 %v5666, %v5646
          %5668 = vst.msk [vmem:[%s247] sm:$0xf] %vm5626, %v5667
        $region44: #{tpu_custom_call.1} parent=35 // pred_fallthru
          _
        %s5669 = sand.u32 %s142, 1
        %s5670 = scalar_lea.sflag [#allocation4], %s5669
        %s5671 = sand.u32 %s142, 1
        %s5672 = smul.addr %s5671, 4
        %s5673 = scalar_lea.vmem [#allocation3], %s5672
        // Predicated region
        $region45: #{tpu_custom_call.1} parent=35 // pred_check
          %p5674 = pneg %p152
        $region46: #{tpu_custom_call.1} parent=35 // pred_check_branch
          %5676 = sbr.rel (%p5674) target = $region48
        $region47: #{tpu_custom_call.1} parent=35 // pred_region
          %s5677 = smul.u32 4, %s22
          %5679 = vsyncadd %s5670, 0
          %s5680 = scalar_lea.hbm %s4, %s5677
          %s5682 = sshll.u32 %s5673, 4
          %s5683 = int_to_ptr.vmem [resolvable:$true] %s5682
          %s5684 = sshll.u32 %s5680, 4
          %s5685 = int_to_ptr.hbm [resolvable:$true] %s5684
          %5687 = dma.vmem_to_hbm [thread:$0]  %s5683, 64, %s5685, %s5670
        $region48: #{tpu_custom_call.1} parent=35 // pred_fallthru
          _
      $region36: #{tpu_custom_call.1} parent=5 // pred_fallthru
        _
      %p5688 = scmp.le.s32.totalorder 2, %s13
      // Predicated region
      $region49: #{tpu_custom_call.1} parent=5 // pred_check
        %p5689 = pneg %p5688
      $region50: #{tpu_custom_call.1} parent=5 // pred_check_branch
        %5691 = sbr.rel (%p5689) target = $region52
      $region51: #{tpu_custom_call.1} parent=5 // pred_region
        %s5692 = ssub.s32 %s13, 2
        // Predicated region
        $region53: #{tpu_custom_call.1} parent=51 // pred_check
          %p5693 = pneg %p158
        $region54: #{tpu_custom_call.1} parent=51 // pred_check_branch
          %5695 = sbr.rel (%p5693) target = $region56
        $region55: #{tpu_custom_call.1} parent=51 // pred_region
          %s5696 = sand.u32 %s143, 1
          %s5697 = scalar_lea.sflag [#allocation4], %s5696
          %s5698 = sand.u32 %s143, 1
          %s5699 = smul.addr %s5698, 4
          %s5700 = scalar_lea.vmem [#allocation3], %s5699
          %5702 = dma.done %s5697, 64
        $region56: #{tpu_custom_call.1} parent=51 // pred_fallthru
          _
      $region52: #{tpu_custom_call.1} parent=5 // pred_fallthru
        _
    $region6: #{tpu_custom_call.1} parent=1 // loop_footer
      %s17 = sadd.s32 1, %s13
    $region7: #{tpu_custom_call.1} parent=1 // loop_footer_branch
      %12 = sbr.rel target = $region3
    $region8: #{tpu_custom_call.1} parent=1 // loop_exit
      _
    %5703 = vsyncpa [#allocation4], 1
    %s5704 = scalar_lea.sflag [#allocation4], 1
    %5705 = vsyncpa %s5704, 1

</llo_original>
